<compile_context>
chip_gen: v7x
topology: tpu7x:2x2x1
jax: 0.10.0
libtpu: 0.0.40
codegen_flags: <defaults>
</compile_context>

<pallas_src>
import math
import jax
import jax.numpy as jnp
from jax.experimental import pallas as pl
from jax.experimental.pallas import tpu as pltpu

# ---- small synthetic config ----
BATCH = 2
SEQ = 8
HIDDEN = 32                 # bert hidden_size (small synthetic)
NUM_HEADS = 4
HEAD_DIM = HIDDEN // NUM_HEADS
INTERMEDIATE = 64
NUM_LAYERS = 2
VOCAB = 50
MAX_POS = 16
NUM_FEATURES = 6
OUTPUT_DIM = 5
LN_EPS = 1e-12
BN_EPS = 1e-5

H3 = HIDDEN // 3            # 10
H4 = HIDDEN // 4            # 8
H2 = HIDDEN // 2            # 16
OUT_PAD = 128               # lane-dense logits slab width


def _vmem_spec():
    return pl.BlockSpec(memory_space=pltpu.MemorySpace.VMEM)


def _layer_norm(x, g, b):
    mu = jnp.mean(x, axis=-1, keepdims=True)
    var = jnp.mean((x - mu) ** 2, axis=-1, keepdims=True)
    return (x - mu) * jax.lax.rsqrt(var + LN_EPS) * g + b


# -------------------- single fused forward kernel --------------------
def fused_forward_kernel(x_ref, maskb_ref, feat_ref,
                         wqkv_ref, bqkv_ref, wo_ref, bo_ref,
                         ln1g_ref, ln1b_ref, w1_ref, b1_ref,
                         w2_ref, b2_ref, ln2g_ref, ln2b_ref,
                         wp_ref, bp_ref, wf1_ref, bf1_ref,
                         wf2_ref, bf2_ref, wc1a_ref, wc1b_ref, bc1_ref,
                         wc2_ref, bc2_ref, wk1_ref, bk1_ref,
                         wk2_ref, bk2_ref,
                         out_ref):
    x3 = x_ref[...]                              # (B, S, H) post-embedding-LN
    B, S, H = x3.shape
    mask_bias = maskb_ref[...]                   # (B, 1, S), hoisted to wrapper

    # ---- transformer encoder layers (statically unrolled) ----
    for l in range(NUM_LAYERS):
        x2 = x3.reshape(B * S, H)                # flatten once per layer, reused

        # fused QKV projection; 1/sqrt(head_dim) pre-folded into the Q weights
        qkv = (jnp.dot(x2, wqkv_ref[l], preferred_element_type=jnp.float32)
               + bqkv_ref[l]).reshape(B, S, 3 * H)

        ctx = []
        for h in range(NUM_HEADS):               # tiny static loop over heads
            lo = h * HEAD_DIM
            q_h = qkv[..., lo:lo + HEAD_DIM]
            k_h = qkv[..., H + lo:H + lo + HEAD_DIM]
            v_h = qkv[..., 2 * H + lo:2 * H + lo + HEAD_DIM]
            s = jnp.einsum('bqd,bkd->bqk', q_h, k_h,
                           preferred_element_type=jnp.float32) + mask_bias
            s = s - jnp.max(s, axis=-1, keepdims=True)
            p = jnp.exp(s)
            p = p * pl.reciprocal(jnp.sum(p, axis=-1, keepdims=True), approx=True)
            ctx.append(jnp.einsum('bqk,bkd->bqd', p, v_h,
                                  preferred_element_type=jnp.float32))

        # concat heads, single output projection
        ctx2 = jnp.concatenate(ctx, axis=-1).reshape(B * S, H)
        attn = jnp.dot(ctx2, wo_ref[l], preferred_element_type=jnp.float32) + bo_ref[l]

        h1 = _layer_norm(x2 + attn, ln1g_ref[l], ln1b_ref[l])        # (B*S, H)

        ff = jnp.dot(h1, w1_ref[l], preferred_element_type=jnp.float32) + b1_ref[l]
        # TODO(synk): PyTorch BERT uses the exact erf GELU; tanh approximation here.
        ff = jax.nn.gelu(ff, approximate=True)
        ff = jnp.dot(ff, w2_ref[l], preferred_element_type=jnp.float32) + b2_ref[l]
        x3 = _layer_norm(h1 + ff, ln2g_ref[l], ln2b_ref[l]).reshape(B, S, H)

    # ---- classification head (all eval-mode BatchNorms pre-folded) ----
    def lin(x, w_ref, b_ref):
        return jnp.dot(x, w_ref[...], preferred_element_type=jnp.float32) + b_ref[...]

    cls_h = x3[:, 0, :]                                              # [CLS]
    pooled = jnp.tanh(lin(cls_h, wp_ref, bp_ref))                    # BERT pooler
    # nn.Dropout is identity in eval mode; bn_bert folded into wc1a.

    # feature_processor (BN_f1 folded into wf2, BN_f2 folded into wc1b)
    f = jnp.maximum(lin(feat_ref[...], wf1_ref, bf1_ref), 0.0)
    f = jnp.maximum(lin(f, wf2_ref, bf2_ref), 0.0)                   # (B, H//4)

    # torch.cat((bert_feat, f), dim=1) @ Wc1 == bert_feat@Wc1a + f@Wc1b
    c = (jnp.dot(pooled, wc1a_ref[...], preferred_element_type=jnp.float32)
         + jnp.dot(f, wc1b_ref[...], preferred_element_type=jnp.float32)
         + bc1_ref[...])
    c = jnp.maximum(c, 0.0)
    c = jnp.maximum(lin(c, wc2_ref, bc2_ref), 0.0)                   # BN_c1 folded
    z = jnp.maximum(lin(c, wk1_ref, bk1_ref), 0.0)                   # BN_c2 folded
    out_ref[...] = lin(z, wk2_ref, bk2_ref)                          # BN_k1 folded; (B, 128)


# -------------------- deterministic parameter init --------------------
def init_params(key):
    keys = iter(jax.random.split(key, 512))

    def w(shape, scale=0.02):
        return scale * jax.random.normal(next(keys), shape, jnp.float32)

    def b(dim):
        return jnp.zeros((1, dim), jnp.float32)

    def bn(dim):  # eval-mode BatchNorm1d params
        return {
            'gamma': jax.random.uniform(next(keys), (dim,), jnp.float32, 0.5, 1.5),
            'beta': 0.1 * jax.random.normal(next(keys), (dim,), jnp.float32),
            'mean': 0.1 * jax.random.normal(next(keys), (dim,), jnp.float32),
            'var': jax.random.uniform(next(keys), (dim,), jnp.float32, 0.5, 1.5),
        }

    params = {
        'word_emb': w((VOCAB, HIDDEN)),
        'pos_emb': w((MAX_POS, HIDDEN)),
        'type_emb': w((2, HIDDEN)),
        'emb_ln_g': jnp.ones((HIDDEN,), jnp.float32),
        'emb_ln_b': jnp.zeros((HIDDEN,), jnp.float32),
        'layers': [],
    }
    for _ in range(NUM_LAYERS):
        params['layers'].append({
            'wq': w((HIDDEN, HIDDEN)), 'bq': b(HIDDEN),
            'wk': w((HIDDEN, HIDDEN)), 'bk': b(HIDDEN),
            'wv': w((HIDDEN, HIDDEN)), 'bv': b(HIDDEN),
            'wo': w((HIDDEN, HIDDEN)), 'bo': b(HIDDEN),
            'ln1g': jnp.ones((1, HIDDEN), jnp.float32),
            'ln1b': jnp.zeros((1, HIDDEN), jnp.float32),
            'w1': w((HIDDEN, INTERMEDIATE)), 'b1': b(INTERMEDIATE),
            'w2': w((INTERMEDIATE, HIDDEN)), 'b2': b(HIDDEN),
            'ln2g': jnp.ones((1, HIDDEN), jnp.float32),
            'ln2b': jnp.zeros((1, HIDDEN), jnp.float32),
        })
    params['head'] = {
        'wp': w((HIDDEN, HIDDEN)), 'bp': b(HIDDEN), 'bn_bert': bn(HIDDEN),
        'wf1': w((NUM_FEATURES, H3), 0.2), 'bf1': b(H3), 'bn_f1': bn(H3),
        'wf2': w((H3, H4), 0.2), 'bf2': b(H4), 'bn_f2': bn(H4),
        'wc1': w((HIDDEN + H4, HIDDEN), 0.1), 'bc1': b(HIDDEN), 'bn_c1': bn(HIDDEN),
        'wc2': w((HIDDEN, H2), 0.1), 'bc2': b(H2), 'bn_c2': bn(H2),
        'wk1': w((H2, H3), 0.1), 'bk1': b(H3), 'bn_k1': bn(H3),
        'wk2': w((H3, OUTPUT_DIM), 0.1), 'bk2': b(OUTPUT_DIM),
    }
    return params


def prepare_fused_params(p):
    """Host-side algebra: stack per-layer weights, fuse QKV, fold eval-mode BN
    into the following Linear, pad the logits projection to 128 lanes."""
    scale = 1.0 / math.sqrt(HEAD_DIM)

    def stack(name):
        return jnp.stack([lp[name] for lp in p['layers']], axis=0)

    wqkv = jnp.stack([jnp.concatenate([lp['wq'] * scale, lp['wk'], lp['wv']], axis=1)
                      for lp in p['layers']], axis=0)                 # (L, H, 3H)
    bqkv = jnp.stack([jnp.concatenate([lp['bq'] * scale, lp['bk'], lp['bv']], axis=1)
                      for lp in p['layers']], axis=0)                 # (L, 1, 3H)

    def bn_fold(bnp, w, bias):
        # BN(x) @ w + bias == x @ (s[:,None]*w) + (bias + (beta - mean*s) @ w)
        s = bnp['gamma'] * jax.lax.rsqrt(bnp['var'] + BN_EPS)
        shift = bnp['beta'] - bnp['mean'] * s
        return s[:, None] * w, bias + jnp.dot(shift, w)[None, :]

    h = p['head']
    wf2e, bf2e = bn_fold(h['bn_f1'], h['wf2'], h['bf2'])
    wc1a, bc1a = bn_fold(h['bn_bert'], h['wc1'][:HIDDEN], h['bc1'])
    wc1b, bc1b = bn_fold(h['bn_f2'], h['wc1'][HIDDEN:], jnp.zeros_like(h['bc1']))
    bc1e = bc1a + bc1b
    wc2e, bc2e = bn_fold(h['bn_c1'], h['wc2'], h['bc2'])
    wk1e, bk1e = bn_fold(h['bn_c2'], h['wk1'], h['bk1'])
    wk2e, bk2e = bn_fold(h['bn_k1'], h['wk2'], h['bk2'])

    # lane-dense logits: pad OUTPUT_DIM -> 128 with zero columns
    wk2p = jnp.zeros((H3, OUT_PAD), jnp.float32).at[:, :OUTPUT_DIM].set(wk2e)
    bk2p = jnp.zeros((1, OUT_PAD), jnp.float32).at[:, :OUTPUT_DIM].set(bk2e)

    return {
        'word_emb': p['word_emb'], 'pos_emb': p['pos_emb'], 'type_emb': p['type_emb'],
        'emb_ln_g': p['emb_ln_g'], 'emb_ln_b': p['emb_ln_b'],
        'wqkv': wqkv, 'bqkv': bqkv,
        'wo': stack('wo'), 'bo': stack('bo'),
        'ln1g': stack('ln1g'), 'ln1b': stack('ln1b'),
        'w1': stack('w1'), 'b1': stack('b1'),
        'w2': stack('w2'), 'b2': stack('b2'),
        'ln2g': stack('ln2g'), 'ln2b': stack('ln2b'),
        'wp': h['wp'], 'bp': h['bp'],
        'wf1': h['wf1'], 'bf1': h['bf1'],
        'wf2': wf2e, 'bf2': bf2e,
        'wc1a': wc1a, 'wc1b': wc1b, 'bc1': bc1e,
        'wc2': wc2e, 'bc2': bc2e,
        'wk1': wk1e, 'bk1': bk1e,
        'wk2': wk2p, 'bk2': bk2p,
    }


# -------------------- full forward --------------------
@jax.jit
def forward(fp, input_ids, attention_mask, numeric_features):
    B, S = input_ids.shape
    # Embedding gather + embedding LayerNorm: XLA glue fused inside this jit.
    emb = (jnp.take(fp['word_emb'], input_ids, axis=0)
           + fp['pos_emb'][None, :S, :]
           + fp['type_emb'][0][None, None, :])
    mu = jnp.mean(emb, axis=-1, keepdims=True)
    var = jnp.mean((emb - mu) ** 2, axis=-1, keepdims=True)
    x = (emb - mu) * jax.lax.rsqrt(var + LN_EPS) * fp['emb_ln_g'] + fp['emb_ln_b']

    # BERT-style additive attention-mask bias, hoisted (computed once).
    mask_bias = (1.0 - attention_mask.astype(jnp.float32))[:, None, :] * -1e9

    # TODO(synk): `feature_importance` is a training-only cached side statistic
    # (abs-sum of first feature_processor weights); it does not affect logits.
    args = (x, mask_bias, numeric_features,
            fp['wqkv'], fp['bqkv'], fp['wo'], fp['bo'],
            fp['ln1g'], fp['ln1b'], fp['w1'], fp['b1'],
            fp['w2'], fp['b2'], fp['ln2g'], fp['ln2b'],
            fp['wp'], fp['bp'], fp['wf1'], fp['bf1'],
            fp['wf2'], fp['bf2'], fp['wc1a'], fp['wc1b'], fp['bc1'],
            fp['wc2'], fp['bc2'], fp['wk1'], fp['bk1'],
            fp['wk2'], fp['bk2'])

    slab = pl.pallas_call(
        fused_forward_kernel,
        out_shape=jax.ShapeDtypeStruct((B, OUT_PAD), jnp.float32),
        in_specs=[_vmem_spec() for _ in args],
        out_specs=_vmem_spec(),
    )(*args)
    return slab[:, :OUTPUT_DIM]


if __name__ == "__main__":
    key = jax.random.PRNGKey(0)
    pkey, ikey, fkey = jax.random.split(key, 3)
    raw_params = init_params(pkey)
    fused_params = prepare_fused_params(raw_params)

    input_ids = jax.random.randint(ikey, (BATCH, SEQ), 0, VOCAB, dtype=jnp.int32)
    attention_mask = jnp.ones((BATCH, SEQ), jnp.int32).at[1, -2:].set(0)
    numeric_features = jax.random.normal(fkey, (BATCH, NUM_FEATURES), jnp.float32)

    logits = forward(fused_params, input_ids, attention_mask, numeric_features)
    jax.block_until_ready(logits)
    assert logits.shape == (BATCH, OUTPUT_DIM)
    assert bool(jnp.all(jnp.isfinite(logits)))
    print("KERNEL_OK")
</pallas_src>

<mosaic_0001>
module attributes {stable_mosaic.version = 11 : i64} {
  func.func @fused_forward_kernel(%arg0: memref<2x8x32xf32, #tpu.memory_space<vmem>>, %arg1: memref<2x1x8xf32, #tpu.memory_space<vmem>>, %arg2: memref<2x6xf32, #tpu.memory_space<vmem>>, %arg3: memref<2x32x96xf32, #tpu.memory_space<vmem>>, %arg4: memref<2x1x96xf32, #tpu.memory_space<vmem>>, %arg5: memref<2x32x32xf32, #tpu.memory_space<vmem>>, %arg6: memref<2x1x32xf32, #tpu.memory_space<vmem>>, %arg7: memref<2x1x32xf32, #tpu.memory_space<vmem>>, %arg8: memref<2x1x32xf32, #tpu.memory_space<vmem>>, %arg9: memref<2x32x64xf32, #tpu.memory_space<vmem>>, %arg10: memref<2x1x64xf32, #tpu.memory_space<vmem>>, %arg11: memref<2x64x32xf32, #tpu.memory_space<vmem>>, %arg12: memref<2x1x32xf32, #tpu.memory_space<vmem>>, %arg13: memref<2x1x32xf32, #tpu.memory_space<vmem>>, %arg14: memref<2x1x32xf32, #tpu.memory_space<vmem>>, %arg15: memref<32x32xf32, #tpu.memory_space<vmem>>, %arg16: memref<1x32xf32, #tpu.memory_space<vmem>>, %arg17: memref<6x10xf32, #tpu.memory_space<vmem>>, %arg18: memref<1x10xf32, #tpu.memory_space<vmem>>, %arg19: memref<10x8xf32, #tpu.memory_space<vmem>>, %arg20: memref<1x8xf32, #tpu.memory_space<vmem>>, %arg21: memref<32x32xf32, #tpu.memory_space<vmem>>, %arg22: memref<8x32xf32, #tpu.memory_space<vmem>>, %arg23: memref<1x32xf32, #tpu.memory_space<vmem>>, %arg24: memref<32x16xf32, #tpu.memory_space<vmem>>, %arg25: memref<1x16xf32, #tpu.memory_space<vmem>>, %arg26: memref<16x10xf32, #tpu.memory_space<vmem>>, %arg27: memref<1x10xf32, #tpu.memory_space<vmem>>, %arg28: memref<10x128xf32, #tpu.memory_space<vmem>>, %arg29: memref<1x128xf32, #tpu.memory_space<vmem>>, %arg30: memref<2x128xf32, #tpu.memory_space<vmem>>) attributes {dimension_semantics = [], scalar_prefetch = 0 : i64, scratch_operands = 0 : i64, tpu.core_type = #tpu.core_type<tc>} {
    %c0 = arith.constant 0 : index
    %c0_0 = arith.constant 0 : index
    %c0_1 = arith.constant 0 : index
    %0 = vector.load %arg0[%c0, %c0_0, %c0_1] : memref<2x8x32xf32, #tpu.memory_space<vmem>>, vector<2x8x32xf32>
    %c0_2 = arith.constant 0 : index
    %c0_3 = arith.constant 0 : index
    %c0_4 = arith.constant 0 : index
    %1 = vector.load %arg1[%c0_2, %c0_3, %c0_4] : memref<2x1x8xf32, #tpu.memory_space<vmem>>, vector<2x1x8xf32>
    %2 = vector.shape_cast %0 : vector<2x8x32xf32> to vector<16x32xf32>
    %c0_5 = arith.constant 0 : index
    %c0_6 = arith.constant 0 : index
    %c0_7 = arith.constant 0 : index
    %3 = vector.load %arg3[%c0_5, %c0_6, %c0_7] : memref<2x32x96xf32, #tpu.memory_space<vmem>>, vector<1x32x96xf32>
    %4 = vector.shape_cast %3 : vector<1x32x96xf32> to vector<32x96xf32>
    %cst = arith.constant dense<0.000000e+00> : vector<16x96xf32>
    %5 = tpu.matmul %2, %4, %cst {dimension_numbers = #tpu.dot_dimension_numbers<[1], [0], [0], [1], [0, 0, 1, 1], [], []>} : vector<16x32xf32>, vector<32x96xf32>, vector<16x96xf32> -> vector<16x96xf32>
    %c0_8 = arith.constant 0 : index
    %c0_9 = arith.constant 0 : index
    %c0_10 = arith.constant 0 : index
    %6 = vector.load %arg4[%c0_8, %c0_9, %c0_10] : memref<2x1x96xf32, #tpu.memory_space<vmem>>, vector<1x1x96xf32>
    %7 = vector.shape_cast %6 : vector<1x1x96xf32> to vector<1x96xf32>
    %8 = vector.broadcast %7 : vector<1x96xf32> to vector<16x96xf32>
    %9 = arith.addf %5, %8 : vector<16x96xf32>
    %10 = vector.shape_cast %9 : vector<16x96xf32> to vector<2x8x96xf32>
    %11 = vector.extract_strided_slice %10 {offsets = [0, 0, 0], sizes = [2, 8, 8], strides = [1, 1, 1]} : vector<2x8x96xf32> to vector<2x8x8xf32>
    %12 = vector.extract_strided_slice %10 {offsets = [0, 0, 32], sizes = [2, 8, 8], strides = [1, 1, 1]} : vector<2x8x96xf32> to vector<2x8x8xf32>
    %13 = vector.extract_strided_slice %10 {offsets = [0, 0, 64], sizes = [2, 8, 8], strides = [1, 1, 1]} : vector<2x8x96xf32> to vector<2x8x8xf32>
    "tpu.trace_start"() <{level = 10 : i32, message = "bqd,bkd->bqk"}> : () -> ()
    %cst_11 = arith.constant dense<0.000000e+00> : vector<2x8x8xf32>
    %14 = tpu.matmul %11, %12, %cst_11 {dimension_numbers = #tpu.dot_dimension_numbers<[2], [2], [1], [1], [0, 0, 0, 1, 1, 1], [0], [0]>} : vector<2x8x8xf32>, vector<2x8x8xf32>, vector<2x8x8xf32> -> vector<2x8x8xf32>
    "tpu.trace_stop"() : () -> ()
    %15 = vector.broadcast %1 : vector<2x1x8xf32> to vector<2x8x8xf32>
    %16 = arith.addf %14, %15 : vector<2x8x8xf32>
    %cst_12 = arith.constant dense<0xFF800000> : vector<2x8xf32>
    %17 = vector.multi_reduction <maximumf>, %16, %cst_12 [2] : vector<2x8x8xf32> to vector<2x8xf32>
    %18 = vector.shape_cast %17 : vector<2x8xf32> to vector<2x8x1xf32>
    %19 = vector.broadcast %18 : vector<2x8x1xf32> to vector<2x8x8xf32>
    %20 = arith.subf %16, %19 : vector<2x8x8xf32>
    %21 = math.exp %20 : vector<2x8x8xf32>
    %cst_13 = arith.constant dense<0.000000e+00> : vector<2x8xf32>
    %22 = vector.multi_reduction <add>, %21, %cst_13 [2] : vector<2x8x8xf32> to vector<2x8xf32>
    %23 = vector.shape_cast %22 : vector<2x8xf32> to vector<2x8x1xf32>
    %24 = tpu.reciprocal %23 {approx = true} : vector<2x8x1xf32> -> vector<2x8x1xf32>
    %25 = vector.broadcast %24 : vector<2x8x1xf32> to vector<2x8x8xf32>
    %26 = arith.mulf %21, %25 : vector<2x8x8xf32>
    "tpu.trace_start"() <{level = 10 : i32, message = "bqk,bkd->bqd"}> : () -> ()
    %cst_14 = arith.constant dense<0.000000e+00> : vector<2x8x8xf32>
    %27 = tpu.matmul %26, %13, %cst_14 {dimension_numbers = #tpu.dot_dimension_numbers<[2], [1], [1], [2], [0, 0, 0, 1, 1, 2], [0], [0]>} : vector<2x8x8xf32>, vector<2x8x8xf32>, vector<2x8x8xf32> -> vector<2x8x8xf32>
    "tpu.trace_stop"() : () -> ()
    %28 = vector.extract_strided_slice %10 {offsets = [0, 0, 8], sizes = [2, 8, 8], strides = [1, 1, 1]} : vector<2x8x96xf32> to vector<2x8x8xf32>
    %29 = vector.extract_strided_slice %10 {offsets = [0, 0, 40], sizes = [2, 8, 8], strides = [1, 1, 1]} : vector<2x8x96xf32> to vector<2x8x8xf32>
    %30 = vector.extract_strided_slice %10 {offsets = [0, 0, 72], sizes = [2, 8, 8], strides = [1, 1, 1]} : vector<2x8x96xf32> to vector<2x8x8xf32>
    "tpu.trace_start"() <{level = 10 : i32, message = "bqd,bkd->bqk"}> : () -> ()
    %cst_15 = arith.constant dense<0.000000e+00> : vector<2x8x8xf32>
    %31 = tpu.matmul %28, %29, %cst_15 {dimension_numbers = #tpu.dot_dimension_numbers<[2], [2], [1], [1], [0, 0, 0, 1, 1, 1], [0], [0]>} : vector<2x8x8xf32>, vector<2x8x8xf32>, vector<2x8x8xf32> -> vector<2x8x8xf32>
    "tpu.trace_stop"() : () -> ()
    %32 = vector.broadcast %1 : vector<2x1x8xf32> to vector<2x8x8xf32>
    %33 = arith.addf %31, %32 : vector<2x8x8xf32>
    %cst_16 = arith.constant dense<0xFF800000> : vector<2x8xf32>
    %34 = vector.multi_reduction <maximumf>, %33, %cst_16 [2] : vector<2x8x8xf32> to vector<2x8xf32>
    %35 = vector.shape_cast %34 : vector<2x8xf32> to vector<2x8x1xf32>
    %36 = vector.broadcast %35 : vector<2x8x1xf32> to vector<2x8x8xf32>
    %37 = arith.subf %33, %36 : vector<2x8x8xf32>
    %38 = math.exp %37 : vector<2x8x8xf32>
    %cst_17 = arith.constant dense<0.000000e+00> : vector<2x8xf32>
    %39 = vector.multi_reduction <add>, %38, %cst_17 [2] : vector<2x8x8xf32> to vector<2x8xf32>
    %40 = vector.shape_cast %39 : vector<2x8xf32> to vector<2x8x1xf32>
    %41 = tpu.reciprocal %40 {approx = true} : vector<2x8x1xf32> -> vector<2x8x1xf32>
    %42 = vector.broadcast %41 : vector<2x8x1xf32> to vector<2x8x8xf32>
    %43 = arith.mulf %38, %42 : vector<2x8x8xf32>
    "tpu.trace_start"() <{level = 10 : i32, message = "bqk,bkd->bqd"}> : () -> ()
    %cst_18 = arith.constant dense<0.000000e+00> : vector<2x8x8xf32>
    %44 = tpu.matmul %43, %30, %cst_18 {dimension_numbers = #tpu.dot_dimension_numbers<[2], [1], [1], [2], [0, 0, 0, 1, 1, 2], [0], [0]>} : vector<2x8x8xf32>, vector<2x8x8xf32>, vector<2x8x8xf32> -> vector<2x8x8xf32>
    "tpu.trace_stop"() : () -> ()
    %45 = vector.extract_strided_slice %10 {offsets = [0, 0, 16], sizes = [2, 8, 8], strides = [1, 1, 1]} : vector<2x8x96xf32> to vector<2x8x8xf32>
    %46 = vector.extract_strided_slice %10 {offsets = [0, 0, 48], sizes = [2, 8, 8], strides = [1, 1, 1]} : vector<2x8x96xf32> to vector<2x8x8xf32>
    %47 = vector.extract_strided_slice %10 {offsets = [0, 0, 80], sizes = [2, 8, 8], strides = [1, 1, 1]} : vector<2x8x96xf32> to vector<2x8x8xf32>
    "tpu.trace_start"() <{level = 10 : i32, message = "bqd,bkd->bqk"}> : () -> ()
    %cst_19 = arith.constant dense<0.000000e+00> : vector<2x8x8xf32>
    %48 = tpu.matmul %45, %46, %cst_19 {dimension_numbers = #tpu.dot_dimension_numbers<[2], [2], [1], [1], [0, 0, 0, 1, 1, 1], [0], [0]>} : vector<2x8x8xf32>, vector<2x8x8xf32>, vector<2x8x8xf32> -> vector<2x8x8xf32>
    "tpu.trace_stop"() : () -> ()
    %49 = vector.broadcast %1 : vector<2x1x8xf32> to vector<2x8x8xf32>
    %50 = arith.addf %48, %49 : vector<2x8x8xf32>
    %cst_20 = arith.constant dense<0xFF800000> : vector<2x8xf32>
    %51 = vector.multi_reduction <maximumf>, %50, %cst_20 [2] : vector<2x8x8xf32> to vector<2x8xf32>
    %52 = vector.shape_cast %51 : vector<2x8xf32> to vector<2x8x1xf32>
    %53 = vector.broadcast %52 : vector<2x8x1xf32> to vector<2x8x8xf32>
    %54 = arith.subf %50, %53 : vector<2x8x8xf32>
    %55 = math.exp %54 : vector<2x8x8xf32>
    %cst_21 = arith.constant dense<0.000000e+00> : vector<2x8xf32>
    %56 = vector.multi_reduction <add>, %55, %cst_21 [2] : vector<2x8x8xf32> to vector<2x8xf32>
    %57 = vector.shape_cast %56 : vector<2x8xf32> to vector<2x8x1xf32>
    %58 = tpu.reciprocal %57 {approx = true} : vector<2x8x1xf32> -> vector<2x8x1xf32>
    %59 = vector.broadcast %58 : vector<2x8x1xf32> to vector<2x8x8xf32>
    %60 = arith.mulf %55, %59 : vector<2x8x8xf32>
    "tpu.trace_start"() <{level = 10 : i32, message = "bqk,bkd->bqd"}> : () -> ()
    %cst_22 = arith.constant dense<0.000000e+00> : vector<2x8x8xf32>
    %61 = tpu.matmul %60, %47, %cst_22 {dimension_numbers = #tpu.dot_dimension_numbers<[2], [1], [1], [2], [0, 0, 0, 1, 1, 2], [0], [0]>} : vector<2x8x8xf32>, vector<2x8x8xf32>, vector<2x8x8xf32> -> vector<2x8x8xf32>
    "tpu.trace_stop"() : () -> ()
    %62 = vector.extract_strided_slice %10 {offsets = [0, 0, 24], sizes = [2, 8, 8], strides = [1, 1, 1]} : vector<2x8x96xf32> to vector<2x8x8xf32>
    %63 = vector.extract_strided_slice %10 {offsets = [0, 0, 56], sizes = [2, 8, 8], strides = [1, 1, 1]} : vector<2x8x96xf32> to vector<2x8x8xf32>
    %64 = vector.extract_strided_slice %10 {offsets = [0, 0, 88], sizes = [2, 8, 8], strides = [1, 1, 1]} : vector<2x8x96xf32> to vector<2x8x8xf32>
    "tpu.trace_start"() <{level = 10 : i32, message = "bqd,bkd->bqk"}> : () -> ()
    %cst_23 = arith.constant dense<0.000000e+00> : vector<2x8x8xf32>
    %65 = tpu.matmul %62, %63, %cst_23 {dimension_numbers = #tpu.dot_dimension_numbers<[2], [2], [1], [1], [0, 0, 0, 1, 1, 1], [0], [0]>} : vector<2x8x8xf32>, vector<2x8x8xf32>, vector<2x8x8xf32> -> vector<2x8x8xf32>
    "tpu.trace_stop"() : () -> ()
    %66 = vector.broadcast %1 : vector<2x1x8xf32> to vector<2x8x8xf32>
    %67 = arith.addf %65, %66 : vector<2x8x8xf32>
    %cst_24 = arith.constant dense<0xFF800000> : vector<2x8xf32>
    %68 = vector.multi_reduction <maximumf>, %67, %cst_24 [2] : vector<2x8x8xf32> to vector<2x8xf32>
    %69 = vector.shape_cast %68 : vector<2x8xf32> to vector<2x8x1xf32>
    %70 = vector.broadcast %69 : vector<2x8x1xf32> to vector<2x8x8xf32>
    %71 = arith.subf %67, %70 : vector<2x8x8xf32>
    %72 = math.exp %71 : vector<2x8x8xf32>
    %cst_25 = arith.constant dense<0.000000e+00> : vector<2x8xf32>
    %73 = vector.multi_reduction <add>, %72, %cst_25 [2] : vector<2x8x8xf32> to vector<2x8xf32>
    %74 = vector.shape_cast %73 : vector<2x8xf32> to vector<2x8x1xf32>
    %75 = tpu.reciprocal %74 {approx = true} : vector<2x8x1xf32> -> vector<2x8x1xf32>
    %76 = vector.broadcast %75 : vector<2x8x1xf32> to vector<2x8x8xf32>
    %77 = arith.mulf %72, %76 : vector<2x8x8xf32>
    "tpu.trace_start"() <{level = 10 : i32, message = "bqk,bkd->bqd"}> : () -> ()
    %cst_26 = arith.constant dense<0.000000e+00> : vector<2x8x8xf32>
    %78 = tpu.matmul %77, %64, %cst_26 {dimension_numbers = #tpu.dot_dimension_numbers<[2], [1], [1], [2], [0, 0, 0, 1, 1, 2], [0], [0]>} : vector<2x8x8xf32>, vector<2x8x8xf32>, vector<2x8x8xf32> -> vector<2x8x8xf32>
    "tpu.trace_stop"() : () -> ()
    %79 = tpu.concatenate %27, %44, %61, %78 in 2 : vector<2x8x8xf32>, vector<2x8x8xf32>, vector<2x8x8xf32>, vector<2x8x8xf32> -> vector<2x8x32xf32>
    %80 = vector.shape_cast %79 : vector<2x8x32xf32> to vector<16x32xf32>
    %c0_27 = arith.constant 0 : index
    %c0_28 = arith.constant 0 : index
    %c0_29 = arith.constant 0 : index
    %81 = vector.load %arg5[%c0_27, %c0_28, %c0_29] : memref<2x32x32xf32, #tpu.memory_space<vmem>>, vector<1x32x32xf32>
    %82 = vector.shape_cast %81 : vector<1x32x32xf32> to vector<32x32xf32>
    %cst_30 = arith.constant dense<0.000000e+00> : vector<16x32xf32>
    %83 = tpu.matmul %80, %82, %cst_30 {dimension_numbers = #tpu.dot_dimension_numbers<[1], [0], [0], [1], [0, 0, 1, 1], [], []>} : vector<16x32xf32>, vector<32x32xf32>, vector<16x32xf32> -> vector<16x32xf32>
    %c0_31 = arith.constant 0 : index
    %c0_32 = arith.constant 0 : index
    %c0_33 = arith.constant 0 : index
    %84 = vector.load %arg6[%c0_31, %c0_32, %c0_33] : memref<2x1x32xf32, #tpu.memory_space<vmem>>, vector<1x1x32xf32>
    %85 = vector.shape_cast %84 : vector<1x1x32xf32> to vector<1x32xf32>
    %86 = vector.broadcast %85 : vector<1x32xf32> to vector<16x32xf32>
    %87 = arith.addf %83, %86 : vector<16x32xf32>
    %88 = arith.addf %2, %87 : vector<16x32xf32>
    %c0_34 = arith.constant 0 : index
    %c0_35 = arith.constant 0 : index
    %c0_36 = arith.constant 0 : index
    %89 = vector.load %arg7[%c0_34, %c0_35, %c0_36] : memref<2x1x32xf32, #tpu.memory_space<vmem>>, vector<1x1x32xf32>
    %90 = vector.shape_cast %89 : vector<1x1x32xf32> to vector<1x32xf32>
    %c0_37 = arith.constant 0 : index
    %c0_38 = arith.constant 0 : index
    %c0_39 = arith.constant 0 : index
    %91 = vector.load %arg8[%c0_37, %c0_38, %c0_39] : memref<2x1x32xf32, #tpu.memory_space<vmem>>, vector<1x1x32xf32>
    %92 = vector.shape_cast %91 : vector<1x1x32xf32> to vector<1x32xf32>
    %cst_40 = arith.constant dense<0.000000e+00> : vector<16xf32>
    %93 = vector.multi_reduction <add>, %88, %cst_40 [1] : vector<16x32xf32> to vector<16xf32>
    %94 = vector.shape_cast %93 : vector<16xf32> to vector<16x1xf32>
    %cst_41 = arith.constant 3.200000e+01 : f32
    %95 = vector.broadcast %cst_41 : f32 to vector<16x1xf32>
    %96 = arith.divf %94, %95 : vector<16x1xf32>
    %97 = vector.broadcast %96 : vector<16x1xf32> to vector<16x32xf32>
    %98 = arith.subf %88, %97 : vector<16x32xf32>
    %99 = arith.mulf %98, %98 : vector<16x32xf32>
    %cst_42 = arith.constant dense<0.000000e+00> : vector<16xf32>
    %100 = vector.multi_reduction <add>, %99, %cst_42 [1] : vector<16x32xf32> to vector<16xf32>
    %101 = vector.shape_cast %100 : vector<16xf32> to vector<16x1xf32>
    %cst_43 = arith.constant 3.200000e+01 : f32
    %102 = vector.broadcast %cst_43 : f32 to vector<16x1xf32>
    %103 = arith.divf %101, %102 : vector<16x1xf32>
    %104 = vector.broadcast %96 : vector<16x1xf32> to vector<16x32xf32>
    %105 = arith.subf %88, %104 : vector<16x32xf32>
    %cst_44 = arith.constant 9.99999996E-13 : f32
    %106 = vector.broadcast %cst_44 : f32 to vector<16x1xf32>
    %107 = arith.addf %103, %106 : vector<16x1xf32>
    %108 = math.rsqrt %107 : vector<16x1xf32>
    %109 = vector.broadcast %108 : vector<16x1xf32> to vector<16x32xf32>
    %110 = arith.mulf %105, %109 : vector<16x32xf32>
    %111 = vector.broadcast %90 : vector<1x32xf32> to vector<16x32xf32>
    %112 = arith.mulf %110, %111 : vector<16x32xf32>
    %113 = vector.broadcast %92 : vector<1x32xf32> to vector<16x32xf32>
    %114 = arith.addf %112, %113 : vector<16x32xf32>
    %c0_45 = arith.constant 0 : index
    %c0_46 = arith.constant 0 : index
    %c0_47 = arith.constant 0 : index
    %115 = vector.load %arg9[%c0_45, %c0_46, %c0_47] : memref<2x32x64xf32, #tpu.memory_space<vmem>>, vector<1x32x64xf32>
    %116 = vector.shape_cast %115 : vector<1x32x64xf32> to vector<32x64xf32>
    %cst_48 = arith.constant dense<0.000000e+00> : vector<16x64xf32>
    %117 = tpu.matmul %114, %116, %cst_48 {dimension_numbers = #tpu.dot_dimension_numbers<[1], [0], [0], [1], [0, 0, 1, 1], [], []>} : vector<16x32xf32>, vector<32x64xf32>, vector<16x64xf32> -> vector<16x64xf32>
    %c0_49 = arith.constant 0 : index
    %c0_50 = arith.constant 0 : index
    %c0_51 = arith.constant 0 : index
    %118 = vector.load %arg10[%c0_49, %c0_50, %c0_51] : memref<2x1x64xf32, #tpu.memory_space<vmem>>, vector<1x1x64xf32>
    %119 = vector.shape_cast %118 : vector<1x1x64xf32> to vector<1x64xf32>
    %120 = vector.broadcast %119 : vector<1x64xf32> to vector<16x64xf32>
    %121 = arith.addf %117, %120 : vector<16x64xf32>
    %122 = arith.mulf %121, %121 : vector<16x64xf32>
    %123 = arith.mulf %121, %122 : vector<16x64xf32>
    %cst_52 = arith.constant 4.471500e-02 : f32
    %124 = vector.broadcast %cst_52 : f32 to vector<16x64xf32>
    %125 = arith.mulf %124, %123 : vector<16x64xf32>
    %126 = arith.addf %121, %125 : vector<16x64xf32>
    %cst_53 = arith.constant 0.797884583 : f32
    %127 = vector.broadcast %cst_53 : f32 to vector<16x64xf32>
    %128 = arith.mulf %127, %126 : vector<16x64xf32>
    %129 = math.tanh %128 : vector<16x64xf32>
    %cst_54 = arith.constant 1.000000e+00 : f32
    %130 = vector.broadcast %cst_54 : f32 to vector<16x64xf32>
    %131 = arith.addf %130, %129 : vector<16x64xf32>
    %cst_55 = arith.constant 5.000000e-01 : f32
    %132 = vector.broadcast %cst_55 : f32 to vector<16x64xf32>
    %133 = arith.mulf %132, %131 : vector<16x64xf32>
    %134 = arith.mulf %121, %133 : vector<16x64xf32>
    %c0_56 = arith.constant 0 : index
    %c0_57 = arith.constant 0 : index
    %c0_58 = arith.constant 0 : index
    %135 = vector.load %arg11[%c0_56, %c0_57, %c0_58] : memref<2x64x32xf32, #tpu.memory_space<vmem>>, vector<1x64x32xf32>
    %136 = vector.shape_cast %135 : vector<1x64x32xf32> to vector<64x32xf32>
    %cst_59 = arith.constant dense<0.000000e+00> : vector<16x32xf32>
    %137 = tpu.matmul %134, %136, %cst_59 {dimension_numbers = #tpu.dot_dimension_numbers<[1], [0], [0], [1], [0, 0, 1, 1], [], []>} : vector<16x64xf32>, vector<64x32xf32>, vector<16x32xf32> -> vector<16x32xf32>
    %c0_60 = arith.constant 0 : index
    %c0_61 = arith.constant 0 : index
    %c0_62 = arith.constant 0 : index
    %138 = vector.load %arg12[%c0_60, %c0_61, %c0_62] : memref<2x1x32xf32, #tpu.memory_space<vmem>>, vector<1x1x32xf32>
    %139 = vector.shape_cast %138 : vector<1x1x32xf32> to vector<1x32xf32>
    %140 = vector.broadcast %139 : vector<1x32xf32> to vector<16x32xf32>
    %141 = arith.addf %137, %140 : vector<16x32xf32>
    %142 = arith.addf %114, %141 : vector<16x32xf32>
    %c0_63 = arith.constant 0 : index
    %c0_64 = arith.constant 0 : index
    %c0_65 = arith.constant 0 : index
    %143 = vector.load %arg13[%c0_63, %c0_64, %c0_65] : memref<2x1x32xf32, #tpu.memory_space<vmem>>, vector<1x1x32xf32>
    %144 = vector.shape_cast %143 : vector<1x1x32xf32> to vector<1x32xf32>
    %c0_66 = arith.constant 0 : index
    %c0_67 = arith.constant 0 : index
    %c0_68 = arith.constant 0 : index
    %145 = vector.load %arg14[%c0_66, %c0_67, %c0_68] : memref<2x1x32xf32, #tpu.memory_space<vmem>>, vector<1x1x32xf32>
    %146 = vector.shape_cast %145 : vector<1x1x32xf32> to vector<1x32xf32>
    %cst_69 = arith.constant dense<0.000000e+00> : vector<16xf32>
    %147 = vector.multi_reduction <add>, %142, %cst_69 [1] : vector<16x32xf32> to vector<16xf32>
    %148 = vector.shape_cast %147 : vector<16xf32> to vector<16x1xf32>
    %cst_70 = arith.constant 3.200000e+01 : f32
    %149 = vector.broadcast %cst_70 : f32 to vector<16x1xf32>
    %150 = arith.divf %148, %149 : vector<16x1xf32>
    %151 = vector.broadcast %150 : vector<16x1xf32> to vector<16x32xf32>
    %152 = arith.subf %142, %151 : vector<16x32xf32>
    %153 = arith.mulf %152, %152 : vector<16x32xf32>
    %cst_71 = arith.constant dense<0.000000e+00> : vector<16xf32>
    %154 = vector.multi_reduction <add>, %153, %cst_71 [1] : vector<16x32xf32> to vector<16xf32>
    %155 = vector.shape_cast %154 : vector<16xf32> to vector<16x1xf32>
    %cst_72 = arith.constant 3.200000e+01 : f32
    %156 = vector.broadcast %cst_72 : f32 to vector<16x1xf32>
    %157 = arith.divf %155, %156 : vector<16x1xf32>
    %158 = vector.broadcast %150 : vector<16x1xf32> to vector<16x32xf32>
    %159 = arith.subf %142, %158 : vector<16x32xf32>
    %cst_73 = arith.constant 9.99999996E-13 : f32
    %160 = vector.broadcast %cst_73 : f32 to vector<16x1xf32>
    %161 = arith.addf %157, %160 : vector<16x1xf32>
    %162 = math.rsqrt %161 : vector<16x1xf32>
    %163 = vector.broadcast %162 : vector<16x1xf32> to vector<16x32xf32>
    %164 = arith.mulf %159, %163 : vector<16x32xf32>
    %165 = vector.broadcast %144 : vector<1x32xf32> to vector<16x32xf32>
    %166 = arith.mulf %164, %165 : vector<16x32xf32>
    %167 = vector.broadcast %146 : vector<1x32xf32> to vector<16x32xf32>
    %168 = arith.addf %166, %167 : vector<16x32xf32>
    %169 = vector.shape_cast %168 : vector<16x32xf32> to vector<2x8x32xf32>
    %170 = vector.shape_cast %169 : vector<2x8x32xf32> to vector<16x32xf32>
    %c1 = arith.constant 1 : index
    %c0_74 = arith.constant 0 : index
    %c0_75 = arith.constant 0 : index
    %171 = vector.load %arg3[%c1, %c0_74, %c0_75] : memref<2x32x96xf32, #tpu.memory_space<vmem>>, vector<1x32x96xf32>
    %172 = vector.shape_cast %171 : vector<1x32x96xf32> to vector<32x96xf32>
    %cst_76 = arith.constant dense<0.000000e+00> : vector<16x96xf32>
    %173 = tpu.matmul %170, %172, %cst_76 {dimension_numbers = #tpu.dot_dimension_numbers<[1], [0], [0], [1], [0, 0, 1, 1], [], []>} : vector<16x32xf32>, vector<32x96xf32>, vector<16x96xf32> -> vector<16x96xf32>
    %c1_77 = arith.constant 1 : index
    %c0_78 = arith.constant 0 : index
    %c0_79 = arith.constant 0 : index
    %174 = vector.load %arg4[%c1_77, %c0_78, %c0_79] : memref<2x1x96xf32, #tpu.memory_space<vmem>>, vector<1x1x96xf32>
    %175 = vector.shape_cast %174 : vector<1x1x96xf32> to vector<1x96xf32>
    %176 = vector.broadcast %175 : vector<1x96xf32> to vector<16x96xf32>
    %177 = arith.addf %173, %176 : vector<16x96xf32>
    %178 = vector.shape_cast %177 : vector<16x96xf32> to vector<2x8x96xf32>
    %179 = vector.extract_strided_slice %178 {offsets = [0, 0, 0], sizes = [2, 8, 8], strides = [1, 1, 1]} : vector<2x8x96xf32> to vector<2x8x8xf32>
    %180 = vector.extract_strided_slice %178 {offsets = [0, 0, 32], sizes = [2, 8, 8], strides = [1, 1, 1]} : vector<2x8x96xf32> to vector<2x8x8xf32>
    %181 = vector.extract_strided_slice %178 {offsets = [0, 0, 64], sizes = [2, 8, 8], strides = [1, 1, 1]} : vector<2x8x96xf32> to vector<2x8x8xf32>
    "tpu.trace_start"() <{level = 10 : i32, message = "bqd,bkd->bqk"}> : () -> ()
    %cst_80 = arith.constant dense<0.000000e+00> : vector<2x8x8xf32>
    %182 = tpu.matmul %179, %180, %cst_80 {dimension_numbers = #tpu.dot_dimension_numbers<[2], [2], [1], [1], [0, 0, 0, 1, 1, 1], [0], [0]>} : vector<2x8x8xf32>, vector<2x8x8xf32>, vector<2x8x8xf32> -> vector<2x8x8xf32>
    "tpu.trace_stop"() : () -> ()
    %183 = vector.broadcast %1 : vector<2x1x8xf32> to vector<2x8x8xf32>
    %184 = arith.addf %182, %183 : vector<2x8x8xf32>
    %cst_81 = arith.constant dense<0xFF800000> : vector<2x8xf32>
    %185 = vector.multi_reduction <maximumf>, %184, %cst_81 [2] : vector<2x8x8xf32> to vector<2x8xf32>
    %186 = vector.shape_cast %185 : vector<2x8xf32> to vector<2x8x1xf32>
    %187 = vector.broadcast %186 : vector<2x8x1xf32> to vector<2x8x8xf32>
    %188 = arith.subf %184, %187 : vector<2x8x8xf32>
    %189 = math.exp %188 : vector<2x8x8xf32>
    %cst_82 = arith.constant dense<0.000000e+00> : vector<2x8xf32>
    %190 = vector.multi_reduction <add>, %189, %cst_82 [2] : vector<2x8x8xf32> to vector<2x8xf32>
    %191 = vector.shape_cast %190 : vector<2x8xf32> to vector<2x8x1xf32>
    %192 = tpu.reciprocal %191 {approx = true} : vector<2x8x1xf32> -> vector<2x8x1xf32>
    %193 = vector.broadcast %192 : vector<2x8x1xf32> to vector<2x8x8xf32>
    %194 = arith.mulf %189, %193 : vector<2x8x8xf32>
    "tpu.trace_start"() <{level = 10 : i32, message = "bqk,bkd->bqd"}> : () -> ()
    %cst_83 = arith.constant dense<0.000000e+00> : vector<2x8x8xf32>
    %195 = tpu.matmul %194, %181, %cst_83 {dimension_numbers = #tpu.dot_dimension_numbers<[2], [1], [1], [2], [0, 0, 0, 1, 1, 2], [0], [0]>} : vector<2x8x8xf32>, vector<2x8x8xf32>, vector<2x8x8xf32> -> vector<2x8x8xf32>
    "tpu.trace_stop"() : () -> ()
    %196 = vector.extract_strided_slice %178 {offsets = [0, 0, 8], sizes = [2, 8, 8], strides = [1, 1, 1]} : vector<2x8x96xf32> to vector<2x8x8xf32>
    %197 = vector.extract_strided_slice %178 {offsets = [0, 0, 40], sizes = [2, 8, 8], strides = [1, 1, 1]} : vector<2x8x96xf32> to vector<2x8x8xf32>
    %198 = vector.extract_strided_slice %178 {offsets = [0, 0, 72], sizes = [2, 8, 8], strides = [1, 1, 1]} : vector<2x8x96xf32> to vector<2x8x8xf32>
    "tpu.trace_start"() <{level = 10 : i32, message = "bqd,bkd->bqk"}> : () -> ()
    %cst_84 = arith.constant dense<0.000000e+00> : vector<2x8x8xf32>
    %199 = tpu.matmul %196, %197, %cst_84 {dimension_numbers = #tpu.dot_dimension_numbers<[2], [2], [1], [1], [0, 0, 0, 1, 1, 1], [0], [0]>} : vector<2x8x8xf32>, vector<2x8x8xf32>, vector<2x8x8xf32> -> vector<2x8x8xf32>
    "tpu.trace_stop"() : () -> ()
    %200 = vector.broadcast %1 : vector<2x1x8xf32> to vector<2x8x8xf32>
    %201 = arith.addf %199, %200 : vector<2x8x8xf32>
    %cst_85 = arith.constant dense<0xFF800000> : vector<2x8xf32>
    %202 = vector.multi_reduction <maximumf>, %201, %cst_85 [2] : vector<2x8x8xf32> to vector<2x8xf32>
    %203 = vector.shape_cast %202 : vector<2x8xf32> to vector<2x8x1xf32>
    %204 = vector.broadcast %203 : vector<2x8x1xf32> to vector<2x8x8xf32>
    %205 = arith.subf %201, %204 : vector<2x8x8xf32>
    %206 = math.exp %205 : vector<2x8x8xf32>
    %cst_86 = arith.constant dense<0.000000e+00> : vector<2x8xf32>
    %207 = vector.multi_reduction <add>, %206, %cst_86 [2] : vector<2x8x8xf32> to vector<2x8xf32>
    %208 = vector.shape_cast %207 : vector<2x8xf32> to vector<2x8x1xf32>
    %209 = tpu.reciprocal %208 {approx = true} : vector<2x8x1xf32> -> vector<2x8x1xf32>
    %210 = vector.broadcast %209 : vector<2x8x1xf32> to vector<2x8x8xf32>
    %211 = arith.mulf %206, %210 : vector<2x8x8xf32>
    "tpu.trace_start"() <{level = 10 : i32, message = "bqk,bkd->bqd"}> : () -> ()
    %cst_87 = arith.constant dense<0.000000e+00> : vector<2x8x8xf32>
    %212 = tpu.matmul %211, %198, %cst_87 {dimension_numbers = #tpu.dot_dimension_numbers<[2], [1], [1], [2], [0, 0, 0, 1, 1, 2], [0], [0]>} : vector<2x8x8xf32>, vector<2x8x8xf32>, vector<2x8x8xf32> -> vector<2x8x8xf32>
    "tpu.trace_stop"() : () -> ()
    %213 = vector.extract_strided_slice %178 {offsets = [0, 0, 16], sizes = [2, 8, 8], strides = [1, 1, 1]} : vector<2x8x96xf32> to vector<2x8x8xf32>
    %214 = vector.extract_strided_slice %178 {offsets = [0, 0, 48], sizes = [2, 8, 8], strides = [1, 1, 1]} : vector<2x8x96xf32> to vector<2x8x8xf32>
    %215 = vector.extract_strided_slice %178 {offsets = [0, 0, 80], sizes = [2, 8, 8], strides = [1, 1, 1]} : vector<2x8x96xf32> to vector<2x8x8xf32>
    "tpu.trace_start"() <{level = 10 : i32, message = "bqd,bkd->bqk"}> : () -> ()
    %cst_88 = arith.constant dense<0.000000e+00> : vector<2x8x8xf32>
    %216 = tpu.matmul %213, %214, %cst_88 {dimension_numbers = #tpu.dot_dimension_numbers<[2], [2], [1], [1], [0, 0, 0, 1, 1, 1], [0], [0]>} : vector<2x8x8xf32>, vector<2x8x8xf32>, vector<2x8x8xf32> -> vector<2x8x8xf32>
    "tpu.trace_stop"() : () -> ()
    %217 = vector.broadcast %1 : vector<2x1x8xf32> to vector<2x8x8xf32>
    %218 = arith.addf %216, %217 : vector<2x8x8xf32>
    %cst_89 = arith.constant dense<0xFF800000> : vector<2x8xf32>
    %219 = vector.multi_reduction <maximumf>, %218, %cst_89 [2] : vector<2x8x8xf32> to vector<2x8xf32>
    %220 = vector.shape_cast %219 : vector<2x8xf32> to vector<2x8x1xf32>
    %221 = vector.broadcast %220 : vector<2x8x1xf32> to vector<2x8x8xf32>
    %222 = arith.subf %218, %221 : vector<2x8x8xf32>
    %223 = math.exp %222 : vector<2x8x8xf32>
    %cst_90 = arith.constant dense<0.000000e+00> : vector<2x8xf32>
    %224 = vector.multi_reduction <add>, %223, %cst_90 [2] : vector<2x8x8xf32> to vector<2x8xf32>
    %225 = vector.shape_cast %224 : vector<2x8xf32> to vector<2x8x1xf32>
    %226 = tpu.reciprocal %225 {approx = true} : vector<2x8x1xf32> -> vector<2x8x1xf32>
    %227 = vector.broadcast %226 : vector<2x8x1xf32> to vector<2x8x8xf32>
    %228 = arith.mulf %223, %227 : vector<2x8x8xf32>
    "tpu.trace_start"() <{level = 10 : i32, message = "bqk,bkd->bqd"}> : () -> ()
    %cst_91 = arith.constant dense<0.000000e+00> : vector<2x8x8xf32>
    %229 = tpu.matmul %228, %215, %cst_91 {dimension_numbers = #tpu.dot_dimension_numbers<[2], [1], [1], [2], [0, 0, 0, 1, 1, 2], [0], [0]>} : vector<2x8x8xf32>, vector<2x8x8xf32>, vector<2x8x8xf32> -> vector<2x8x8xf32>
    "tpu.trace_stop"() : () -> ()
    %230 = vector.extract_strided_slice %178 {offsets = [0, 0, 24], sizes = [2, 8, 8], strides = [1, 1, 1]} : vector<2x8x96xf32> to vector<2x8x8xf32>
    %231 = vector.extract_strided_slice %178 {offsets = [0, 0, 56], sizes = [2, 8, 8], strides = [1, 1, 1]} : vector<2x8x96xf32> to vector<2x8x8xf32>
    %232 = vector.extract_strided_slice %178 {offsets = [0, 0, 88], sizes = [2, 8, 8], strides = [1, 1, 1]} : vector<2x8x96xf32> to vector<2x8x8xf32>
    "tpu.trace_start"() <{level = 10 : i32, message = "bqd,bkd->bqk"}> : () -> ()
    %cst_92 = arith.constant dense<0.000000e+00> : vector<2x8x8xf32>
    %233 = tpu.matmul %230, %231, %cst_92 {dimension_numbers = #tpu.dot_dimension_numbers<[2], [2], [1], [1], [0, 0, 0, 1, 1, 1], [0], [0]>} : vector<2x8x8xf32>, vector<2x8x8xf32>, vector<2x8x8xf32> -> vector<2x8x8xf32>
    "tpu.trace_stop"() : () -> ()
    %234 = vector.broadcast %1 : vector<2x1x8xf32> to vector<2x8x8xf32>
    %235 = arith.addf %233, %234 : vector<2x8x8xf32>
    %cst_93 = arith.constant dense<0xFF800000> : vector<2x8xf32>
    %236 = vector.multi_reduction <maximumf>, %235, %cst_93 [2] : vector<2x8x8xf32> to vector<2x8xf32>
    %237 = vector.shape_cast %236 : vector<2x8xf32> to vector<2x8x1xf32>
    %238 = vector.broadcast %237 : vector<2x8x1xf32> to vector<2x8x8xf32>
    %239 = arith.subf %235, %238 : vector<2x8x8xf32>
    %240 = math.exp %239 : vector<2x8x8xf32>
    %cst_94 = arith.constant dense<0.000000e+00> : vector<2x8xf32>
    %241 = vector.multi_reduction <add>, %240, %cst_94 [2] : vector<2x8x8xf32> to vector<2x8xf32>
    %242 = vector.shape_cast %241 : vector<2x8xf32> to vector<2x8x1xf32>
    %243 = tpu.reciprocal %242 {approx = true} : vector<2x8x1xf32> -> vector<2x8x1xf32>
    %244 = vector.broadcast %243 : vector<2x8x1xf32> to vector<2x8x8xf32>
    %245 = arith.mulf %240, %244 : vector<2x8x8xf32>
    "tpu.trace_start"() <{level = 10 : i32, message = "bqk,bkd->bqd"}> : () -> ()
    %cst_95 = arith.constant dense<0.000000e+00> : vector<2x8x8xf32>
    %246 = tpu.matmul %245, %232, %cst_95 {dimension_numbers = #tpu.dot_dimension_numbers<[2], [1], [1], [2], [0, 0, 0, 1, 1, 2], [0], [0]>} : vector<2x8x8xf32>, vector<2x8x8xf32>, vector<2x8x8xf32> -> vector<2x8x8xf32>
    "tpu.trace_stop"() : () -> ()
    %247 = tpu.concatenate %195, %212, %229, %246 in 2 : vector<2x8x8xf32>, vector<2x8x8xf32>, vector<2x8x8xf32>, vector<2x8x8xf32> -> vector<2x8x32xf32>
    %248 = vector.shape_cast %247 : vector<2x8x32xf32> to vector<16x32xf32>
    %c1_96 = arith.constant 1 : index
    %c0_97 = arith.constant 0 : index
    %c0_98 = arith.constant 0 : index
    %249 = vector.load %arg5[%c1_96, %c0_97, %c0_98] : memref<2x32x32xf32, #tpu.memory_space<vmem>>, vector<1x32x32xf32>
    %250 = vector.shape_cast %249 : vector<1x32x32xf32> to vector<32x32xf32>
    %cst_99 = arith.constant dense<0.000000e+00> : vector<16x32xf32>
    %251 = tpu.matmul %248, %250, %cst_99 {dimension_numbers = #tpu.dot_dimension_numbers<[1], [0], [0], [1], [0, 0, 1, 1], [], []>} : vector<16x32xf32>, vector<32x32xf32>, vector<16x32xf32> -> vector<16x32xf32>
    %c1_100 = arith.constant 1 : index
    %c0_101 = arith.constant 0 : index
    %c0_102 = arith.constant 0 : index
    %252 = vector.load %arg6[%c1_100, %c0_101, %c0_102] : memref<2x1x32xf32, #tpu.memory_space<vmem>>, vector<1x1x32xf32>
    %253 = vector.shape_cast %252 : vector<1x1x32xf32> to vector<1x32xf32>
    %254 = vector.broadcast %253 : vector<1x32xf32> to vector<16x32xf32>
    %255 = arith.addf %251, %254 : vector<16x32xf32>
    %256 = arith.addf %170, %255 : vector<16x32xf32>
    %c1_103 = arith.constant 1 : index
    %c0_104 = arith.constant 0 : index
    %c0_105 = arith.constant 0 : index
    %257 = vector.load %arg7[%c1_103, %c0_104, %c0_105] : memref<2x1x32xf32, #tpu.memory_space<vmem>>, vector<1x1x32xf32>
    %258 = vector.shape_cast %257 : vector<1x1x32xf32> to vector<1x32xf32>
    %c1_106 = arith.constant 1 : index
    %c0_107 = arith.constant 0 : index
    %c0_108 = arith.constant 0 : index
    %259 = vector.load %arg8[%c1_106, %c0_107, %c0_108] : memref<2x1x32xf32, #tpu.memory_space<vmem>>, vector<1x1x32xf32>
    %260 = vector.shape_cast %259 : vector<1x1x32xf32> to vector<1x32xf32>
    %cst_109 = arith.constant dense<0.000000e+00> : vector<16xf32>
    %261 = vector.multi_reduction <add>, %256, %cst_109 [1] : vector<16x32xf32> to vector<16xf32>
    %262 = vector.shape_cast %261 : vector<16xf32> to vector<16x1xf32>
    %cst_110 = arith.constant 3.200000e+01 : f32
    %263 = vector.broadcast %cst_110 : f32 to vector<16x1xf32>
    %264 = arith.divf %262, %263 : vector<16x1xf32>
    %265 = vector.broadcast %264 : vector<16x1xf32> to vector<16x32xf32>
    %266 = arith.subf %256, %265 : vector<16x32xf32>
    %267 = arith.mulf %266, %266 : vector<16x32xf32>
    %cst_111 = arith.constant dense<0.000000e+00> : vector<16xf32>
    %268 = vector.multi_reduction <add>, %267, %cst_111 [1] : vector<16x32xf32> to vector<16xf32>
    %269 = vector.shape_cast %268 : vector<16xf32> to vector<16x1xf32>
    %cst_112 = arith.constant 3.200000e+01 : f32
    %270 = vector.broadcast %cst_112 : f32 to vector<16x1xf32>
    %271 = arith.divf %269, %270 : vector<16x1xf32>
    %272 = vector.broadcast %264 : vector<16x1xf32> to vector<16x32xf32>
    %273 = arith.subf %256, %272 : vector<16x32xf32>
    %cst_113 = arith.constant 9.99999996E-13 : f32
    %274 = vector.broadcast %cst_113 : f32 to vector<16x1xf32>
    %275 = arith.addf %271, %274 : vector<16x1xf32>
    %276 = math.rsqrt %275 : vector<16x1xf32>
    %277 = vector.broadcast %276 : vector<16x1xf32> to vector<16x32xf32>
    %278 = arith.mulf %273, %277 : vector<16x32xf32>
    %279 = vector.broadcast %258 : vector<1x32xf32> to vector<16x32xf32>
    %280 = arith.mulf %278, %279 : vector<16x32xf32>
    %281 = vector.broadcast %260 : vector<1x32xf32> to vector<16x32xf32>
    %282 = arith.addf %280, %281 : vector<16x32xf32>
    %c1_114 = arith.constant 1 : index
    %c0_115 = arith.constant 0 : index
    %c0_116 = arith.constant 0 : index
    %283 = vector.load %arg9[%c1_114, %c0_115, %c0_116] : memref<2x32x64xf32, #tpu.memory_space<vmem>>, vector<1x32x64xf32>
    %284 = vector.shape_cast %283 : vector<1x32x64xf32> to vector<32x64xf32>
    %cst_117 = arith.constant dense<0.000000e+00> : vector<16x64xf32>
    %285 = tpu.matmul %282, %284, %cst_117 {dimension_numbers = #tpu.dot_dimension_numbers<[1], [0], [0], [1], [0, 0, 1, 1], [], []>} : vector<16x32xf32>, vector<32x64xf32>, vector<16x64xf32> -> vector<16x64xf32>
    %c1_118 = arith.constant 1 : index
    %c0_119 = arith.constant 0 : index
    %c0_120 = arith.constant 0 : index
    %286 = vector.load %arg10[%c1_118, %c0_119, %c0_120] : memref<2x1x64xf32, #tpu.memory_space<vmem>>, vector<1x1x64xf32>
    %287 = vector.shape_cast %286 : vector<1x1x64xf32> to vector<1x64xf32>
    %288 = vector.broadcast %287 : vector<1x64xf32> to vector<16x64xf32>
    %289 = arith.addf %285, %288 : vector<16x64xf32>
    %290 = arith.mulf %289, %289 : vector<16x64xf32>
    %291 = arith.mulf %289, %290 : vector<16x64xf32>
    %cst_121 = arith.constant 4.471500e-02 : f32
    %292 = vector.broadcast %cst_121 : f32 to vector<16x64xf32>
    %293 = arith.mulf %292, %291 : vector<16x64xf32>
    %294 = arith.addf %289, %293 : vector<16x64xf32>
    %cst_122 = arith.constant 0.797884583 : f32
    %295 = vector.broadcast %cst_122 : f32 to vector<16x64xf32>
    %296 = arith.mulf %295, %294 : vector<16x64xf32>
    %297 = math.tanh %296 : vector<16x64xf32>
    %cst_123 = arith.constant 1.000000e+00 : f32
    %298 = vector.broadcast %cst_123 : f32 to vector<16x64xf32>
    %299 = arith.addf %298, %297 : vector<16x64xf32>
    %cst_124 = arith.constant 5.000000e-01 : f32
    %300 = vector.broadcast %cst_124 : f32 to vector<16x64xf32>
    %301 = arith.mulf %300, %299 : vector<16x64xf32>
    %302 = arith.mulf %289, %301 : vector<16x64xf32>
    %c1_125 = arith.constant 1 : index
    %c0_126 = arith.constant 0 : index
    %c0_127 = arith.constant 0 : index
    %303 = vector.load %arg11[%c1_125, %c0_126, %c0_127] : memref<2x64x32xf32, #tpu.memory_space<vmem>>, vector<1x64x32xf32>
    %304 = vector.shape_cast %303 : vector<1x64x32xf32> to vector<64x32xf32>
    %cst_128 = arith.constant dense<0.000000e+00> : vector<16x32xf32>
    %305 = tpu.matmul %302, %304, %cst_128 {dimension_numbers = #tpu.dot_dimension_numbers<[1], [0], [0], [1], [0, 0, 1, 1], [], []>} : vector<16x64xf32>, vector<64x32xf32>, vector<16x32xf32> -> vector<16x32xf32>
    %c1_129 = arith.constant 1 : index
    %c0_130 = arith.constant 0 : index
    %c0_131 = arith.constant 0 : index
    %306 = vector.load %arg12[%c1_129, %c0_130, %c0_131] : memref<2x1x32xf32, #tpu.memory_space<vmem>>, vector<1x1x32xf32>
    %307 = vector.shape_cast %306 : vector<1x1x32xf32> to vector<1x32xf32>
    %308 = vector.broadcast %307 : vector<1x32xf32> to vector<16x32xf32>
    %309 = arith.addf %305, %308 : vector<16x32xf32>
    %310 = arith.addf %282, %309 : vector<16x32xf32>
    %c1_132 = arith.constant 1 : index
    %c0_133 = arith.constant 0 : index
    %c0_134 = arith.constant 0 : index
    %311 = vector.load %arg13[%c1_132, %c0_133, %c0_134] : memref<2x1x32xf32, #tpu.memory_space<vmem>>, vector<1x1x32xf32>
    %312 = vector.shape_cast %311 : vector<1x1x32xf32> to vector<1x32xf32>
    %c1_135 = arith.constant 1 : index
    %c0_136 = arith.constant 0 : index
    %c0_137 = arith.constant 0 : index
    %313 = vector.load %arg14[%c1_135, %c0_136, %c0_137] : memref<2x1x32xf32, #tpu.memory_space<vmem>>, vector<1x1x32xf32>
    %314 = vector.shape_cast %313 : vector<1x1x32xf32> to vector<1x32xf32>
    %cst_138 = arith.constant dense<0.000000e+00> : vector<16xf32>
    %315 = vector.multi_reduction <add>, %310, %cst_138 [1] : vector<16x32xf32> to vector<16xf32>
    %316 = vector.shape_cast %315 : vector<16xf32> to vector<16x1xf32>
    %cst_139 = arith.constant 3.200000e+01 : f32
    %317 = vector.broadcast %cst_139 : f32 to vector<16x1xf32>
    %318 = arith.divf %316, %317 : vector<16x1xf32>
    %319 = vector.broadcast %318 : vector<16x1xf32> to vector<16x32xf32>
    %320 = arith.subf %310, %319 : vector<16x32xf32>
    %321 = arith.mulf %320, %320 : vector<16x32xf32>
    %cst_140 = arith.constant dense<0.000000e+00> : vector<16xf32>
    %322 = vector.multi_reduction <add>, %321, %cst_140 [1] : vector<16x32xf32> to vector<16xf32>
    %323 = vector.shape_cast %322 : vector<16xf32> to vector<16x1xf32>
    %cst_141 = arith.constant 3.200000e+01 : f32
    %324 = vector.broadcast %cst_141 : f32 to vector<16x1xf32>
    %325 = arith.divf %323, %324 : vector<16x1xf32>
    %326 = vector.broadcast %318 : vector<16x1xf32> to vector<16x32xf32>
    %327 = arith.subf %310, %326 : vector<16x32xf32>
    %cst_142 = arith.constant 9.99999996E-13 : f32
    %328 = vector.broadcast %cst_142 : f32 to vector<16x1xf32>
    %329 = arith.addf %325, %328 : vector<16x1xf32>
    %330 = math.rsqrt %329 : vector<16x1xf32>
    %331 = vector.broadcast %330 : vector<16x1xf32> to vector<16x32xf32>
    %332 = arith.mulf %327, %331 : vector<16x32xf32>
    %333 = vector.broadcast %312 : vector<1x32xf32> to vector<16x32xf32>
    %334 = arith.mulf %332, %333 : vector<16x32xf32>
    %335 = vector.broadcast %314 : vector<1x32xf32> to vector<16x32xf32>
    %336 = arith.addf %334, %335 : vector<16x32xf32>
    %337 = vector.shape_cast %336 : vector<16x32xf32> to vector<2x8x32xf32>
    %338 = vector.extract_strided_slice %337 {offsets = [0, 0, 0], sizes = [2, 1, 32], strides = [1, 1, 1]} : vector<2x8x32xf32> to vector<2x1x32xf32>
    %339 = vector.shape_cast %338 : vector<2x1x32xf32> to vector<2x32xf32>
    %c0_143 = arith.constant 0 : index
    %c0_144 = arith.constant 0 : index
    %340 = vector.load %arg15[%c0_143, %c0_144] : memref<32x32xf32, #tpu.memory_space<vmem>>, vector<32x32xf32>
    %cst_145 = arith.constant dense<0.000000e+00> : vector<2x32xf32>
    %341 = tpu.matmul %339, %340, %cst_145 {dimension_numbers = #tpu.dot_dimension_numbers<[1], [0], [0], [1], [0, 0, 1, 1], [], []>} : vector<2x32xf32>, vector<32x32xf32>, vector<2x32xf32> -> vector<2x32xf32>
    %c0_146 = arith.constant 0 : index
    %c0_147 = arith.constant 0 : index
    %342 = vector.load %arg16[%c0_146, %c0_147] : memref<1x32xf32, #tpu.memory_space<vmem>>, vector<1x32xf32>
    %343 = vector.broadcast %342 : vector<1x32xf32> to vector<2x32xf32>
    %344 = arith.addf %341, %343 : vector<2x32xf32>
    %345 = math.tanh %344 : vector<2x32xf32>
    %c0_148 = arith.constant 0 : index
    %c0_149 = arith.constant 0 : index
    %346 = vector.load %arg2[%c0_148, %c0_149] : memref<2x6xf32, #tpu.memory_space<vmem>>, vector<2x6xf32>
    %c0_150 = arith.constant 0 : index
    %c0_151 = arith.constant 0 : index
    %347 = vector.load %arg17[%c0_150, %c0_151] : memref<6x10xf32, #tpu.memory_space<vmem>>, vector<6x10xf32>
    %cst_152 = arith.constant dense<0.000000e+00> : vector<2x10xf32>
    %348 = tpu.matmul %346, %347, %cst_152 {dimension_numbers = #tpu.dot_dimension_numbers<[1], [0], [0], [1], [0, 0, 1, 1], [], []>} : vector<2x6xf32>, vector<6x10xf32>, vector<2x10xf32> -> vector<2x10xf32>
    %c0_153 = arith.constant 0 : index
    %c0_154 = arith.constant 0 : index
    %349 = vector.load %arg18[%c0_153, %c0_154] : memref<1x10xf32, #tpu.memory_space<vmem>>, vector<1x10xf32>
    %350 = vector.broadcast %349 : vector<1x10xf32> to vector<2x10xf32>
    %351 = arith.addf %348, %350 : vector<2x10xf32>
    %cst_155 = arith.constant 0.000000e+00 : f32
    %352 = vector.broadcast %cst_155 : f32 to vector<2x10xf32>
    %353 = arith.maximumf %351, %352 : vector<2x10xf32>
    %c0_156 = arith.constant 0 : index
    %c0_157 = arith.constant 0 : index
    %354 = vector.load %arg19[%c0_156, %c0_157] : memref<10x8xf32, #tpu.memory_space<vmem>>, vector<10x8xf32>
    %cst_158 = arith.constant dense<0.000000e+00> : vector<2x8xf32>
    %355 = tpu.matmul %353, %354, %cst_158 {dimension_numbers = #tpu.dot_dimension_numbers<[1], [0], [0], [1], [0, 0, 1, 1], [], []>} : vector<2x10xf32>, vector<10x8xf32>, vector<2x8xf32> -> vector<2x8xf32>
    %c0_159 = arith.constant 0 : index
    %c0_160 = arith.constant 0 : index
    %356 = vector.load %arg20[%c0_159, %c0_160] : memref<1x8xf32, #tpu.memory_space<vmem>>, vector<1x8xf32>
    %357 = vector.broadcast %356 : vector<1x8xf32> to vector<2x8xf32>
    %358 = arith.addf %355, %357 : vector<2x8xf32>
    %cst_161 = arith.constant 0.000000e+00 : f32
    %359 = vector.broadcast %cst_161 : f32 to vector<2x8xf32>
    %360 = arith.maximumf %358, %359 : vector<2x8xf32>
    %c0_162 = arith.constant 0 : index
    %c0_163 = arith.constant 0 : index
    %361 = vector.load %arg21[%c0_162, %c0_163] : memref<32x32xf32, #tpu.memory_space<vmem>>, vector<32x32xf32>
    %cst_164 = arith.constant dense<0.000000e+00> : vector<2x32xf32>
    %362 = tpu.matmul %345, %361, %cst_164 {dimension_numbers = #tpu.dot_dimension_numbers<[1], [0], [0], [1], [0, 0, 1, 1], [], []>} : vector<2x32xf32>, vector<32x32xf32>, vector<2x32xf32> -> vector<2x32xf32>
    %c0_165 = arith.constant 0 : index
    %c0_166 = arith.constant 0 : index
    %363 = vector.load %arg22[%c0_165, %c0_166] : memref<8x32xf32, #tpu.memory_space<vmem>>, vector<8x32xf32>
    %cst_167 = arith.constant dense<0.000000e+00> : vector<2x32xf32>
    %364 = tpu.matmul %360, %363, %cst_167 {dimension_numbers = #tpu.dot_dimension_numbers<[1], [0], [0], [1], [0, 0, 1, 1], [], []>} : vector<2x8xf32>, vector<8x32xf32>, vector<2x32xf32> -> vector<2x32xf32>
    %365 = arith.addf %362, %364 : vector<2x32xf32>
    %c0_168 = arith.constant 0 : index
    %c0_169 = arith.constant 0 : index
    %366 = vector.load %arg23[%c0_168, %c0_169] : memref<1x32xf32, #tpu.memory_space<vmem>>, vector<1x32xf32>
    %367 = vector.broadcast %366 : vector<1x32xf32> to vector<2x32xf32>
    %368 = arith.addf %365, %367 : vector<2x32xf32>
    %cst_170 = arith.constant 0.000000e+00 : f32
    %369 = vector.broadcast %cst_170 : f32 to vector<2x32xf32>
    %370 = arith.maximumf %368, %369 : vector<2x32xf32>
    %c0_171 = arith.constant 0 : index
    %c0_172 = arith.constant 0 : index
    %371 = vector.load %arg24[%c0_171, %c0_172] : memref<32x16xf32, #tpu.memory_space<vmem>>, vector<32x16xf32>
    %cst_173 = arith.constant dense<0.000000e+00> : vector<2x16xf32>
    %372 = tpu.matmul %370, %371, %cst_173 {dimension_numbers = #tpu.dot_dimension_numbers<[1], [0], [0], [1], [0, 0, 1, 1], [], []>} : vector<2x32xf32>, vector<32x16xf32>, vector<2x16xf32> -> vector<2x16xf32>
    %c0_174 = arith.constant 0 : index
    %c0_175 = arith.constant 0 : index
    %373 = vector.load %arg25[%c0_174, %c0_175] : memref<1x16xf32, #tpu.memory_space<vmem>>, vector<1x16xf32>
    %374 = vector.broadcast %373 : vector<1x16xf32> to vector<2x16xf32>
    %375 = arith.addf %372, %374 : vector<2x16xf32>
    %cst_176 = arith.constant 0.000000e+00 : f32
    %376 = vector.broadcast %cst_176 : f32 to vector<2x16xf32>
    %377 = arith.maximumf %375, %376 : vector<2x16xf32>
    %c0_177 = arith.constant 0 : index
    %c0_178 = arith.constant 0 : index
    %378 = vector.load %arg26[%c0_177, %c0_178] : memref<16x10xf32, #tpu.memory_space<vmem>>, vector<16x10xf32>
    %cst_179 = arith.constant dense<0.000000e+00> : vector<2x10xf32>
    %379 = tpu.matmul %377, %378, %cst_179 {dimension_numbers = #tpu.dot_dimension_numbers<[1], [0], [0], [1], [0, 0, 1, 1], [], []>} : vector<2x16xf32>, vector<16x10xf32>, vector<2x10xf32> -> vector<2x10xf32>
    %c0_180 = arith.constant 0 : index
    %c0_181 = arith.constant 0 : index
    %380 = vector.load %arg27[%c0_180, %c0_181] : memref<1x10xf32, #tpu.memory_space<vmem>>, vector<1x10xf32>
    %381 = vector.broadcast %380 : vector<1x10xf32> to vector<2x10xf32>
    %382 = arith.addf %379, %381 : vector<2x10xf32>
    %cst_182 = arith.constant 0.000000e+00 : f32
    %383 = vector.broadcast %cst_182 : f32 to vector<2x10xf32>
    %384 = arith.maximumf %382, %383 : vector<2x10xf32>
    %c0_183 = arith.constant 0 : index
    %c0_184 = arith.constant 0 : index
    %385 = vector.load %arg28[%c0_183, %c0_184] : memref<10x128xf32, #tpu.memory_space<vmem>>, vector<10x128xf32>
    %cst_185 = arith.constant dense<0.000000e+00> : vector<2x128xf32>
    %386 = tpu.matmul %384, %385, %cst_185 {dimension_numbers = #tpu.dot_dimension_numbers<[1], [0], [0], [1], [0, 0, 1, 1], [], []>} : vector<2x10xf32>, vector<10x128xf32>, vector<2x128xf32> -> vector<2x128xf32>
    %c0_186 = arith.constant 0 : index
    %c0_187 = arith.constant 0 : index
    %387 = vector.load %arg29[%c0_186, %c0_187] : memref<1x128xf32, #tpu.memory_space<vmem>>, vector<1x128xf32>
    %388 = vector.broadcast %387 : vector<1x128xf32> to vector<2x128xf32>
    %389 = arith.addf %386, %388 : vector<2x128xf32>
    %c0_188 = arith.constant 0 : index
    %c0_189 = arith.constant 0 : index
    %390 = vector.load %arg30[%c0_188, %c0_189] : memref<2x128xf32, #tpu.memory_space<vmem>>, vector<2x128xf32>
    tpu.vector_store %arg30[%c0_188, %c0_189], %389 {strides = array<i32>} : memref<2x128xf32, #tpu.memory_space<vmem>>, vector<2x128xf32>,
    return
  }
}

</mosaic_0001>

<llo_original>
// kernel: forward.1
$region0: #{forward.1}
  #allocation0 [shape = 'u32[]', space=smem, size = 0x4, offset = 0x4, fixed_abs, tag = 'smem constant byte address 0x4 - core index']
  #allocation1 [shape = 'u32[144,128]{1,0:T(1,128)}', space=vmem, size = 0x12000, scoped, tag = 'internal scratch']
  %s0 = inlined_call_operand.smem [shape: u32[31], index: -1, kind: input, shape index: {}]
  %s1 = sld [smem:[%s0]]
  %s2 = scalar_lea.smem %s0, 1
  %s3 = sld [smem:[%s2]]
  %s4 = scalar_lea.smem %s0, 2
  %s5 = sld [smem:[%s4]]
  %s6 = scalar_lea.smem %s0, 3
  %s7 = sld [smem:[%s6]]
  %s8 = scalar_lea.smem %s0, 4
  %s9 = sld [smem:[%s8]]
  %s10 = scalar_lea.smem %s0, 5
  %s11 = sld [smem:[%s10]]
  %s12 = scalar_lea.smem %s0, 6
  %s13 = sld [smem:[%s12]]
  %s14 = scalar_lea.smem %s0, 7
  %s15 = sld [smem:[%s14]]
  %s16 = scalar_lea.smem %s0, 8
  %s17 = sld [smem:[%s16]]
  %s18 = scalar_lea.smem %s0, 9
  %s19 = sld [smem:[%s18]]
  %s20 = scalar_lea.smem %s0, 10
  %s21 = sld [smem:[%s20]]
  %s22 = scalar_lea.smem %s0, 11
  %s23 = sld [smem:[%s22]]
  %s24 = scalar_lea.smem %s0, 12
  %s25 = sld [smem:[%s24]]
  %s26 = scalar_lea.smem %s0, 13
  %s27 = sld [smem:[%s26]]
  %s28 = scalar_lea.smem %s0, 14
  %s29 = sld [smem:[%s28]]
  %s30 = scalar_lea.smem %s0, 15
  %s31 = sld [smem:[%s30]]
  %s32 = scalar_lea.smem %s0, 16
  %s33 = sld [smem:[%s32]]
  %s34 = scalar_lea.smem %s0, 17
  %s35 = sld [smem:[%s34]]
  %s36 = scalar_lea.smem %s0, 18
  %s37 = sld [smem:[%s36]]
  %s38 = scalar_lea.smem %s0, 19
  %s39 = sld [smem:[%s38]]
  %s40 = scalar_lea.smem %s0, 20
  %s41 = sld [smem:[%s40]]
  %s42 = scalar_lea.smem %s0, 21
  %s43 = sld [smem:[%s42]]
  %s44 = scalar_lea.smem %s0, 22
  %s45 = sld [smem:[%s44]]
  %s46 = scalar_lea.smem %s0, 23
  %s47 = sld [smem:[%s46]]
  %s48 = scalar_lea.smem %s0, 24
  %s49 = sld [smem:[%s48]]
  %s50 = scalar_lea.smem %s0, 25
  %s51 = sld [smem:[%s50]]
  %s52 = scalar_lea.smem %s0, 26
  %s53 = sld [smem:[%s52]]
  %s54 = scalar_lea.smem %s0, 27
  %s55 = sld [smem:[%s54]]
  %s56 = scalar_lea.smem %s0, 28
  %s57 = sld [smem:[%s56]]
  %s58 = scalar_lea.smem %s0, 29
  %s59 = sld [smem:[%s58]]
  %s60 = scalar_lea.smem %s0, 30
  %s61 = sld [smem:[%s60]]
  %s62 = sld [smem:[#allocation0]]
  $region130: #{forward.1} parent=0
    _
  %s64 = ssub.s32 1, %s62
  %s65 = scalar_select 0, %s64, %s62
  $region1: #{forward.1} parent=0
    #allocation2 [shape = 'u8[1024]{0}', space=vmem, size = 0x400, scoped, tag = 'output window, operand 0, single buffered']
    #allocation3 [shape = 's32[1]{0}', space=sflag, size = 0x4, scoped, tag = 'scoped memory for forward.1']
    %66 = vsyncpa [#allocation3], 0
    // Predicated region
    $region2: #{forward.1} parent=1 // pred_check
      _
    $region3: #{forward.1} parent=1 // pred_check_branch
      %68 = sbr.rel (0) target = $region5
    $region4: #{forward.1} parent=1 // pred_region
      _
    $region5: #{forward.1} parent=1 // pred_fallthru
      _
    // Predicated region
    $region6: #{forward.1} parent=1 // pred_check
      _
    $region7: #{forward.1} parent=1 // pred_check_branch
      %70 = sbr.rel (0) target = $region9
    $region8: #{forward.1} parent=1 // pred_region
      _
    $region9: #{forward.1} parent=1 // pred_fallthru
      _
    // Predicated region
    $region10: #{forward.1} parent=1 // pred_check
      _
    $region11: #{forward.1} parent=1 // pred_check_branch
      %72 = sbr.rel (0) target = $region13
    $region12: #{forward.1} parent=1 // pred_region
      _
    $region13: #{forward.1} parent=1 // pred_fallthru
      _
    // Predicated region
    $region14: #{forward.1} parent=1 // pred_check
      _
    $region15: #{forward.1} parent=1 // pred_check_branch
      %74 = sbr.rel (0) target = $region17
    $region16: #{forward.1} parent=1 // pred_region
      _
    $region17: #{forward.1} parent=1 // pred_fallthru
      _
    // Predicated region
    $region18: #{forward.1} parent=1 // pred_check
      _
    $region19: #{forward.1} parent=1 // pred_check_branch
      %76 = sbr.rel (0) target = $region21
    $region20: #{forward.1} parent=1 // pred_region
      _
    $region21: #{forward.1} parent=1 // pred_fallthru
      _
    // Predicated region
    $region22: #{forward.1} parent=1 // pred_check
      _
    $region23: #{forward.1} parent=1 // pred_check_branch
      %78 = sbr.rel (0) target = $region25
    $region24: #{forward.1} parent=1 // pred_region
      _
    $region25: #{forward.1} parent=1 // pred_fallthru
      _
    // Predicated region
    $region26: #{forward.1} parent=1 // pred_check
      _
    $region27: #{forward.1} parent=1 // pred_check_branch
      %80 = sbr.rel (0) target = $region29
    $region28: #{forward.1} parent=1 // pred_region
      _
    $region29: #{forward.1} parent=1 // pred_fallthru
      _
    // Predicated region
    $region30: #{forward.1} parent=1 // pred_check
      _
    $region31: #{forward.1} parent=1 // pred_check_branch
      %82 = sbr.rel (0) target = $region33
    $region32: #{forward.1} parent=1 // pred_region
      _
    $region33: #{forward.1} parent=1 // pred_fallthru
      _
    // Predicated region
    $region34: #{forward.1} parent=1 // pred_check
      _
    $region35: #{forward.1} parent=1 // pred_check_branch
      %84 = sbr.rel (0) target = $region37
    $region36: #{forward.1} parent=1 // pred_region
      _
    $region37: #{forward.1} parent=1 // pred_fallthru
      _
    // Predicated region
    $region38: #{forward.1} parent=1 // pred_check
      _
    $region39: #{forward.1} parent=1 // pred_check_branch
      %86 = sbr.rel (0) target = $region41
    $region40: #{forward.1} parent=1 // pred_region
      _
    $region41: #{forward.1} parent=1 // pred_fallthru
      _
    // Predicated region
    $region42: #{forward.1} parent=1 // pred_check
      _
    $region43: #{forward.1} parent=1 // pred_check_branch
      %88 = sbr.rel (0) target = $region45
    $region44: #{forward.1} parent=1 // pred_region
      _
    $region45: #{forward.1} parent=1 // pred_fallthru
      _
    // Predicated region
    $region46: #{forward.1} parent=1 // pred_check
      _
    $region47: #{forward.1} parent=1 // pred_check_branch
      %90 = sbr.rel (0) target = $region49
    $region48: #{forward.1} parent=1 // pred_region
      _
    $region49: #{forward.1} parent=1 // pred_fallthru
      _
    // Predicated region
    $region50: #{forward.1} parent=1 // pred_check
      _
    $region51: #{forward.1} parent=1 // pred_check_branch
      %92 = sbr.rel (0) target = $region53
    $region52: #{forward.1} parent=1 // pred_region
      _
    $region53: #{forward.1} parent=1 // pred_fallthru
      _
    // Predicated region
    $region54: #{forward.1} parent=1 // pred_check
      _
    $region55: #{forward.1} parent=1 // pred_check_branch
      %94 = sbr.rel (0) target = $region57
    $region56: #{forward.1} parent=1 // pred_region
      _
    $region57: #{forward.1} parent=1 // pred_fallthru
      _
    // Predicated region
    $region58: #{forward.1} parent=1 // pred_check
      _
    $region59: #{forward.1} parent=1 // pred_check_branch
      %96 = sbr.rel (0) target = $region61
    $region60: #{forward.1} parent=1 // pred_region
      _
    $region61: #{forward.1} parent=1 // pred_fallthru
      _
    // Predicated region
    $region62: #{forward.1} parent=1 // pred_check
      _
    $region63: #{forward.1} parent=1 // pred_check_branch
      %98 = sbr.rel (0) target = $region65
    $region64: #{forward.1} parent=1 // pred_region
      _
    $region65: #{forward.1} parent=1 // pred_fallthru
      _
    // Predicated region
    $region66: #{forward.1} parent=1 // pred_check
      _
    $region67: #{forward.1} parent=1 // pred_check_branch
      %100 = sbr.rel (0) target = $region69
    $region68: #{forward.1} parent=1 // pred_region
      _
    $region69: #{forward.1} parent=1 // pred_fallthru
      _
    // Predicated region
    $region70: #{forward.1} parent=1 // pred_check
      _
    $region71: #{forward.1} parent=1 // pred_check_branch
      %102 = sbr.rel (0) target = $region73
    $region72: #{forward.1} parent=1 // pred_region
      _
    $region73: #{forward.1} parent=1 // pred_fallthru
      _
    // Predicated region
    $region74: #{forward.1} parent=1 // pred_check
      _
    $region75: #{forward.1} parent=1 // pred_check_branch
      %104 = sbr.rel (0) target = $region77
    $region76: #{forward.1} parent=1 // pred_region
      _
    $region77: #{forward.1} parent=1 // pred_fallthru
      _
    // Predicated region
    $region78: #{forward.1} parent=1 // pred_check
      _
    $region79: #{forward.1} parent=1 // pred_check_branch
      %106 = sbr.rel (0) target = $region81
    $region80: #{forward.1} parent=1 // pred_region
      _
    $region81: #{forward.1} parent=1 // pred_fallthru
      _
    // Predicated region
    $region82: #{forward.1} parent=1 // pred_check
      _
    $region83: #{forward.1} parent=1 // pred_check_branch
      %108 = sbr.rel (0) target = $region85
    $region84: #{forward.1} parent=1 // pred_region
      _
    $region85: #{forward.1} parent=1 // pred_fallthru
      _
    // Predicated region
    $region86: #{forward.1} parent=1 // pred_check
      _
    $region87: #{forward.1} parent=1 // pred_check_branch
      %110 = sbr.rel (0) target = $region89
    $region88: #{forward.1} parent=1 // pred_region
      _
    $region89: #{forward.1} parent=1 // pred_fallthru
      _
    // Predicated region
    $region90: #{forward.1} parent=1 // pred_check
      _
    $region91: #{forward.1} parent=1 // pred_check_branch
      %112 = sbr.rel (0) target = $region93
    $region92: #{forward.1} parent=1 // pred_region
      _
    $region93: #{forward.1} parent=1 // pred_fallthru
      _
    // Predicated region
    $region94: #{forward.1} parent=1 // pred_check
      _
    $region95: #{forward.1} parent=1 // pred_check_branch
      %114 = sbr.rel (0) target = $region97
    $region96: #{forward.1} parent=1 // pred_region
      _
    $region97: #{forward.1} parent=1 // pred_fallthru
      _
    // Predicated region
    $region98: #{forward.1} parent=1 // pred_check
      _
    $region99: #{forward.1} parent=1 // pred_check_branch
      %116 = sbr.rel (0) target = $region101
    $region100: #{forward.1} parent=1 // pred_region
      _
    $region101: #{forward.1} parent=1 // pred_fallthru
      _
    // Predicated region
    $region102: #{forward.1} parent=1 // pred_check
      _
    $region103: #{forward.1} parent=1 // pred_check_branch
      %118 = sbr.rel (0) target = $region105
    $region104: #{forward.1} parent=1 // pred_region
      _
    $region105: #{forward.1} parent=1 // pred_fallthru
      _
    // Predicated region
    $region106: #{forward.1} parent=1 // pred_check
      _
    $region107: #{forward.1} parent=1 // pred_check_branch
      %120 = sbr.rel (0) target = $region109
    $region108: #{forward.1} parent=1 // pred_region
      _
    $region109: #{forward.1} parent=1 // pred_fallthru
      _
    // Predicated region
    $region110: #{forward.1} parent=1 // pred_check
      _
    $region111: #{forward.1} parent=1 // pred_check_branch
      %122 = sbr.rel (0) target = $region113
    $region112: #{forward.1} parent=1 // pred_region
      _
    $region113: #{forward.1} parent=1 // pred_fallthru
      _
    // Predicated region
    $region114: #{forward.1} parent=1 // pred_check
      _
    $region115: #{forward.1} parent=1 // pred_check_branch
      %124 = sbr.rel (0) target = $region117
    $region116: #{forward.1} parent=1 // pred_region
      _
    $region117: #{forward.1} parent=1 // pred_fallthru
      _
    // Predicated region
    $region118: #{forward.1} parent=1 // pred_check
      _
    $region119: #{forward.1} parent=1 // pred_check_branch
      %126 = sbr.rel (0) target = $region121
    $region120: #{forward.1} parent=1 // pred_region
      _
    $region121: #{forward.1} parent=1 // pred_fallthru
      _
    %v127 = vld [vmem:[%s1] sm:$0xff]
    %v128 = vld [vmem:[%s1 + $0x8] sm:$0xff]
    %v129 = vld [vmem:[%s3] sm:$0x1]
    %v130 = vld [vmem:[%s3 + $0x1] sm:$0x1]
    %v131 = vld [vmem:[%s7] sm:$0xff]
    %v132 = vld [vmem:[%s7 + $0x8] sm:$0xff]
    %v133 = vld [vmem:[%s7 + $0x10] sm:$0xff]
    %v134 = vld [vmem:[%s7 + $0x18] sm:$0xff]
    %v135 = vld [vmem:[%s9] sm:$0x1]
    %v137 = vlaneseq
    %v138 = vshrl.u32 %v137, 7
    %v139 = vsub.s32 0, %v138
    %v140 = vrot.slane %v135, %v139
    %vm142 = vcmask 261120
    %v144 = vsel %vm142, %v127, 0
    %v147 = vsel %vm142, %v128, 0
    %149 = vmatprep.subr.mxu0 0.0
    %150 = vmatpush1.msra.mxu0 %v131
    %151 = vmatprep.subr.mxu0 0.0
    %152 = vmatpush1.msra.mxu0 %v132
    %153 = vmatprep.subr.mxu0 0.0
    %154 = vmatpush1.msra.mxu0 %v133
    %155 = vmatprep.subr.mxu0 0.0
    %156 = vmatpush1.msra.mxu0 %v134
    %157 = vmatprep.subr.mxu0 0.0
    %158 = vmatpush1.msra.mxu0 0.0
    %159 = vmatprep.subr.mxu0 0.0
    %160 = vmatpush1.msra.mxu0 0.0
    %161 = vmatprep.subr.mxu0 0.0
    %162 = vmatpush1.msra.mxu0 0.0
    %163 = vmatprep.subr.mxu0 0.0
    %164 = vmatpush1.msra.mxu0 0.0
    %165 = vmatprep.subr.mxu0 0.0
    %166 = vmatpush1.msra.mxu0 0.0
    %167 = vmatprep.subr.mxu0 0.0
    %168 = vmatpush1.msra.mxu0 0.0
    %169 = vmatprep.subr.mxu0 0.0
    %170 = vmatpush1.msra.mxu0 0.0
    %171 = vmatprep.subr.mxu0 0.0
    %172 = vmatpush1.msra.mxu0 0.0
    %173 = vmatprep.subr.mxu0 0.0
    %174 = vmatpush1.msra.mxu0 0.0
    %175 = vmatprep.subr.mxu0 0.0
    %176 = vmatpush1.msra.mxu0 0.0
    %177 = vmatprep.subr.mxu0 0.0
    %178 = vmatpush1.msra.mxu0 0.0
    %179 = vmatprep.subr.mxu0 0.0
    %180 = vmatpush1.msra.mxu0 0.0
    %181 = vmatprep.subr.mxu0 0.0
    %182 = vmatpush1.msra.mxu0 0.0
    %183 = vmatprep.subr.mxu0 0.0
    %184 = vmatpush1.msra.mxu0 0.0
    %185 = vmatprep.subr.mxu0 0.0
    %186 = vmatpush1.msra.mxu0 0.0
    %187 = vmatprep.subr.mxu0 0.0
    %188 = vmatpush1.msra.mxu0 0.0
    %189 = vmatprep.subr.mxu0 0.0
    %190 = vmatpush1.msra.mxu0 0.0
    %191 = vmatprep.subr.mxu0 0.0
    %192 = vmatpush1.msra.mxu0 0.0
    %193 = vmatprep.subr.mxu0 0.0
    %194 = vmatpush1.msra.mxu0 0.0
    %195 = vmatprep.subr.mxu0 0.0
    %196 = vmatpush1.msra.mxu0 0.0
    %197 = vmatprep.subr.mxu0 0.0
    %198 = vmatpush1.msra.mxu0 0.0
    %199 = vmatprep.subr.mxu0 0.0
    %200 = vmatpush1.msra.mxu0 0.0
    %201 = vmatprep.subr.mxu0 0.0
    %202 = vmatpush1.msra.mxu0 0.0
    %203 = vmatprep.subr.mxu0 0.0
    %204 = vmatpush1.msra.mxu0 0.0
    %205 = vmatprep.subr.mxu0 0.0
    %206 = vmatpush1.msra.mxu0 0.0
    %207 = vmatprep.subr.mxu0 0.0
    %208 = vmatpush1.msra.mxu0 0.0
    %209 = vmatprep.subr.mxu0 0.0
    %210 = vmatpush1.msra.mxu0 0.0
    %211 = vmatprep.subr.mxu0 0.0
    %212 = vmatpush1.msra.mxu0 0.0
    %213 = vmatprep.mubr.f32.mxu0 0.0
    %214 = vmatmul.mubr.f32.gmra.mrb[0].mxu0 %v144
    %v215 = vpop.f32.mrb[0].mxu0
    %v216 = vadd.f32 %v140, %v215
    %v217 = vpop.f32.mrb[0].mxu0
    %218 = vmatprep.mubr.f32.mxu0 0.0
    %219 = vmatmul.mubr.f32.gmra.mrb[0].mxu0 %v147
    %v220 = vpop.f32.mrb[0].mxu0
    %v221 = vadd.f32 %v140, %v220
    %v222 = vpop.f32.mrb[0].mxu0
    %223 = vdwg.mxu0
    %v226 = vlaneseq
    %v227 = vshrl.u32 %v226, 7
    %v228 = vsub.s32 0, %v227
    %v229 = vrot.slane %v129, %v228
    %v230 = vlaneseq
    %v231 = vshrl.u32 %v230, 7
    %v232 = vsub.s32 0, %v231
    %v233 = vrot.slane %v130, %v232
    %237 = vrot.lane.b32.xlu0 %v216, 96
    %v238 = vpop.permute.xlu0 %237
    %vm239 = vcmask 64512
    %v240 = vsel %vm239, %v216, 0
    %v242 = vsel %vm239, %v238, 0
    %244 = vmatprep.subr.mxu0 0.0
    %245 = vmatpush1.xpose.msra.mxu0 %v242
    %246 = vmatprep.subr.mxu0 0.0
    %247 = vmatpush1.xpose.msra.mxu0 0.0
    %248 = vmatprep.subr.mxu0 0.0
    %249 = vmatpush1.xpose.msra.mxu0 0.0
    %250 = vmatprep.subr.mxu0 0.0
    %251 = vmatpush1.xpose.msra.mxu0 0.0
    %252 = vmatprep.subr.mxu0 0.0
    %253 = vmatpush1.xpose.msra.mxu0 0.0
    %254 = vmatprep.subr.mxu0 0.0
    %255 = vmatpush1.xpose.msra.mxu0 0.0
    %256 = vmatprep.subr.mxu0 0.0
    %257 = vmatpush1.xpose.msra.mxu0 0.0
    %258 = vmatprep.subr.mxu0 0.0
    %259 = vmatpush1.xpose.msra.mxu0 0.0
    %260 = vmatprep.subr.mxu0 0.0
    %261 = vmatpush1.xpose.msra.mxu0 0.0
    %262 = vmatprep.subr.mxu0 0.0
    %263 = vmatpush1.xpose.msra.mxu0 0.0
    %264 = vmatprep.subr.mxu0 0.0
    %265 = vmatpush1.xpose.msra.mxu0 0.0
    %266 = vmatprep.subr.mxu0 0.0
    %267 = vmatpush1.xpose.msra.mxu0 0.0
    %268 = vmatprep.subr.mxu0 0.0
    %269 = vmatpush1.xpose.msra.mxu0 0.0
    %270 = vmatprep.subr.mxu0 0.0
    %271 = vmatpush1.xpose.msra.mxu0 0.0
    %272 = vmatprep.subr.mxu0 0.0
    %273 = vmatpush1.xpose.msra.mxu0 0.0
    %274 = vmatprep.subr.mxu0 0.0
    %275 = vmatpush1.xpose.msra.mxu0 0.0
    %276 = vmatprep.subr.mxu0 0.0
    %277 = vmatpush1.xpose.msra.mxu0 0.0
    %278 = vmatprep.subr.mxu0 0.0
    %279 = vmatpush1.xpose.msra.mxu0 0.0
    %280 = vmatprep.subr.mxu0 0.0
    %281 = vmatpush1.xpose.msra.mxu0 0.0
    %282 = vmatprep.subr.mxu0 0.0
    %283 = vmatpush1.xpose.msra.mxu0 0.0
    %284 = vmatprep.subr.mxu0 0.0
    %285 = vmatpush1.xpose.msra.mxu0 0.0
    %286 = vmatprep.subr.mxu0 0.0
    %287 = vmatpush1.xpose.msra.mxu0 0.0
    %288 = vmatprep.subr.mxu0 0.0
    %289 = vmatpush1.xpose.msra.mxu0 0.0
    %290 = vmatprep.subr.mxu0 0.0
    %291 = vmatpush1.xpose.msra.mxu0 0.0
    %292 = vmatprep.subr.mxu0 0.0
    %293 = vmatpush1.xpose.msra.mxu0 0.0
    %294 = vmatprep.subr.mxu0 0.0
    %295 = vmatpush1.xpose.msra.mxu0 0.0
    %296 = vmatprep.subr.mxu0 0.0
    %297 = vmatpush1.xpose.msra.mxu0 0.0
    %298 = vmatprep.subr.mxu0 0.0
    %299 = vmatpush1.xpose.msra.mxu0 0.0
    %300 = vmatprep.subr.mxu0 0.0
    %301 = vmatpush1.xpose.msra.mxu0 0.0
    %302 = vmatprep.subr.mxu0 0.0
    %303 = vmatpush1.xpose.msra.mxu0 0.0
    %304 = vmatprep.subr.mxu0 0.0
    %305 = vmatpush1.xpose.msra.mxu0 0.0
    %306 = vmatprep.subr.mxu0 0.0
    %307 = vmatpush1.xpose.msra.mxu0 0.0
    %308 = vmatprep.mubr.f32.mxu0 0.0
    %309 = vmatmul.mubr.f32.gmra.mrb[0].mxu0 %v240
    %v310 = vpop.f32.mrb[0].mxu0
    %v311 = vadd.f32 %v229, %v310
    %v312 = vpop.f32.mrb[0].mxu0
    %313 = vdwg.mxu0
    %315 = vrot.lane.b32.xlu0 %v221, 96
    %v316 = vpop.permute.xlu0 %315
    %v317 = vsel %vm239, %v221, 0
    %v319 = vsel %vm239, %v316, 0
    %321 = vmatprep.subr.mxu0 0.0
    %322 = vmatpush1.xpose.msra.mxu0 %v319
    %323 = vmatprep.subr.mxu0 0.0
    %324 = vmatpush1.xpose.msra.mxu0 0.0
    %325 = vmatprep.subr.mxu0 0.0
    %326 = vmatpush1.xpose.msra.mxu0 0.0
    %327 = vmatprep.subr.mxu0 0.0
    %328 = vmatpush1.xpose.msra.mxu0 0.0
    %329 = vmatprep.subr.mxu0 0.0
    %330 = vmatpush1.xpose.msra.mxu0 0.0
    %331 = vmatprep.subr.mxu0 0.0
    %332 = vmatpush1.xpose.msra.mxu0 0.0
    %333 = vmatprep.subr.mxu0 0.0
    %334 = vmatpush1.xpose.msra.mxu0 0.0
    %335 = vmatprep.subr.mxu0 0.0
    %336 = vmatpush1.xpose.msra.mxu0 0.0
    %337 = vmatprep.subr.mxu0 0.0
    %338 = vmatpush1.xpose.msra.mxu0 0.0
    %339 = vmatprep.subr.mxu0 0.0
    %340 = vmatpush1.xpose.msra.mxu0 0.0
    %341 = vmatprep.subr.mxu0 0.0
    %342 = vmatpush1.xpose.msra.mxu0 0.0
    %343 = vmatprep.subr.mxu0 0.0
    %344 = vmatpush1.xpose.msra.mxu0 0.0
    %345 = vmatprep.subr.mxu0 0.0
    %346 = vmatpush1.xpose.msra.mxu0 0.0
    %347 = vmatprep.subr.mxu0 0.0
    %348 = vmatpush1.xpose.msra.mxu0 0.0
    %349 = vmatprep.subr.mxu0 0.0
    %350 = vmatpush1.xpose.msra.mxu0 0.0
    %351 = vmatprep.subr.mxu0 0.0
    %352 = vmatpush1.xpose.msra.mxu0 0.0
    %353 = vmatprep.subr.mxu0 0.0
    %354 = vmatpush1.xpose.msra.mxu0 0.0
    %355 = vmatprep.subr.mxu0 0.0
    %356 = vmatpush1.xpose.msra.mxu0 0.0
    %357 = vmatprep.subr.mxu0 0.0
    %358 = vmatpush1.xpose.msra.mxu0 0.0
    %359 = vmatprep.subr.mxu0 0.0
    %360 = vmatpush1.xpose.msra.mxu0 0.0
    %361 = vmatprep.subr.mxu0 0.0
    %362 = vmatpush1.xpose.msra.mxu0 0.0
    %363 = vmatprep.subr.mxu0 0.0
    %364 = vmatpush1.xpose.msra.mxu0 0.0
    %365 = vmatprep.subr.mxu0 0.0
    %366 = vmatpush1.xpose.msra.mxu0 0.0
    %367 = vmatprep.subr.mxu0 0.0
    %368 = vmatpush1.xpose.msra.mxu0 0.0
    %369 = vmatprep.subr.mxu0 0.0
    %370 = vmatpush1.xpose.msra.mxu0 0.0
    %371 = vmatprep.subr.mxu0 0.0
    %372 = vmatpush1.xpose.msra.mxu0 0.0
    %373 = vmatprep.subr.mxu0 0.0
    %374 = vmatpush1.xpose.msra.mxu0 0.0
    %375 = vmatprep.subr.mxu0 0.0
    %376 = vmatpush1.xpose.msra.mxu0 0.0
    %377 = vmatprep.subr.mxu0 0.0
    %378 = vmatpush1.xpose.msra.mxu0 0.0
    %379 = vmatprep.subr.mxu0 0.0
    %380 = vmatpush1.xpose.msra.mxu0 0.0
    %381 = vmatprep.subr.mxu0 0.0
    %382 = vmatpush1.xpose.msra.mxu0 0.0
    %383 = vmatprep.subr.mxu0 0.0
    %384 = vmatpush1.xpose.msra.mxu0 0.0
    %385 = vmatprep.mubr.f32.mxu0 0.0
    %386 = vmatmul.mubr.f32.gmra.mrb[0].mxu0 %v317
    %v387 = vpop.f32.mrb[0].mxu0
    %v388 = vadd.f32 %v233, %v387
    %v389 = vpop.f32.mrb[0].mxu0
    %390 = vdwg.mxu0
    %v391 = vsel %vm239, %v311, -inf
    %392 = vmax.xlane.f32.xlu0 %v391
    %v393 = vpop.xlane.xlu0 %392
    %v394 = vsel %vm239, %v388, -inf
    %395 = vmax.xlane.f32.xlu0 %v394
    %v396 = vpop.xlane.xlu0 %395
    %v397 = vsub.f32 %v311, %v393
    %v398 = vsub.f32 %v388, %v396
    %v399 = vmul.f32 %v397, 1.442695
    %v400 = vpow.pop %v399
    %v401 = vmul.f32 %v398, 1.442695
    %v402 = vpow.pop %v401
    %v403 = vsel %vm239, %v400, 0.0
    %404 = vadd.xlane.f32.xlu0 %v403
    %v405 = vpop.xlane.xlu0 %404
    %v406 = vsel %vm239, %v402, 0.0
    %407 = vadd.xlane.f32.xlu0 %v406
    %v408 = vpop.xlane.xlu0 %407
    %v409 = vrcp.pop %v405
    %v410 = vrcp.pop %v408
    %v411 = vmul.f32 %v400, %v409
    %v412 = vmul.f32 %v402, %v410
    %413 = vrot.lane.b32.xlu0 %v216, 64
    %v414 = vpop.permute.xlu0 %413
    %v417 = vsel %vm239, %v411, 0
    %419 = vmatprep.subr.mxu0 0.0
    %420 = vmatpush1.msra.mxu0 %v414
    %421 = vmatprep.subr.mxu0 0.0
    %422 = vmatpush1.msra.mxu0 0.0
    %423 = vmatprep.subr.mxu0 0.0
    %424 = vmatpush1.msra.mxu0 0.0
    %425 = vmatprep.subr.mxu0 0.0
    %426 = vmatpush1.msra.mxu0 0.0
    %427 = vmatprep.subr.mxu0 0.0
    %428 = vmatpush1.msra.mxu0 0.0
    %429 = vmatprep.subr.mxu0 0.0
    %430 = vmatpush1.msra.mxu0 0.0
    %431 = vmatprep.subr.mxu0 0.0
    %432 = vmatpush1.msra.mxu0 0.0
    %433 = vmatprep.subr.mxu0 0.0
    %434 = vmatpush1.msra.mxu0 0.0
    %435 = vmatprep.subr.mxu0 0.0
    %436 = vmatpush1.msra.mxu0 0.0
    %437 = vmatprep.subr.mxu0 0.0
    %438 = vmatpush1.msra.mxu0 0.0
    %439 = vmatprep.subr.mxu0 0.0
    %440 = vmatpush1.msra.mxu0 0.0
    %441 = vmatprep.subr.mxu0 0.0
    %442 = vmatpush1.msra.mxu0 0.0
    %443 = vmatprep.subr.mxu0 0.0
    %444 = vmatpush1.msra.mxu0 0.0
    %445 = vmatprep.subr.mxu0 0.0
    %446 = vmatpush1.msra.mxu0 0.0
    %447 = vmatprep.subr.mxu0 0.0
    %448 = vmatpush1.msra.mxu0 0.0
    %449 = vmatprep.subr.mxu0 0.0
    %450 = vmatpush1.msra.mxu0 0.0
    %451 = vmatprep.subr.mxu0 0.0
    %452 = vmatpush1.msra.mxu0 0.0
    %453 = vmatprep.subr.mxu0 0.0
    %454 = vmatpush1.msra.mxu0 0.0
    %455 = vmatprep.subr.mxu0 0.0
    %456 = vmatpush1.msra.mxu0 0.0
    %457 = vmatprep.subr.mxu0 0.0
    %458 = vmatpush1.msra.mxu0 0.0
    %459 = vmatprep.subr.mxu0 0.0
    %460 = vmatpush1.msra.mxu0 0.0
    %461 = vmatprep.subr.mxu0 0.0
    %462 = vmatpush1.msra.mxu0 0.0
    %463 = vmatprep.subr.mxu0 0.0
    %464 = vmatpush1.msra.mxu0 0.0
    %465 = vmatprep.subr.mxu0 0.0
    %466 = vmatpush1.msra.mxu0 0.0
    %467 = vmatprep.subr.mxu0 0.0
    %468 = vmatpush1.msra.mxu0 0.0
    %469 = vmatprep.subr.mxu0 0.0
    %470 = vmatpush1.msra.mxu0 0.0
    %471 = vmatprep.subr.mxu0 0.0
    %472 = vmatpush1.msra.mxu0 0.0
    %473 = vmatprep.subr.mxu0 0.0
    %474 = vmatpush1.msra.mxu0 0.0
    %475 = vmatprep.subr.mxu0 0.0
    %476 = vmatpush1.msra.mxu0 0.0
    %477 = vmatprep.subr.mxu0 0.0
    %478 = vmatpush1.msra.mxu0 0.0
    %479 = vmatprep.subr.mxu0 0.0
    %480 = vmatpush1.msra.mxu0 0.0
    %481 = vmatprep.subr.mxu0 0.0
    %482 = vmatpush1.msra.mxu0 0.0
    %483 = vmatprep.mubr.f32.mxu0 0.0
    %484 = vmatmul.mubr.f32.gmra.mrb[0].mxu0 %v417
    %v485 = vpop.f32.mrb[0].mxu0
    %v486 = vadd.f32 0.0, %v485
    %v487 = vpop.f32.mrb[0].mxu0
    %488 = vdwg.mxu0
    %489 = vrot.lane.b32.xlu0 %v221, 64
    %v490 = vpop.permute.xlu0 %489
    %v493 = vsel %vm239, %v412, 0
    %495 = vmatprep.subr.mxu0 0.0
    %496 = vmatpush1.msra.mxu0 %v490
    %497 = vmatprep.subr.mxu0 0.0
    %498 = vmatpush1.msra.mxu0 0.0
    %499 = vmatprep.subr.mxu0 0.0
    %500 = vmatpush1.msra.mxu0 0.0
    %501 = vmatprep.subr.mxu0 0.0
    %502 = vmatpush1.msra.mxu0 0.0
    %503 = vmatprep.subr.mxu0 0.0
    %504 = vmatpush1.msra.mxu0 0.0
    %505 = vmatprep.subr.mxu0 0.0
    %506 = vmatpush1.msra.mxu0 0.0
    %507 = vmatprep.subr.mxu0 0.0
    %508 = vmatpush1.msra.mxu0 0.0
    %509 = vmatprep.subr.mxu0 0.0
    %510 = vmatpush1.msra.mxu0 0.0
    %511 = vmatprep.subr.mxu0 0.0
    %512 = vmatpush1.msra.mxu0 0.0
    %513 = vmatprep.subr.mxu0 0.0
    %514 = vmatpush1.msra.mxu0 0.0
    %515 = vmatprep.subr.mxu0 0.0
    %516 = vmatpush1.msra.mxu0 0.0
    %517 = vmatprep.subr.mxu0 0.0
    %518 = vmatpush1.msra.mxu0 0.0
    %519 = vmatprep.subr.mxu0 0.0
    %520 = vmatpush1.msra.mxu0 0.0
    %521 = vmatprep.subr.mxu0 0.0
    %522 = vmatpush1.msra.mxu0 0.0
    %523 = vmatprep.subr.mxu0 0.0
    %524 = vmatpush1.msra.mxu0 0.0
    %525 = vmatprep.subr.mxu0 0.0
    %526 = vmatpush1.msra.mxu0 0.0
    %527 = vmatprep.subr.mxu0 0.0
    %528 = vmatpush1.msra.mxu0 0.0
    %529 = vmatprep.subr.mxu0 0.0
    %530 = vmatpush1.msra.mxu0 0.0
    %531 = vmatprep.subr.mxu0 0.0
    %532 = vmatpush1.msra.mxu0 0.0
    %533 = vmatprep.subr.mxu0 0.0
    %534 = vmatpush1.msra.mxu0 0.0
    %535 = vmatprep.subr.mxu0 0.0
    %536 = vmatpush1.msra.mxu0 0.0
    %537 = vmatprep.subr.mxu0 0.0
    %538 = vmatpush1.msra.mxu0 0.0
    %539 = vmatprep.subr.mxu0 0.0
    %540 = vmatpush1.msra.mxu0 0.0
    %541 = vmatprep.subr.mxu0 0.0
    %542 = vmatpush1.msra.mxu0 0.0
    %543 = vmatprep.subr.mxu0 0.0
    %544 = vmatpush1.msra.mxu0 0.0
    %545 = vmatprep.subr.mxu0 0.0
    %546 = vmatpush1.msra.mxu0 0.0
    %547 = vmatprep.subr.mxu0 0.0
    %548 = vmatpush1.msra.mxu0 0.0
    %549 = vmatprep.subr.mxu0 0.0
    %550 = vmatpush1.msra.mxu0 0.0
    %551 = vmatprep.subr.mxu0 0.0
    %552 = vmatpush1.msra.mxu0 0.0
    %553 = vmatprep.subr.mxu0 0.0
    %554 = vmatpush1.msra.mxu0 0.0
    %555 = vmatprep.subr.mxu0 0.0
    %556 = vmatpush1.msra.mxu0 0.0
    %557 = vmatprep.subr.mxu0 0.0
    %558 = vmatpush1.msra.mxu0 0.0
    %559 = vmatprep.mubr.f32.mxu0 0.0
    %560 = vmatmul.mubr.f32.gmra.mrb[0].mxu0 %v493
    %v561 = vpop.f32.mrb[0].mxu0
    %v562 = vadd.f32 0.0, %v561
    %v563 = vpop.f32.mrb[0].mxu0
    %564 = vdwg.mxu0
    %565 = vrot.lane.b32.xlu0 %v216, 120
    %v566 = vpop.permute.xlu0 %565
    %567 = vrot.lane.b32.xlu0 %v216, 88
    %v568 = vpop.permute.xlu0 %567
    %v569 = vsel %vm239, %v566, 0
    %v571 = vsel %vm239, %v568, 0
    %573 = vmatprep.subr.mxu0 0.0
    %574 = vmatpush1.xpose.msra.mxu0 %v571
    %575 = vmatprep.subr.mxu0 0.0
    %576 = vmatpush1.xpose.msra.mxu0 0.0
    %577 = vmatprep.subr.mxu0 0.0
    %578 = vmatpush1.xpose.msra.mxu0 0.0
    %579 = vmatprep.subr.mxu0 0.0
    %580 = vmatpush1.xpose.msra.mxu0 0.0
    %581 = vmatprep.subr.mxu0 0.0
    %582 = vmatpush1.xpose.msra.mxu0 0.0
    %583 = vmatprep.subr.mxu0 0.0
    %584 = vmatpush1.xpose.msra.mxu0 0.0
    %585 = vmatprep.subr.mxu0 0.0
    %586 = vmatpush1.xpose.msra.mxu0 0.0
    %587 = vmatprep.subr.mxu0 0.0
    %588 = vmatpush1.xpose.msra.mxu0 0.0
    %589 = vmatprep.subr.mxu0 0.0
    %590 = vmatpush1.xpose.msra.mxu0 0.0
    %591 = vmatprep.subr.mxu0 0.0
    %592 = vmatpush1.xpose.msra.mxu0 0.0
    %593 = vmatprep.subr.mxu0 0.0
    %594 = vmatpush1.xpose.msra.mxu0 0.0
    %595 = vmatprep.subr.mxu0 0.0
    %596 = vmatpush1.xpose.msra.mxu0 0.0
    %597 = vmatprep.subr.mxu0 0.0
    %598 = vmatpush1.xpose.msra.mxu0 0.0
    %599 = vmatprep.subr.mxu0 0.0
    %600 = vmatpush1.xpose.msra.mxu0 0.0
    %601 = vmatprep.subr.mxu0 0.0
    %602 = vmatpush1.xpose.msra.mxu0 0.0
    %603 = vmatprep.subr.mxu0 0.0
    %604 = vmatpush1.xpose.msra.mxu0 0.0
    %605 = vmatprep.subr.mxu0 0.0
    %606 = vmatpush1.xpose.msra.mxu0 0.0
    %607 = vmatprep.subr.mxu0 0.0
    %608 = vmatpush1.xpose.msra.mxu0 0.0
    %609 = vmatprep.subr.mxu0 0.0
    %610 = vmatpush1.xpose.msra.mxu0 0.0
    %611 = vmatprep.subr.mxu0 0.0
    %612 = vmatpush1.xpose.msra.mxu0 0.0
    %613 = vmatprep.subr.mxu0 0.0
    %614 = vmatpush1.xpose.msra.mxu0 0.0
    %615 = vmatprep.subr.mxu0 0.0
    %616 = vmatpush1.xpose.msra.mxu0 0.0
    %617 = vmatprep.subr.mxu0 0.0
    %618 = vmatpush1.xpose.msra.mxu0 0.0
    %619 = vmatprep.subr.mxu0 0.0
    %620 = vmatpush1.xpose.msra.mxu0 0.0
    %621 = vmatprep.subr.mxu0 0.0
    %622 = vmatpush1.xpose.msra.mxu0 0.0
    %623 = vmatprep.subr.mxu0 0.0
    %624 = vmatpush1.xpose.msra.mxu0 0.0
    %625 = vmatprep.subr.mxu0 0.0
    %626 = vmatpush1.xpose.msra.mxu0 0.0
    %627 = vmatprep.subr.mxu0 0.0
    %628 = vmatpush1.xpose.msra.mxu0 0.0
    %629 = vmatprep.subr.mxu0 0.0
    %630 = vmatpush1.xpose.msra.mxu0 0.0
    %631 = vmatprep.subr.mxu0 0.0
    %632 = vmatpush1.xpose.msra.mxu0 0.0
    %633 = vmatprep.subr.mxu0 0.0
    %634 = vmatpush1.xpose.msra.mxu0 0.0
    %635 = vmatprep.subr.mxu0 0.0
    %636 = vmatpush1.xpose.msra.mxu0 0.0
    %637 = vmatprep.mubr.f32.mxu0 0.0
    %638 = vmatmul.mubr.f32.gmra.mrb[0].mxu0 %v569
    %v639 = vpop.f32.mrb[0].mxu0
    %v640 = vadd.f32 %v229, %v639
    %v641 = vpop.f32.mrb[0].mxu0
    %642 = vdwg.mxu0
    %643 = vrot.lane.b32.xlu0 %v221, 120
    %v644 = vpop.permute.xlu0 %643
    %645 = vrot.lane.b32.xlu0 %v221, 88
    %v646 = vpop.permute.xlu0 %645
    %v647 = vsel %vm239, %v644, 0
    %v649 = vsel %vm239, %v646, 0
    %651 = vmatprep.subr.mxu0 0.0
    %652 = vmatpush1.xpose.msra.mxu0 %v649
    %653 = vmatprep.subr.mxu0 0.0
    %654 = vmatpush1.xpose.msra.mxu0 0.0
    %655 = vmatprep.subr.mxu0 0.0
    %656 = vmatpush1.xpose.msra.mxu0 0.0
    %657 = vmatprep.subr.mxu0 0.0
    %658 = vmatpush1.xpose.msra.mxu0 0.0
    %659 = vmatprep.subr.mxu0 0.0
    %660 = vmatpush1.xpose.msra.mxu0 0.0
    %661 = vmatprep.subr.mxu0 0.0
    %662 = vmatpush1.xpose.msra.mxu0 0.0
    %663 = vmatprep.subr.mxu0 0.0
    %664 = vmatpush1.xpose.msra.mxu0 0.0
    %665 = vmatprep.subr.mxu0 0.0
    %666 = vmatpush1.xpose.msra.mxu0 0.0
    %667 = vmatprep.subr.mxu0 0.0
    %668 = vmatpush1.xpose.msra.mxu0 0.0
    %669 = vmatprep.subr.mxu0 0.0
    %670 = vmatpush1.xpose.msra.mxu0 0.0
    %671 = vmatprep.subr.mxu0 0.0
    %672 = vmatpush1.xpose.msra.mxu0 0.0
    %673 = vmatprep.subr.mxu0 0.0
    %674 = vmatpush1.xpose.msra.mxu0 0.0
    %675 = vmatprep.subr.mxu0 0.0
    %676 = vmatpush1.xpose.msra.mxu0 0.0
    %677 = vmatprep.subr.mxu0 0.0
    %678 = vmatpush1.xpose.msra.mxu0 0.0
    %679 = vmatprep.subr.mxu0 0.0
    %680 = vmatpush1.xpose.msra.mxu0 0.0
    %681 = vmatprep.subr.mxu0 0.0
    %682 = vmatpush1.xpose.msra.mxu0 0.0
    %683 = vmatprep.subr.mxu0 0.0
    %684 = vmatpush1.xpose.msra.mxu0 0.0
    %685 = vmatprep.subr.mxu0 0.0
    %686 = vmatpush1.xpose.msra.mxu0 0.0
    %687 = vmatprep.subr.mxu0 0.0
    %688 = vmatpush1.xpose.msra.mxu0 0.0
    %689 = vmatprep.subr.mxu0 0.0
    %690 = vmatpush1.xpose.msra.mxu0 0.0
    %691 = vmatprep.subr.mxu0 0.0
    %692 = vmatpush1.xpose.msra.mxu0 0.0
    %693 = vmatprep.subr.mxu0 0.0
    %694 = vmatpush1.xpose.msra.mxu0 0.0
    %695 = vmatprep.subr.mxu0 0.0
    %696 = vmatpush1.xpose.msra.mxu0 0.0
    %697 = vmatprep.subr.mxu0 0.0
    %698 = vmatpush1.xpose.msra.mxu0 0.0
    %699 = vmatprep.subr.mxu0 0.0
    %700 = vmatpush1.xpose.msra.mxu0 0.0
    %701 = vmatprep.subr.mxu0 0.0
    %702 = vmatpush1.xpose.msra.mxu0 0.0
    %703 = vmatprep.subr.mxu0 0.0
    %704 = vmatpush1.xpose.msra.mxu0 0.0
    %705 = vmatprep.subr.mxu0 0.0
    %706 = vmatpush1.xpose.msra.mxu0 0.0
    %707 = vmatprep.subr.mxu0 0.0
    %708 = vmatpush1.xpose.msra.mxu0 0.0
    %709 = vmatprep.subr.mxu0 0.0
    %710 = vmatpush1.xpose.msra.mxu0 0.0
    %711 = vmatprep.subr.mxu0 0.0
    %712 = vmatpush1.xpose.msra.mxu0 0.0
    %713 = vmatprep.subr.mxu0 0.0
    %714 = vmatpush1.xpose.msra.mxu0 0.0
    %715 = vmatprep.mubr.f32.mxu0 0.0
    %716 = vmatmul.mubr.f32.gmra.mrb[0].mxu0 %v647
    %v717 = vpop.f32.mrb[0].mxu0
    %v718 = vadd.f32 %v233, %v717
    %v719 = vpop.f32.mrb[0].mxu0
    %720 = vdwg.mxu0
    %v721 = vsel %vm239, %v640, -inf
    %722 = vmax.xlane.f32.xlu0 %v721
    %v723 = vpop.xlane.xlu0 %722
    %v724 = vsel %vm239, %v718, -inf
    %725 = vmax.xlane.f32.xlu0 %v724
    %v726 = vpop.xlane.xlu0 %725
    %v727 = vsub.f32 %v640, %v723
    %v728 = vsub.f32 %v718, %v726
    %v729 = vmul.f32 %v727, 1.442695
    %v730 = vpow.pop %v729
    %v731 = vmul.f32 %v728, 1.442695
    %v732 = vpow.pop %v731
    %v733 = vsel %vm239, %v730, 0.0
    %734 = vadd.xlane.f32.xlu0 %v733
    %v735 = vpop.xlane.xlu0 %734
    %v736 = vsel %vm239, %v732, 0.0
    %737 = vadd.xlane.f32.xlu0 %v736
    %v738 = vpop.xlane.xlu0 %737
    %v739 = vrcp.pop %v735
    %v740 = vrcp.pop %v738
    %v741 = vmul.f32 %v730, %v739
    %v742 = vmul.f32 %v732, %v740
    %743 = vrot.lane.b32.xlu0 %v216, 56
    %v744 = vpop.permute.xlu0 %743
    %v747 = vsel %vm239, %v741, 0
    %749 = vmatprep.subr.mxu0 0.0
    %750 = vmatpush1.msra.mxu0 %v744
    %751 = vmatprep.subr.mxu0 0.0
    %752 = vmatpush1.msra.mxu0 0.0
    %753 = vmatprep.subr.mxu0 0.0
    %754 = vmatpush1.msra.mxu0 0.0
    %755 = vmatprep.subr.mxu0 0.0
    %756 = vmatpush1.msra.mxu0 0.0
    %757 = vmatprep.subr.mxu0 0.0
    %758 = vmatpush1.msra.mxu0 0.0
    %759 = vmatprep.subr.mxu0 0.0
    %760 = vmatpush1.msra.mxu0 0.0
    %761 = vmatprep.subr.mxu0 0.0
    %762 = vmatpush1.msra.mxu0 0.0
    %763 = vmatprep.subr.mxu0 0.0
    %764 = vmatpush1.msra.mxu0 0.0
    %765 = vmatprep.subr.mxu0 0.0
    %766 = vmatpush1.msra.mxu0 0.0
    %767 = vmatprep.subr.mxu0 0.0
    %768 = vmatpush1.msra.mxu0 0.0
    %769 = vmatprep.subr.mxu0 0.0
    %770 = vmatpush1.msra.mxu0 0.0
    %771 = vmatprep.subr.mxu0 0.0
    %772 = vmatpush1.msra.mxu0 0.0
    %773 = vmatprep.subr.mxu0 0.0
    %774 = vmatpush1.msra.mxu0 0.0
    %775 = vmatprep.subr.mxu0 0.0
    %776 = vmatpush1.msra.mxu0 0.0
    %777 = vmatprep.subr.mxu0 0.0
    %778 = vmatpush1.msra.mxu0 0.0
    %779 = vmatprep.subr.mxu0 0.0
    %780 = vmatpush1.msra.mxu0 0.0
    %781 = vmatprep.subr.mxu0 0.0
    %782 = vmatpush1.msra.mxu0 0.0
    %783 = vmatprep.subr.mxu0 0.0
    %784 = vmatpush1.msra.mxu0 0.0
    %785 = vmatprep.subr.mxu0 0.0
    %786 = vmatpush1.msra.mxu0 0.0
    %787 = vmatprep.subr.mxu0 0.0
    %788 = vmatpush1.msra.mxu0 0.0
    %789 = vmatprep.subr.mxu0 0.0
    %790 = vmatpush1.msra.mxu0 0.0
    %791 = vmatprep.subr.mxu0 0.0
    %792 = vmatpush1.msra.mxu0 0.0
    %793 = vmatprep.subr.mxu0 0.0
    %794 = vmatpush1.msra.mxu0 0.0
    %795 = vmatprep.subr.mxu0 0.0
    %796 = vmatpush1.msra.mxu0 0.0
    %797 = vmatprep.subr.mxu0 0.0
    %798 = vmatpush1.msra.mxu0 0.0
    %799 = vmatprep.subr.mxu0 0.0
    %800 = vmatpush1.msra.mxu0 0.0
    %801 = vmatprep.subr.mxu0 0.0
    %802 = vmatpush1.msra.mxu0 0.0
    %803 = vmatprep.subr.mxu0 0.0
    %804 = vmatpush1.msra.mxu0 0.0
    %805 = vmatprep.subr.mxu0 0.0
    %806 = vmatpush1.msra.mxu0 0.0
    %807 = vmatprep.subr.mxu0 0.0
    %808 = vmatpush1.msra.mxu0 0.0
    %809 = vmatprep.subr.mxu0 0.0
    %810 = vmatpush1.msra.mxu0 0.0
    %811 = vmatprep.subr.mxu0 0.0
    %812 = vmatpush1.msra.mxu0 0.0
    %813 = vmatprep.mubr.f32.mxu0 0.0
    %814 = vmatmul.mubr.f32.gmra.mrb[0].mxu0 %v747
    %v815 = vpop.f32.mrb[0].mxu0
    %v816 = vadd.f32 0.0, %v815
    %v817 = vpop.f32.mrb[0].mxu0
    %818 = vdwg.mxu0
    %819 = vrot.lane.b32.xlu0 %v221, 56
    %v820 = vpop.permute.xlu0 %819
    %v823 = vsel %vm239, %v742, 0
    %825 = vmatprep.subr.mxu0 0.0
    %826 = vmatpush1.msra.mxu0 %v820
    %827 = vmatprep.subr.mxu0 0.0
    %828 = vmatpush1.msra.mxu0 0.0
    %829 = vmatprep.subr.mxu0 0.0
    %830 = vmatpush1.msra.mxu0 0.0
    %831 = vmatprep.subr.mxu0 0.0
    %832 = vmatpush1.msra.mxu0 0.0
    %833 = vmatprep.subr.mxu0 0.0
    %834 = vmatpush1.msra.mxu0 0.0
    %835 = vmatprep.subr.mxu0 0.0
    %836 = vmatpush1.msra.mxu0 0.0
    %837 = vmatprep.subr.mxu0 0.0
    %838 = vmatpush1.msra.mxu0 0.0
    %839 = vmatprep.subr.mxu0 0.0
    %840 = vmatpush1.msra.mxu0 0.0
    %841 = vmatprep.subr.mxu0 0.0
    %842 = vmatpush1.msra.mxu0 0.0
    %843 = vmatprep.subr.mxu0 0.0
    %844 = vmatpush1.msra.mxu0 0.0
    %845 = vmatprep.subr.mxu0 0.0
    %846 = vmatpush1.msra.mxu0 0.0
    %847 = vmatprep.subr.mxu0 0.0
    %848 = vmatpush1.msra.mxu0 0.0
    %849 = vmatprep.subr.mxu0 0.0
    %850 = vmatpush1.msra.mxu0 0.0
    %851 = vmatprep.subr.mxu0 0.0
    %852 = vmatpush1.msra.mxu0 0.0
    %853 = vmatprep.subr.mxu0 0.0
    %854 = vmatpush1.msra.mxu0 0.0
    %855 = vmatprep.subr.mxu0 0.0
    %856 = vmatpush1.msra.mxu0 0.0
    %857 = vmatprep.subr.mxu0 0.0
    %858 = vmatpush1.msra.mxu0 0.0
    %859 = vmatprep.subr.mxu0 0.0
    %860 = vmatpush1.msra.mxu0 0.0
    %861 = vmatprep.subr.mxu0 0.0
    %862 = vmatpush1.msra.mxu0 0.0
    %863 = vmatprep.subr.mxu0 0.0
    %864 = vmatpush1.msra.mxu0 0.0
    %865 = vmatprep.subr.mxu0 0.0
    %866 = vmatpush1.msra.mxu0 0.0
    %867 = vmatprep.subr.mxu0 0.0
    %868 = vmatpush1.msra.mxu0 0.0
    %869 = vmatprep.subr.mxu0 0.0
    %870 = vmatpush1.msra.mxu0 0.0
    %871 = vmatprep.subr.mxu0 0.0
    %872 = vmatpush1.msra.mxu0 0.0
    %873 = vmatprep.subr.mxu0 0.0
    %874 = vmatpush1.msra.mxu0 0.0
    %875 = vmatprep.subr.mxu0 0.0
    %876 = vmatpush1.msra.mxu0 0.0
    %877 = vmatprep.subr.mxu0 0.0
    %878 = vmatpush1.msra.mxu0 0.0
    %879 = vmatprep.subr.mxu0 0.0
    %880 = vmatpush1.msra.mxu0 0.0
    %881 = vmatprep.subr.mxu0 0.0
    %882 = vmatpush1.msra.mxu0 0.0
    %883 = vmatprep.subr.mxu0 0.0
    %884 = vmatpush1.msra.mxu0 0.0
    %885 = vmatprep.subr.mxu0 0.0
    %886 = vmatpush1.msra.mxu0 0.0
    %887 = vmatprep.subr.mxu0 0.0
    %888 = vmatpush1.msra.mxu0 0.0
    %889 = vmatprep.mubr.f32.mxu0 0.0
    %890 = vmatmul.mubr.f32.gmra.mrb[0].mxu0 %v823
    %v891 = vpop.f32.mrb[0].mxu0
    %v892 = vadd.f32 0.0, %v891
    %v893 = vpop.f32.mrb[0].mxu0
    %894 = vdwg.mxu0
    %895 = vrot.lane.b32.xlu0 %v216, 112
    %v896 = vpop.permute.xlu0 %895
    %897 = vrot.lane.b32.xlu0 %v216, 80
    %v898 = vpop.permute.xlu0 %897
    %v899 = vsel %vm239, %v896, 0
    %v901 = vsel %vm239, %v898, 0
    %903 = vmatprep.subr.mxu0 0.0
    %904 = vmatpush1.xpose.msra.mxu0 %v901
    %905 = vmatprep.subr.mxu0 0.0
    %906 = vmatpush1.xpose.msra.mxu0 0.0
    %907 = vmatprep.subr.mxu0 0.0
    %908 = vmatpush1.xpose.msra.mxu0 0.0
    %909 = vmatprep.subr.mxu0 0.0
    %910 = vmatpush1.xpose.msra.mxu0 0.0
    %911 = vmatprep.subr.mxu0 0.0
    %912 = vmatpush1.xpose.msra.mxu0 0.0
    %913 = vmatprep.subr.mxu0 0.0
    %914 = vmatpush1.xpose.msra.mxu0 0.0
    %915 = vmatprep.subr.mxu0 0.0
    %916 = vmatpush1.xpose.msra.mxu0 0.0
    %917 = vmatprep.subr.mxu0 0.0
    %918 = vmatpush1.xpose.msra.mxu0 0.0
    %919 = vmatprep.subr.mxu0 0.0
    %920 = vmatpush1.xpose.msra.mxu0 0.0
    %921 = vmatprep.subr.mxu0 0.0
    %922 = vmatpush1.xpose.msra.mxu0 0.0
    %923 = vmatprep.subr.mxu0 0.0
    %924 = vmatpush1.xpose.msra.mxu0 0.0
    %925 = vmatprep.subr.mxu0 0.0
    %926 = vmatpush1.xpose.msra.mxu0 0.0
    %927 = vmatprep.subr.mxu0 0.0
    %928 = vmatpush1.xpose.msra.mxu0 0.0
    %929 = vmatprep.subr.mxu0 0.0
    %930 = vmatpush1.xpose.msra.mxu0 0.0
    %931 = vmatprep.subr.mxu0 0.0
    %932 = vmatpush1.xpose.msra.mxu0 0.0
    %933 = vmatprep.subr.mxu0 0.0
    %934 = vmatpush1.xpose.msra.mxu0 0.0
    %935 = vmatprep.subr.mxu0 0.0
    %936 = vmatpush1.xpose.msra.mxu0 0.0
    %937 = vmatprep.subr.mxu0 0.0
    %938 = vmatpush1.xpose.msra.mxu0 0.0
    %939 = vmatprep.subr.mxu0 0.0
    %940 = vmatpush1.xpose.msra.mxu0 0.0
    %941 = vmatprep.subr.mxu0 0.0
    %942 = vmatpush1.xpose.msra.mxu0 0.0
    %943 = vmatprep.subr.mxu0 0.0
    %944 = vmatpush1.xpose.msra.mxu0 0.0
    %945 = vmatprep.subr.mxu0 0.0
    %946 = vmatpush1.xpose.msra.mxu0 0.0
    %947 = vmatprep.subr.mxu0 0.0
    %948 = vmatpush1.xpose.msra.mxu0 0.0
    %949 = vmatprep.subr.mxu0 0.0
    %950 = vmatpush1.xpose.msra.mxu0 0.0
    %951 = vmatprep.subr.mxu0 0.0
    %952 = vmatpush1.xpose.msra.mxu0 0.0
    %953 = vmatprep.subr.mxu0 0.0
    %954 = vmatpush1.xpose.msra.mxu0 0.0
    %955 = vmatprep.subr.mxu0 0.0
    %956 = vmatpush1.xpose.msra.mxu0 0.0
    %957 = vmatprep.subr.mxu0 0.0
    %958 = vmatpush1.xpose.msra.mxu0 0.0
    %959 = vmatprep.subr.mxu0 0.0
    %960 = vmatpush1.xpose.msra.mxu0 0.0
    %961 = vmatprep.subr.mxu0 0.0
    %962 = vmatpush1.xpose.msra.mxu0 0.0
    %963 = vmatprep.subr.mxu0 0.0
    %964 = vmatpush1.xpose.msra.mxu0 0.0
    %965 = vmatprep.subr.mxu0 0.0
    %966 = vmatpush1.xpose.msra.mxu0 0.0
    %967 = vmatprep.mubr.f32.mxu0 0.0
    %968 = vmatmul.mubr.f32.gmra.mrb[0].mxu0 %v899
    %v969 = vpop.f32.mrb[0].mxu0
    %v970 = vadd.f32 %v229, %v969
    %v971 = vpop.f32.mrb[0].mxu0
    %972 = vdwg.mxu0
    %973 = vrot.lane.b32.xlu0 %v221, 112
    %v974 = vpop.permute.xlu0 %973
    %975 = vrot.lane.b32.xlu0 %v221, 80
    %v976 = vpop.permute.xlu0 %975
    %v977 = vsel %vm239, %v974, 0
    %v979 = vsel %vm239, %v976, 0
    %981 = vmatprep.subr.mxu0 0.0
    %982 = vmatpush1.xpose.msra.mxu0 %v979
    %983 = vmatprep.subr.mxu0 0.0
    %984 = vmatpush1.xpose.msra.mxu0 0.0
    %985 = vmatprep.subr.mxu0 0.0
    %986 = vmatpush1.xpose.msra.mxu0 0.0
    %987 = vmatprep.subr.mxu0 0.0
    %988 = vmatpush1.xpose.msra.mxu0 0.0
    %989 = vmatprep.subr.mxu0 0.0
    %990 = vmatpush1.xpose.msra.mxu0 0.0
    %991 = vmatprep.subr.mxu0 0.0
    %992 = vmatpush1.xpose.msra.mxu0 0.0
    %993 = vmatprep.subr.mxu0 0.0
    %994 = vmatpush1.xpose.msra.mxu0 0.0
    %995 = vmatprep.subr.mxu0 0.0
    %996 = vmatpush1.xpose.msra.mxu0 0.0
    %997 = vmatprep.subr.mxu0 0.0
    %998 = vmatpush1.xpose.msra.mxu0 0.0
    %999 = vmatprep.subr.mxu0 0.0
    %1000 = vmatpush1.xpose.msra.mxu0 0.0
    %1001 = vmatprep.subr.mxu0 0.0
    %1002 = vmatpush1.xpose.msra.mxu0 0.0
    %1003 = vmatprep.subr.mxu0 0.0
    %1004 = vmatpush1.xpose.msra.mxu0 0.0
    %1005 = vmatprep.subr.mxu0 0.0
    %1006 = vmatpush1.xpose.msra.mxu0 0.0
    %1007 = vmatprep.subr.mxu0 0.0
    %1008 = vmatpush1.xpose.msra.mxu0 0.0
    %1009 = vmatprep.subr.mxu0 0.0
    %1010 = vmatpush1.xpose.msra.mxu0 0.0
    %1011 = vmatprep.subr.mxu0 0.0
    %1012 = vmatpush1.xpose.msra.mxu0 0.0
    %1013 = vmatprep.subr.mxu0 0.0
    %1014 = vmatpush1.xpose.msra.mxu0 0.0
    %1015 = vmatprep.subr.mxu0 0.0
    %1016 = vmatpush1.xpose.msra.mxu0 0.0
    %1017 = vmatprep.subr.mxu0 0.0
    %1018 = vmatpush1.xpose.msra.mxu0 0.0
    %1019 = vmatprep.subr.mxu0 0.0
    %1020 = vmatpush1.xpose.msra.mxu0 0.0
    %1021 = vmatprep.subr.mxu0 0.0
    %1022 = vmatpush1.xpose.msra.mxu0 0.0
    %1023 = vmatprep.subr.mxu0 0.0
    %1024 = vmatpush1.xpose.msra.mxu0 0.0
    %1025 = vmatprep.subr.mxu0 0.0
    %1026 = vmatpush1.xpose.msra.mxu0 0.0
    %1027 = vmatprep.subr.mxu0 0.0
    %1028 = vmatpush1.xpose.msra.mxu0 0.0
    %1029 = vmatprep.subr.mxu0 0.0
    %1030 = vmatpush1.xpose.msra.mxu0 0.0
    %1031 = vmatprep.subr.mxu0 0.0
    %1032 = vmatpush1.xpose.msra.mxu0 0.0
    %1033 = vmatprep.subr.mxu0 0.0
    %1034 = vmatpush1.xpose.msra.mxu0 0.0
    %1035 = vmatprep.subr.mxu0 0.0
    %1036 = vmatpush1.xpose.msra.mxu0 0.0
    %1037 = vmatprep.subr.mxu0 0.0
    %1038 = vmatpush1.xpose.msra.mxu0 0.0
    %1039 = vmatprep.subr.mxu0 0.0
    %1040 = vmatpush1.xpose.msra.mxu0 0.0
    %1041 = vmatprep.subr.mxu0 0.0
    %1042 = vmatpush1.xpose.msra.mxu0 0.0
    %1043 = vmatprep.subr.mxu0 0.0
    %1044 = vmatpush1.xpose.msra.mxu0 0.0
    %1045 = vmatprep.mubr.f32.mxu0 0.0
    %1046 = vmatmul.mubr.f32.gmra.mrb[0].mxu0 %v977
    %v1047 = vpop.f32.mrb[0].mxu0
    %v1048 = vadd.f32 %v233, %v1047
    %v1049 = vpop.f32.mrb[0].mxu0
    %1050 = vdwg.mxu0
    %v1051 = vsel %vm239, %v970, -inf
    %1052 = vmax.xlane.f32.xlu0 %v1051
    %v1053 = vpop.xlane.xlu0 %1052
    %v1054 = vsel %vm239, %v1048, -inf
    %1055 = vmax.xlane.f32.xlu0 %v1054
    %v1056 = vpop.xlane.xlu0 %1055
    %v1057 = vsub.f32 %v970, %v1053
    %v1058 = vsub.f32 %v1048, %v1056
    %v1059 = vmul.f32 %v1057, 1.442695
    %v1060 = vpow.pop %v1059
    %v1061 = vmul.f32 %v1058, 1.442695
    %v1062 = vpow.pop %v1061
    %v1063 = vsel %vm239, %v1060, 0.0
    %1064 = vadd.xlane.f32.xlu0 %v1063
    %v1065 = vpop.xlane.xlu0 %1064
    %v1066 = vsel %vm239, %v1062, 0.0
    %1067 = vadd.xlane.f32.xlu0 %v1066
    %v1068 = vpop.xlane.xlu0 %1067
    %v1069 = vrcp.pop %v1065
    %v1070 = vrcp.pop %v1068
    %v1071 = vmul.f32 %v1060, %v1069
    %v1072 = vmul.f32 %v1062, %v1070
    %1073 = vrot.lane.b32.xlu0 %v216, 48
    %v1074 = vpop.permute.xlu0 %1073
    %v1077 = vsel %vm239, %v1071, 0
    %1079 = vmatprep.subr.mxu0 0.0
    %1080 = vmatpush1.msra.mxu0 %v1074
    %1081 = vmatprep.subr.mxu0 0.0
    %1082 = vmatpush1.msra.mxu0 0.0
    %1083 = vmatprep.subr.mxu0 0.0
    %1084 = vmatpush1.msra.mxu0 0.0
    %1085 = vmatprep.subr.mxu0 0.0
    %1086 = vmatpush1.msra.mxu0 0.0
    %1087 = vmatprep.subr.mxu0 0.0
    %1088 = vmatpush1.msra.mxu0 0.0
    %1089 = vmatprep.subr.mxu0 0.0
    %1090 = vmatpush1.msra.mxu0 0.0
    %1091 = vmatprep.subr.mxu0 0.0
    %1092 = vmatpush1.msra.mxu0 0.0
    %1093 = vmatprep.subr.mxu0 0.0
    %1094 = vmatpush1.msra.mxu0 0.0
    %1095 = vmatprep.subr.mxu0 0.0
    %1096 = vmatpush1.msra.mxu0 0.0
    %1097 = vmatprep.subr.mxu0 0.0
    %1098 = vmatpush1.msra.mxu0 0.0
    %1099 = vmatprep.subr.mxu0 0.0
    %1100 = vmatpush1.msra.mxu0 0.0
    %1101 = vmatprep.subr.mxu0 0.0
    %1102 = vmatpush1.msra.mxu0 0.0
    %1103 = vmatprep.subr.mxu0 0.0
    %1104 = vmatpush1.msra.mxu0 0.0
    %1105 = vmatprep.subr.mxu0 0.0
    %1106 = vmatpush1.msra.mxu0 0.0
    %1107 = vmatprep.subr.mxu0 0.0
    %1108 = vmatpush1.msra.mxu0 0.0
    %1109 = vmatprep.subr.mxu0 0.0
    %1110 = vmatpush1.msra.mxu0 0.0
    %1111 = vmatprep.subr.mxu0 0.0
    %1112 = vmatpush1.msra.mxu0 0.0
    %1113 = vmatprep.subr.mxu0 0.0
    %1114 = vmatpush1.msra.mxu0 0.0
    %1115 = vmatprep.subr.mxu0 0.0
    %1116 = vmatpush1.msra.mxu0 0.0
    %1117 = vmatprep.subr.mxu0 0.0
    %1118 = vmatpush1.msra.mxu0 0.0
    %1119 = vmatprep.subr.mxu0 0.0
    %1120 = vmatpush1.msra.mxu0 0.0
    %1121 = vmatprep.subr.mxu0 0.0
    %1122 = vmatpush1.msra.mxu0 0.0
    %1123 = vmatprep.subr.mxu0 0.0
    %1124 = vmatpush1.msra.mxu0 0.0
    %1125 = vmatprep.subr.mxu0 0.0
    %1126 = vmatpush1.msra.mxu0 0.0
    %1127 = vmatprep.subr.mxu0 0.0
    %1128 = vmatpush1.msra.mxu0 0.0
    %1129 = vmatprep.subr.mxu0 0.0
    %1130 = vmatpush1.msra.mxu0 0.0
    %1131 = vmatprep.subr.mxu0 0.0
    %1132 = vmatpush1.msra.mxu0 0.0
    %1133 = vmatprep.subr.mxu0 0.0
    %1134 = vmatpush1.msra.mxu0 0.0
    %1135 = vmatprep.subr.mxu0 0.0
    %1136 = vmatpush1.msra.mxu0 0.0
    %1137 = vmatprep.subr.mxu0 0.0
    %1138 = vmatpush1.msra.mxu0 0.0
    %1139 = vmatprep.subr.mxu0 0.0
    %1140 = vmatpush1.msra.mxu0 0.0
    %1141 = vmatprep.subr.mxu0 0.0
    %1142 = vmatpush1.msra.mxu0 0.0
    %1143 = vmatprep.mubr.f32.mxu0 0.0
    %1144 = vmatmul.mubr.f32.gmra.mrb[0].mxu0 %v1077
    %v1145 = vpop.f32.mrb[0].mxu0
    %v1146 = vadd.f32 0.0, %v1145
    %v1147 = vpop.f32.mrb[0].mxu0
    %1148 = vdwg.mxu0
    %1149 = vrot.lane.b32.xlu0 %v221, 48
    %v1150 = vpop.permute.xlu0 %1149
    %v1153 = vsel %vm239, %v1072, 0
    %1155 = vmatprep.subr.mxu0 0.0
    %1156 = vmatpush1.msra.mxu0 %v1150
    %1157 = vmatprep.subr.mxu0 0.0
    %1158 = vmatpush1.msra.mxu0 0.0
    %1159 = vmatprep.subr.mxu0 0.0
    %1160 = vmatpush1.msra.mxu0 0.0
    %1161 = vmatprep.subr.mxu0 0.0
    %1162 = vmatpush1.msra.mxu0 0.0
    %1163 = vmatprep.subr.mxu0 0.0
    %1164 = vmatpush1.msra.mxu0 0.0
    %1165 = vmatprep.subr.mxu0 0.0
    %1166 = vmatpush1.msra.mxu0 0.0
    %1167 = vmatprep.subr.mxu0 0.0
    %1168 = vmatpush1.msra.mxu0 0.0
    %1169 = vmatprep.subr.mxu0 0.0
    %1170 = vmatpush1.msra.mxu0 0.0
    %1171 = vmatprep.subr.mxu0 0.0
    %1172 = vmatpush1.msra.mxu0 0.0
    %1173 = vmatprep.subr.mxu0 0.0
    %1174 = vmatpush1.msra.mxu0 0.0
    %1175 = vmatprep.subr.mxu0 0.0
    %1176 = vmatpush1.msra.mxu0 0.0
    %1177 = vmatprep.subr.mxu0 0.0
    %1178 = vmatpush1.msra.mxu0 0.0
    %1179 = vmatprep.subr.mxu0 0.0
    %1180 = vmatpush1.msra.mxu0 0.0
    %1181 = vmatprep.subr.mxu0 0.0
    %1182 = vmatpush1.msra.mxu0 0.0
    %1183 = vmatprep.subr.mxu0 0.0
    %1184 = vmatpush1.msra.mxu0 0.0
    %1185 = vmatprep.subr.mxu0 0.0
    %1186 = vmatpush1.msra.mxu0 0.0
    %1187 = vmatprep.subr.mxu0 0.0
    %1188 = vmatpush1.msra.mxu0 0.0
    %1189 = vmatprep.subr.mxu0 0.0
    %1190 = vmatpush1.msra.mxu0 0.0
    %1191 = vmatprep.subr.mxu0 0.0
    %1192 = vmatpush1.msra.mxu0 0.0
    %1193 = vmatprep.subr.mxu0 0.0
    %1194 = vmatpush1.msra.mxu0 0.0
    %1195 = vmatprep.subr.mxu0 0.0
    %1196 = vmatpush1.msra.mxu0 0.0
    %1197 = vmatprep.subr.mxu0 0.0
    %1198 = vmatpush1.msra.mxu0 0.0
    %1199 = vmatprep.subr.mxu0 0.0
    %1200 = vmatpush1.msra.mxu0 0.0
    %1201 = vmatprep.subr.mxu0 0.0
    %1202 = vmatpush1.msra.mxu0 0.0
    %1203 = vmatprep.subr.mxu0 0.0
    %1204 = vmatpush1.msra.mxu0 0.0
    %1205 = vmatprep.subr.mxu0 0.0
    %1206 = vmatpush1.msra.mxu0 0.0
    %1207 = vmatprep.subr.mxu0 0.0
    %1208 = vmatpush1.msra.mxu0 0.0
    %1209 = vmatprep.subr.mxu0 0.0
    %1210 = vmatpush1.msra.mxu0 0.0
    %1211 = vmatprep.subr.mxu0 0.0
    %1212 = vmatpush1.msra.mxu0 0.0
    %1213 = vmatprep.subr.mxu0 0.0
    %1214 = vmatpush1.msra.mxu0 0.0
    %1215 = vmatprep.subr.mxu0 0.0
    %1216 = vmatpush1.msra.mxu0 0.0
    %1217 = vmatprep.subr.mxu0 0.0
    %1218 = vmatpush1.msra.mxu0 0.0
    %1219 = vmatprep.mubr.f32.mxu0 0.0
    %1220 = vmatmul.mubr.f32.gmra.mrb[0].mxu0 %v1153
    %v1221 = vpop.f32.mrb[0].mxu0
    %v1222 = vadd.f32 0.0, %v1221
    %v1223 = vpop.f32.mrb[0].mxu0
    %1224 = vdwg.mxu0
    %1225 = vrot.lane.b32.xlu0 %v216, 104
    %v1226 = vpop.permute.xlu0 %1225
    %1227 = vrot.lane.b32.xlu0 %v216, 72
    %v1228 = vpop.permute.xlu0 %1227
    %v1229 = vsel %vm239, %v1226, 0
    %v1231 = vsel %vm239, %v1228, 0
    %1233 = vmatprep.subr.mxu0 0.0
    %1234 = vmatpush1.xpose.msra.mxu0 %v1231
    %1235 = vmatprep.subr.mxu0 0.0
    %1236 = vmatpush1.xpose.msra.mxu0 0.0
    %1237 = vmatprep.subr.mxu0 0.0
    %1238 = vmatpush1.xpose.msra.mxu0 0.0
    %1239 = vmatprep.subr.mxu0 0.0
    %1240 = vmatpush1.xpose.msra.mxu0 0.0
    %1241 = vmatprep.subr.mxu0 0.0
    %1242 = vmatpush1.xpose.msra.mxu0 0.0
    %1243 = vmatprep.subr.mxu0 0.0
    %1244 = vmatpush1.xpose.msra.mxu0 0.0
    %1245 = vmatprep.subr.mxu0 0.0
    %1246 = vmatpush1.xpose.msra.mxu0 0.0
    %1247 = vmatprep.subr.mxu0 0.0
    %1248 = vmatpush1.xpose.msra.mxu0 0.0
    %1249 = vmatprep.subr.mxu0 0.0
    %1250 = vmatpush1.xpose.msra.mxu0 0.0
    %1251 = vmatprep.subr.mxu0 0.0
    %1252 = vmatpush1.xpose.msra.mxu0 0.0
    %1253 = vmatprep.subr.mxu0 0.0
    %1254 = vmatpush1.xpose.msra.mxu0 0.0
    %1255 = vmatprep.subr.mxu0 0.0
    %1256 = vmatpush1.xpose.msra.mxu0 0.0
    %1257 = vmatprep.subr.mxu0 0.0
    %1258 = vmatpush1.xpose.msra.mxu0 0.0
    %1259 = vmatprep.subr.mxu0 0.0
    %1260 = vmatpush1.xpose.msra.mxu0 0.0
    %1261 = vmatprep.subr.mxu0 0.0
    %1262 = vmatpush1.xpose.msra.mxu0 0.0
    %1263 = vmatprep.subr.mxu0 0.0
    %1264 = vmatpush1.xpose.msra.mxu0 0.0
    %1265 = vmatprep.subr.mxu0 0.0
    %1266 = vmatpush1.xpose.msra.mxu0 0.0
    %1267 = vmatprep.subr.mxu0 0.0
    %1268 = vmatpush1.xpose.msra.mxu0 0.0
    %1269 = vmatprep.subr.mxu0 0.0
    %1270 = vmatpush1.xpose.msra.mxu0 0.0
    %1271 = vmatprep.subr.mxu0 0.0
    %1272 = vmatpush1.xpose.msra.mxu0 0.0
    %1273 = vmatprep.subr.mxu0 0.0
    %1274 = vmatpush1.xpose.msra.mxu0 0.0
    %1275 = vmatprep.subr.mxu0 0.0
    %1276 = vmatpush1.xpose.msra.mxu0 0.0
    %1277 = vmatprep.subr.mxu0 0.0
    %1278 = vmatpush1.xpose.msra.mxu0 0.0
    %1279 = vmatprep.subr.mxu0 0.0
    %1280 = vmatpush1.xpose.msra.mxu0 0.0
    %1281 = vmatprep.subr.mxu0 0.0
    %1282 = vmatpush1.xpose.msra.mxu0 0.0
    %1283 = vmatprep.subr.mxu0 0.0
    %1284 = vmatpush1.xpose.msra.mxu0 0.0
    %1285 = vmatprep.subr.mxu0 0.0
    %1286 = vmatpush1.xpose.msra.mxu0 0.0
    %1287 = vmatprep.subr.mxu0 0.0
    %1288 = vmatpush1.xpose.msra.mxu0 0.0
    %1289 = vmatprep.subr.mxu0 0.0
    %1290 = vmatpush1.xpose.msra.mxu0 0.0
    %1291 = vmatprep.subr.mxu0 0.0
    %1292 = vmatpush1.xpose.msra.mxu0 0.0
    %1293 = vmatprep.subr.mxu0 0.0
    %1294 = vmatpush1.xpose.msra.mxu0 0.0
    %1295 = vmatprep.subr.mxu0 0.0
    %1296 = vmatpush1.xpose.msra.mxu0 0.0
    %1297 = vmatprep.mubr.f32.mxu0 0.0
    %1298 = vmatmul.mubr.f32.gmra.mrb[0].mxu0 %v1229
    %v1299 = vpop.f32.mrb[0].mxu0
    %v1300 = vadd.f32 %v229, %v1299
    %v1301 = vpop.f32.mrb[0].mxu0
    %1302 = vdwg.mxu0
    %1303 = vrot.lane.b32.xlu0 %v221, 104
    %v1304 = vpop.permute.xlu0 %1303
    %1305 = vrot.lane.b32.xlu0 %v221, 72
    %v1306 = vpop.permute.xlu0 %1305
    %v1307 = vsel %vm239, %v1304, 0
    %v1309 = vsel %vm239, %v1306, 0
    %1311 = vmatprep.subr.mxu0 0.0
    %1312 = vmatpush1.xpose.msra.mxu0 %v1309
    %1313 = vmatprep.subr.mxu0 0.0
    %1314 = vmatpush1.xpose.msra.mxu0 0.0
    %1315 = vmatprep.subr.mxu0 0.0
    %1316 = vmatpush1.xpose.msra.mxu0 0.0
    %1317 = vmatprep.subr.mxu0 0.0
    %1318 = vmatpush1.xpose.msra.mxu0 0.0
    %1319 = vmatprep.subr.mxu0 0.0
    %1320 = vmatpush1.xpose.msra.mxu0 0.0
    %1321 = vmatprep.subr.mxu0 0.0
    %1322 = vmatpush1.xpose.msra.mxu0 0.0
    %1323 = vmatprep.subr.mxu0 0.0
    %1324 = vmatpush1.xpose.msra.mxu0 0.0
    %1325 = vmatprep.subr.mxu0 0.0
    %1326 = vmatpush1.xpose.msra.mxu0 0.0
    %1327 = vmatprep.subr.mxu0 0.0
    %1328 = vmatpush1.xpose.msra.mxu0 0.0
    %1329 = vmatprep.subr.mxu0 0.0
    %1330 = vmatpush1.xpose.msra.mxu0 0.0
    %1331 = vmatprep.subr.mxu0 0.0
    %1332 = vmatpush1.xpose.msra.mxu0 0.0
    %1333 = vmatprep.subr.mxu0 0.0
    %1334 = vmatpush1.xpose.msra.mxu0 0.0
    %1335 = vmatprep.subr.mxu0 0.0
    %1336 = vmatpush1.xpose.msra.mxu0 0.0
    %1337 = vmatprep.subr.mxu0 0.0
    %1338 = vmatpush1.xpose.msra.mxu0 0.0
    %1339 = vmatprep.subr.mxu0 0.0
    %1340 = vmatpush1.xpose.msra.mxu0 0.0
    %1341 = vmatprep.subr.mxu0 0.0
    %1342 = vmatpush1.xpose.msra.mxu0 0.0
    %1343 = vmatprep.subr.mxu0 0.0
    %1344 = vmatpush1.xpose.msra.mxu0 0.0
    %1345 = vmatprep.subr.mxu0 0.0
    %1346 = vmatpush1.xpose.msra.mxu0 0.0
    %1347 = vmatprep.subr.mxu0 0.0
    %1348 = vmatpush1.xpose.msra.mxu0 0.0
    %1349 = vmatprep.subr.mxu0 0.0
    %1350 = vmatpush1.xpose.msra.mxu0 0.0
    %1351 = vmatprep.subr.mxu0 0.0
    %1352 = vmatpush1.xpose.msra.mxu0 0.0
    %1353 = vmatprep.subr.mxu0 0.0
    %1354 = vmatpush1.xpose.msra.mxu0 0.0
    %1355 = vmatprep.subr.mxu0 0.0
    %1356 = vmatpush1.xpose.msra.mxu0 0.0
    %1357 = vmatprep.subr.mxu0 0.0
    %1358 = vmatpush1.xpose.msra.mxu0 0.0
    %1359 = vmatprep.subr.mxu0 0.0
    %1360 = vmatpush1.xpose.msra.mxu0 0.0
    %1361 = vmatprep.subr.mxu0 0.0
    %1362 = vmatpush1.xpose.msra.mxu0 0.0
    %1363 = vmatprep.subr.mxu0 0.0
    %1364 = vmatpush1.xpose.msra.mxu0 0.0
    %1365 = vmatprep.subr.mxu0 0.0
    %1366 = vmatpush1.xpose.msra.mxu0 0.0
    %1367 = vmatprep.subr.mxu0 0.0
    %1368 = vmatpush1.xpose.msra.mxu0 0.0
    %1369 = vmatprep.subr.mxu0 0.0
    %1370 = vmatpush1.xpose.msra.mxu0 0.0
    %1371 = vmatprep.subr.mxu0 0.0
    %1372 = vmatpush1.xpose.msra.mxu0 0.0
    %1373 = vmatprep.subr.mxu0 0.0
    %1374 = vmatpush1.xpose.msra.mxu0 0.0
    %1375 = vmatprep.mubr.f32.mxu0 0.0
    %1376 = vmatmul.mubr.f32.gmra.mrb[0].mxu0 %v1307
    %v1377 = vpop.f32.mrb[0].mxu0
    %v1378 = vadd.f32 %v233, %v1377
    %v1379 = vpop.f32.mrb[0].mxu0
    %1380 = vdwg.mxu0
    %v1381 = vsel %vm239, %v1300, -inf
    %1382 = vmax.xlane.f32.xlu0 %v1381
    %v1383 = vpop.xlane.xlu0 %1382
    %v1384 = vsel %vm239, %v1378, -inf
    %1385 = vmax.xlane.f32.xlu0 %v1384
    %v1386 = vpop.xlane.xlu0 %1385
    %v1387 = vsub.f32 %v1300, %v1383
    %v1388 = vsub.f32 %v1378, %v1386
    %v1389 = vmul.f32 %v1387, 1.442695
    %v1390 = vpow.pop %v1389
    %v1391 = vmul.f32 %v1388, 1.442695
    %v1392 = vpow.pop %v1391
    %v1393 = vsel %vm239, %v1390, 0.0
    %1394 = vadd.xlane.f32.xlu0 %v1393
    %v1395 = vpop.xlane.xlu0 %1394
    %v1396 = vsel %vm239, %v1392, 0.0
    %1397 = vadd.xlane.f32.xlu0 %v1396
    %v1398 = vpop.xlane.xlu0 %1397
    %v1399 = vrcp.pop %v1395
    %v1400 = vrcp.pop %v1398
    %v1401 = vmul.f32 %v1390, %v1399
    %v1402 = vmul.f32 %v1392, %v1400
    %1403 = vrot.lane.b32.xlu0 %v216, 40
    %v1404 = vpop.permute.xlu0 %1403
    %v1407 = vsel %vm239, %v1401, 0
    %1409 = vmatprep.subr.mxu0 0.0
    %1410 = vmatpush1.msra.mxu0 %v1404
    %1411 = vmatprep.subr.mxu0 0.0
    %1412 = vmatpush1.msra.mxu0 0.0
    %1413 = vmatprep.subr.mxu0 0.0
    %1414 = vmatpush1.msra.mxu0 0.0
    %1415 = vmatprep.subr.mxu0 0.0
    %1416 = vmatpush1.msra.mxu0 0.0
    %1417 = vmatprep.subr.mxu0 0.0
    %1418 = vmatpush1.msra.mxu0 0.0
    %1419 = vmatprep.subr.mxu0 0.0
    %1420 = vmatpush1.msra.mxu0 0.0
    %1421 = vmatprep.subr.mxu0 0.0
    %1422 = vmatpush1.msra.mxu0 0.0
    %1423 = vmatprep.subr.mxu0 0.0
    %1424 = vmatpush1.msra.mxu0 0.0
    %1425 = vmatprep.subr.mxu0 0.0
    %1426 = vmatpush1.msra.mxu0 0.0
    %1427 = vmatprep.subr.mxu0 0.0
    %1428 = vmatpush1.msra.mxu0 0.0
    %1429 = vmatprep.subr.mxu0 0.0
    %1430 = vmatpush1.msra.mxu0 0.0
    %1431 = vmatprep.subr.mxu0 0.0
    %1432 = vmatpush1.msra.mxu0 0.0
    %1433 = vmatprep.subr.mxu0 0.0
    %1434 = vmatpush1.msra.mxu0 0.0
    %1435 = vmatprep.subr.mxu0 0.0
    %1436 = vmatpush1.msra.mxu0 0.0
    %1437 = vmatprep.subr.mxu0 0.0
    %1438 = vmatpush1.msra.mxu0 0.0
    %1439 = vmatprep.subr.mxu0 0.0
    %1440 = vmatpush1.msra.mxu0 0.0
    %1441 = vmatprep.subr.mxu0 0.0
    %1442 = vmatpush1.msra.mxu0 0.0
    %1443 = vmatprep.subr.mxu0 0.0
    %1444 = vmatpush1.msra.mxu0 0.0
    %1445 = vmatprep.subr.mxu0 0.0
    %1446 = vmatpush1.msra.mxu0 0.0
    %1447 = vmatprep.subr.mxu0 0.0
    %1448 = vmatpush1.msra.mxu0 0.0
    %1449 = vmatprep.subr.mxu0 0.0
    %1450 = vmatpush1.msra.mxu0 0.0
    %1451 = vmatprep.subr.mxu0 0.0
    %1452 = vmatpush1.msra.mxu0 0.0
    %1453 = vmatprep.subr.mxu0 0.0
    %1454 = vmatpush1.msra.mxu0 0.0
    %1455 = vmatprep.subr.mxu0 0.0
    %1456 = vmatpush1.msra.mxu0 0.0
    %1457 = vmatprep.subr.mxu0 0.0
    %1458 = vmatpush1.msra.mxu0 0.0
    %1459 = vmatprep.subr.mxu0 0.0
    %1460 = vmatpush1.msra.mxu0 0.0
    %1461 = vmatprep.subr.mxu0 0.0
    %1462 = vmatpush1.msra.mxu0 0.0
    %1463 = vmatprep.subr.mxu0 0.0
    %1464 = vmatpush1.msra.mxu0 0.0
    %1465 = vmatprep.subr.mxu0 0.0
    %1466 = vmatpush1.msra.mxu0 0.0
    %1467 = vmatprep.subr.mxu0 0.0
    %1468 = vmatpush1.msra.mxu0 0.0
    %1469 = vmatprep.subr.mxu0 0.0
    %1470 = vmatpush1.msra.mxu0 0.0
    %1471 = vmatprep.subr.mxu0 0.0
    %1472 = vmatpush1.msra.mxu0 0.0
    %1473 = vmatprep.mubr.f32.mxu0 0.0
    %1474 = vmatmul.mubr.f32.gmra.mrb[0].mxu0 %v1407
    %v1475 = vpop.f32.mrb[0].mxu0
    %v1476 = vadd.f32 0.0, %v1475
    %v1477 = vpop.f32.mrb[0].mxu0
    %1478 = vdwg.mxu0
    %1479 = vrot.lane.b32.xlu0 %v221, 40
    %v1480 = vpop.permute.xlu0 %1479
    %v1483 = vsel %vm239, %v1402, 0
    %1485 = vmatprep.subr.mxu0 0.0
    %1486 = vmatpush1.msra.mxu0 %v1480
    %1487 = vmatprep.subr.mxu0 0.0
    %1488 = vmatpush1.msra.mxu0 0.0
    %1489 = vmatprep.subr.mxu0 0.0
    %1490 = vmatpush1.msra.mxu0 0.0
    %1491 = vmatprep.subr.mxu0 0.0
    %1492 = vmatpush1.msra.mxu0 0.0
    %1493 = vmatprep.subr.mxu0 0.0
    %1494 = vmatpush1.msra.mxu0 0.0
    %1495 = vmatprep.subr.mxu0 0.0
    %1496 = vmatpush1.msra.mxu0 0.0
    %1497 = vmatprep.subr.mxu0 0.0
    %1498 = vmatpush1.msra.mxu0 0.0
    %1499 = vmatprep.subr.mxu0 0.0
    %1500 = vmatpush1.msra.mxu0 0.0
    %1501 = vmatprep.subr.mxu0 0.0
    %1502 = vmatpush1.msra.mxu0 0.0
    %1503 = vmatprep.subr.mxu0 0.0
    %1504 = vmatpush1.msra.mxu0 0.0
    %1505 = vmatprep.subr.mxu0 0.0
    %1506 = vmatpush1.msra.mxu0 0.0
    %1507 = vmatprep.subr.mxu0 0.0
    %1508 = vmatpush1.msra.mxu0 0.0
    %1509 = vmatprep.subr.mxu0 0.0
    %1510 = vmatpush1.msra.mxu0 0.0
    %1511 = vmatprep.subr.mxu0 0.0
    %1512 = vmatpush1.msra.mxu0 0.0
    %1513 = vmatprep.subr.mxu0 0.0
    %1514 = vmatpush1.msra.mxu0 0.0
    %1515 = vmatprep.subr.mxu0 0.0
    %1516 = vmatpush1.msra.mxu0 0.0
    %1517 = vmatprep.subr.mxu0 0.0
    %1518 = vmatpush1.msra.mxu0 0.0
    %1519 = vmatprep.subr.mxu0 0.0
    %1520 = vmatpush1.msra.mxu0 0.0
    %1521 = vmatprep.subr.mxu0 0.0
    %1522 = vmatpush1.msra.mxu0 0.0
    %1523 = vmatprep.subr.mxu0 0.0
    %1524 = vmatpush1.msra.mxu0 0.0
    %1525 = vmatprep.subr.mxu0 0.0
    %1526 = vmatpush1.msra.mxu0 0.0
    %1527 = vmatprep.subr.mxu0 0.0
    %1528 = vmatpush1.msra.mxu0 0.0
    %1529 = vmatprep.subr.mxu0 0.0
    %1530 = vmatpush1.msra.mxu0 0.0
    %1531 = vmatprep.subr.mxu0 0.0
    %1532 = vmatpush1.msra.mxu0 0.0
    %1533 = vmatprep.subr.mxu0 0.0
    %1534 = vmatpush1.msra.mxu0 0.0
    %1535 = vmatprep.subr.mxu0 0.0
    %1536 = vmatpush1.msra.mxu0 0.0
    %1537 = vmatprep.subr.mxu0 0.0
    %1538 = vmatpush1.msra.mxu0 0.0
    %1539 = vmatprep.subr.mxu0 0.0
    %1540 = vmatpush1.msra.mxu0 0.0
    %1541 = vmatprep.subr.mxu0 0.0
    %1542 = vmatpush1.msra.mxu0 0.0
    %1543 = vmatprep.subr.mxu0 0.0
    %1544 = vmatpush1.msra.mxu0 0.0
    %1545 = vmatprep.subr.mxu0 0.0
    %1546 = vmatpush1.msra.mxu0 0.0
    %1547 = vmatprep.subr.mxu0 0.0
    %1548 = vmatpush1.msra.mxu0 0.0
    %1549 = vmatprep.mubr.f32.mxu0 0.0
    %1550 = vmatmul.mubr.f32.gmra.mrb[0].mxu0 %v1483
    %v1551 = vpop.f32.mrb[0].mxu0
    %v1552 = vadd.f32 0.0, %v1551
    %v1553 = vpop.f32.mrb[0].mxu0
    %1554 = vdwg.mxu0
    %1557 = vrot.lane.b32.xlu0 %v816, 8
    %v1558 = vpop.permute.xlu0 %1557
    %1559 = vrot.lane.b32.xlu0 %v892, 8
    %v1560 = vpop.permute.xlu0 %1559
    %1565 = vrot.lane.b32.xlu0 %v1146, 16
    %v1566 = vpop.permute.xlu0 %1565
    %1567 = vrot.lane.b32.xlu0 %v1222, 16
    %v1568 = vpop.permute.xlu0 %1567
    %1573 = vrot.lane.b32.xlu0 %v1476, 24
    %v1574 = vpop.permute.xlu0 %1573
    %1575 = vrot.lane.b32.xlu0 %v1552, 24
    %v1576 = vpop.permute.xlu0 %1575
    %v1579 = vsel %vm239, %v486, %v1558
    %v1580 = vsel %vm239, %v562, %v1560
    %vm1581 = vcmask 130048
    %v1582 = vsel %vm1581, %v1579, %v1566
    %v1583 = vsel %vm1581, %v1580, %v1568
    %vm1584 = vcmask 195584
    %v1585 = vsel %vm1584, %v1582, %v1574
    %v1586 = vsel %vm1584, %v1583, %v1576
    %v1587 = vld [vmem:[%s11] sm:$0xff]
    %v1588 = vld [vmem:[%s11 + $0x8] sm:$0xff]
    %v1589 = vld [vmem:[%s11 + $0x10] sm:$0xff]
    %v1590 = vld [vmem:[%s11 + $0x18] sm:$0xff]
    %v1591 = vld [vmem:[%s13] sm:$0x1]
    %v1593 = vlaneseq
    %v1594 = vshrl.u32 %v1593, 7
    %v1595 = vsub.s32 0, %v1594
    %v1596 = vrot.slane %v1591, %v1595
    %v1599 = vsel %vm142, %v1585, 0
    %v1602 = vsel %vm142, %v1586, 0
    %1604 = vmatprep.subr.mxu0 0.0
    %1605 = vmatpush1.msra.mxu0 %v1587
    %1606 = vmatprep.subr.mxu0 0.0
    %1607 = vmatpush1.msra.mxu0 %v1588
    %1608 = vmatprep.subr.mxu0 0.0
    %1609 = vmatpush1.msra.mxu0 %v1589
    %1610 = vmatprep.subr.mxu0 0.0
    %1611 = vmatpush1.msra.mxu0 %v1590
    %1612 = vmatprep.subr.mxu0 0.0
    %1613 = vmatpush1.msra.mxu0 0.0
    %1614 = vmatprep.subr.mxu0 0.0
    %1615 = vmatpush1.msra.mxu0 0.0
    %1616 = vmatprep.subr.mxu0 0.0
    %1617 = vmatpush1.msra.mxu0 0.0
    %1618 = vmatprep.subr.mxu0 0.0
    %1619 = vmatpush1.msra.mxu0 0.0
    %1620 = vmatprep.subr.mxu0 0.0
    %1621 = vmatpush1.msra.mxu0 0.0
    %1622 = vmatprep.subr.mxu0 0.0
    %1623 = vmatpush1.msra.mxu0 0.0
    %1624 = vmatprep.subr.mxu0 0.0
    %1625 = vmatpush1.msra.mxu0 0.0
    %1626 = vmatprep.subr.mxu0 0.0
    %1627 = vmatpush1.msra.mxu0 0.0
    %1628 = vmatprep.subr.mxu0 0.0
    %1629 = vmatpush1.msra.mxu0 0.0
    %1630 = vmatprep.subr.mxu0 0.0
    %1631 = vmatpush1.msra.mxu0 0.0
    %1632 = vmatprep.subr.mxu0 0.0
    %1633 = vmatpush1.msra.mxu0 0.0
    %1634 = vmatprep.subr.mxu0 0.0
    %1635 = vmatpush1.msra.mxu0 0.0
    %1636 = vmatprep.subr.mxu0 0.0
    %1637 = vmatpush1.msra.mxu0 0.0
    %1638 = vmatprep.subr.mxu0 0.0
    %1639 = vmatpush1.msra.mxu0 0.0
    %1640 = vmatprep.subr.mxu0 0.0
    %1641 = vmatpush1.msra.mxu0 0.0
    %1642 = vmatprep.subr.mxu0 0.0
    %1643 = vmatpush1.msra.mxu0 0.0
    %1644 = vmatprep.subr.mxu0 0.0
    %1645 = vmatpush1.msra.mxu0 0.0
    %1646 = vmatprep.subr.mxu0 0.0
    %1647 = vmatpush1.msra.mxu0 0.0
    %1648 = vmatprep.subr.mxu0 0.0
    %1649 = vmatpush1.msra.mxu0 0.0
    %1650 = vmatprep.subr.mxu0 0.0
    %1651 = vmatpush1.msra.mxu0 0.0
    %1652 = vmatprep.subr.mxu0 0.0
    %1653 = vmatpush1.msra.mxu0 0.0
    %1654 = vmatprep.subr.mxu0 0.0
    %1655 = vmatpush1.msra.mxu0 0.0
    %1656 = vmatprep.subr.mxu0 0.0
    %1657 = vmatpush1.msra.mxu0 0.0
    %1658 = vmatprep.subr.mxu0 0.0
    %1659 = vmatpush1.msra.mxu0 0.0
    %1660 = vmatprep.subr.mxu0 0.0
    %1661 = vmatpush1.msra.mxu0 0.0
    %1662 = vmatprep.subr.mxu0 0.0
    %1663 = vmatpush1.msra.mxu0 0.0
    %1664 = vmatprep.subr.mxu0 0.0
    %1665 = vmatpush1.msra.mxu0 0.0
    %1666 = vmatprep.subr.mxu0 0.0
    %1667 = vmatpush1.msra.mxu0 0.0
    %1668 = vmatprep.mubr.f32.mxu0 0.0
    %1669 = vmatmul.mubr.f32.gmra.mrb[0].mxu0 %v1599
    %v1670 = vpop.f32.mrb[0].mxu0
    %v1671 = vadd.f32 %v1596, %v1670
    %v1672 = vpop.f32.mrb[0].mxu0
    %1673 = vmatprep.mubr.f32.mxu0 0.0
    %1674 = vmatmul.mubr.f32.gmra.mrb[0].mxu0 %v1602
    %v1675 = vpop.f32.mrb[0].mxu0
    %v1676 = vadd.f32 %v1596, %v1675
    %v1677 = vpop.f32.mrb[0].mxu0
    %1678 = vdwg.mxu0
    %v1679 = vadd.f32 %v127, %v1671
    %v1680 = vadd.f32 %v128, %v1676
    %v1681 = vld [vmem:[%s15] sm:$0x1]
    %v1682 = vld [vmem:[%s17] sm:$0x1]
    %v1683 = vsel %vm142, %v1679, 0.0
    %1684 = vadd.xlane.f32.xlu0 %v1683
    %v1685 = vpop.xlane.xlu0 %1684
    %v1686 = vsel %vm142, %v1680, 0.0
    %1687 = vadd.xlane.f32.xlu0 %v1686
    %v1688 = vpop.xlane.xlu0 %1687
    %v1689 = vrcp.pop 32.0
    %v1690 = vmul.f32 %v1685, %v1689
    %v1691 = vmul.f32 %v1688, %v1689
    %v1692 = vsub.f32 %v1679, %v1690
    %v1693 = vsub.f32 %v1680, %v1691
    %v1694 = vmul.f32 %v1692, %v1692
    %v1695 = vmul.f32 %v1693, %v1693
    %v1696 = vsel %vm142, %v1694, 0.0
    %1697 = vadd.xlane.f32.xlu0 %v1696
    %v1698 = vpop.xlane.xlu0 %1697
    %v1699 = vsel %vm142, %v1695, 0.0
    %1700 = vadd.xlane.f32.xlu0 %v1699
    %v1701 = vpop.xlane.xlu0 %1700
    %v1702 = vmul.f32 %v1698, %v1689
    %v1703 = vmul.f32 %v1701, %v1689
    %v1704 = vadd.f32 %v1702, 1e-12
    %v1705 = vadd.f32 %v1703, 1e-12
    %v1706 = vrsqrt.pop %v1704
    %v1707 = vrsqrt.pop %v1705
    %v1708 = vmul.f32 %v1692, %v1706
    %v1709 = vmul.f32 %v1693, %v1707
    %v1711 = vlaneseq
    %v1712 = vshrl.u32 %v1711, 7
    %v1713 = vsub.s32 0, %v1712
    %v1714 = vrot.slane %v1681, %v1713
    %v1716 = vmul.f32 %v1708, %v1714
    %v1717 = vmul.f32 %v1709, %v1714
    %v1719 = vlaneseq
    %v1720 = vshrl.u32 %v1719, 7
    %v1721 = vsub.s32 0, %v1720
    %v1722 = vrot.slane %v1682, %v1721
    %v1724 = vadd.f32 %v1716, %v1722
    %v1725 = vadd.f32 %v1717, %v1722
    %v1726 = vld [vmem:[%s19] sm:$0xff]
    %v1727 = vld [vmem:[%s19 + $0x8] sm:$0xff]
    %v1728 = vld [vmem:[%s19 + $0x10] sm:$0xff]
    %v1729 = vld [vmem:[%s19 + $0x18] sm:$0xff]
    %v1730 = vld [vmem:[%s21] sm:$0x1]
    %v1732 = vlaneseq
    %v1733 = vshrl.u32 %v1732, 7
    %v1734 = vsub.s32 0, %v1733
    %v1735 = vrot.slane %v1730, %v1734
    %v1738 = vsel %vm142, %v1724, 0
    %v1741 = vsel %vm142, %v1725, 0
    %1743 = vmatprep.subr.mxu0 0.0
    %1744 = vmatpush1.msra.mxu0 %v1726
    %1745 = vmatprep.subr.mxu0 0.0
    %1746 = vmatpush1.msra.mxu0 %v1727
    %1747 = vmatprep.subr.mxu0 0.0
    %1748 = vmatpush1.msra.mxu0 %v1728
    %1749 = vmatprep.subr.mxu0 0.0
    %1750 = vmatpush1.msra.mxu0 %v1729
    %1751 = vmatprep.subr.mxu0 0.0
    %1752 = vmatpush1.msra.mxu0 0.0
    %1753 = vmatprep.subr.mxu0 0.0
    %1754 = vmatpush1.msra.mxu0 0.0
    %1755 = vmatprep.subr.mxu0 0.0
    %1756 = vmatpush1.msra.mxu0 0.0
    %1757 = vmatprep.subr.mxu0 0.0
    %1758 = vmatpush1.msra.mxu0 0.0
    %1759 = vmatprep.subr.mxu0 0.0
    %1760 = vmatpush1.msra.mxu0 0.0
    %1761 = vmatprep.subr.mxu0 0.0
    %1762 = vmatpush1.msra.mxu0 0.0
    %1763 = vmatprep.subr.mxu0 0.0
    %1764 = vmatpush1.msra.mxu0 0.0
    %1765 = vmatprep.subr.mxu0 0.0
    %1766 = vmatpush1.msra.mxu0 0.0
    %1767 = vmatprep.subr.mxu0 0.0
    %1768 = vmatpush1.msra.mxu0 0.0
    %1769 = vmatprep.subr.mxu0 0.0
    %1770 = vmatpush1.msra.mxu0 0.0
    %1771 = vmatprep.subr.mxu0 0.0
    %1772 = vmatpush1.msra.mxu0 0.0
    %1773 = vmatprep.subr.mxu0 0.0
    %1774 = vmatpush1.msra.mxu0 0.0
    %1775 = vmatprep.subr.mxu0 0.0
    %1776 = vmatpush1.msra.mxu0 0.0
    %1777 = vmatprep.subr.mxu0 0.0
    %1778 = vmatpush1.msra.mxu0 0.0
    %1779 = vmatprep.subr.mxu0 0.0
    %1780 = vmatpush1.msra.mxu0 0.0
    %1781 = vmatprep.subr.mxu0 0.0
    %1782 = vmatpush1.msra.mxu0 0.0
    %1783 = vmatprep.subr.mxu0 0.0
    %1784 = vmatpush1.msra.mxu0 0.0
    %1785 = vmatprep.subr.mxu0 0.0
    %1786 = vmatpush1.msra.mxu0 0.0
    %1787 = vmatprep.subr.mxu0 0.0
    %1788 = vmatpush1.msra.mxu0 0.0
    %1789 = vmatprep.subr.mxu0 0.0
    %1790 = vmatpush1.msra.mxu0 0.0
    %1791 = vmatprep.subr.mxu0 0.0
    %1792 = vmatpush1.msra.mxu0 0.0
    %1793 = vmatprep.subr.mxu0 0.0
    %1794 = vmatpush1.msra.mxu0 0.0
    %1795 = vmatprep.subr.mxu0 0.0
    %1796 = vmatpush1.msra.mxu0 0.0
    %1797 = vmatprep.subr.mxu0 0.0
    %1798 = vmatpush1.msra.mxu0 0.0
    %1799 = vmatprep.subr.mxu0 0.0
    %1800 = vmatpush1.msra.mxu0 0.0
    %1801 = vmatprep.subr.mxu0 0.0
    %1802 = vmatpush1.msra.mxu0 0.0
    %1803 = vmatprep.subr.mxu0 0.0
    %1804 = vmatpush1.msra.mxu0 0.0
    %1805 = vmatprep.subr.mxu0 0.0
    %1806 = vmatpush1.msra.mxu0 0.0
    %1807 = vmatprep.mubr.f32.mxu0 0.0
    %1808 = vmatmul.mubr.f32.gmra.mrb[0].mxu0 %v1738
    %v1809 = vpop.f32.mrb[0].mxu0
    %v1810 = vadd.f32 %v1735, %v1809
    %v1811 = vpop.f32.mrb[0].mxu0
    %1812 = vmatprep.mubr.f32.mxu0 0.0
    %1813 = vmatmul.mubr.f32.gmra.mrb[0].mxu0 %v1741
    %v1814 = vpop.f32.mrb[0].mxu0
    %v1815 = vadd.f32 %v1735, %v1814
    %v1816 = vpop.f32.mrb[0].mxu0
    %1817 = vdwg.mxu0
    %v1818 = vmul.f32 %v1810, %v1810
    %v1819 = vmul.f32 %v1815, %v1815
    %v1820 = vmul.f32 %v1810, %v1818
    %v1821 = vmul.f32 %v1815, %v1819
    %v1822 = vmul.f32 %v1820, 0.044715
    %v1823 = vmul.f32 %v1821, 0.044715
    %v1824 = vadd.f32 %v1810, %v1822
    %v1825 = vadd.f32 %v1815, %v1823
    %v1826 = vmul.f32 %v1824, 0.7978846
    %v1827 = vmul.f32 %v1825, 0.7978846
    %v1828 = vtanh.pop %v1826
    %v1829 = vtanh.pop %v1827
    %v1830 = vadd.f32 %v1828, 1.0
    %v1831 = vadd.f32 %v1829, 1.0
    %v1832 = vmul.f32 %v1830, 0.5
    %v1833 = vmul.f32 %v1831, 0.5
    %v1834 = vmul.f32 %v1810, %v1832
    %v1835 = vmul.f32 %v1815, %v1833
    %v1836 = vld [vmem:[%s23] sm:$0xff]
    %v1837 = vld [vmem:[%s23 + $0x8] sm:$0xff]
    %v1838 = vld [vmem:[%s23 + $0x10] sm:$0xff]
    %v1839 = vld [vmem:[%s23 + $0x18] sm:$0xff]
    %v1840 = vld [vmem:[%s23 + $0x20] sm:$0xff]
    %v1841 = vld [vmem:[%s23 + $0x28] sm:$0xff]
    %v1842 = vld [vmem:[%s23 + $0x30] sm:$0xff]
    %v1843 = vld [vmem:[%s23 + $0x38] sm:$0xff]
    %v1844 = vld [vmem:[%s25] sm:$0x1]
    %v1846 = vlaneseq
    %v1847 = vshrl.u32 %v1846, 7
    %v1848 = vsub.s32 0, %v1847
    %v1849 = vrot.slane %v1844, %v1848
    %vm1851 = vcmask 523264
    %v1853 = vsel %vm1851, %v1834, 0
    %v1856 = vsel %vm1851, %v1835, 0
    %1858 = vmatprep.subr.mxu0 0.0
    %1859 = vmatpush1.msra.mxu0 %v1836
    %1860 = vmatprep.subr.mxu0 0.0
    %1861 = vmatpush1.msra.mxu0 %v1837
    %1862 = vmatprep.subr.mxu0 0.0
    %1863 = vmatpush1.msra.mxu0 %v1838
    %1864 = vmatprep.subr.mxu0 0.0
    %1865 = vmatpush1.msra.mxu0 %v1839
    %1866 = vmatprep.subr.mxu0 0.0
    %1867 = vmatpush1.msra.mxu0 %v1840
    %1868 = vmatprep.subr.mxu0 0.0
    %1869 = vmatpush1.msra.mxu0 %v1841
    %1870 = vmatprep.subr.mxu0 0.0
    %1871 = vmatpush1.msra.mxu0 %v1842
    %1872 = vmatprep.subr.mxu0 0.0
    %1873 = vmatpush1.msra.mxu0 %v1843
    %1874 = vmatprep.subr.mxu0 0.0
    %1875 = vmatpush1.msra.mxu0 0.0
    %1876 = vmatprep.subr.mxu0 0.0
    %1877 = vmatpush1.msra.mxu0 0.0
    %1878 = vmatprep.subr.mxu0 0.0
    %1879 = vmatpush1.msra.mxu0 0.0
    %1880 = vmatprep.subr.mxu0 0.0
    %1881 = vmatpush1.msra.mxu0 0.0
    %1882 = vmatprep.subr.mxu0 0.0
    %1883 = vmatpush1.msra.mxu0 0.0
    %1884 = vmatprep.subr.mxu0 0.0
    %1885 = vmatpush1.msra.mxu0 0.0
    %1886 = vmatprep.subr.mxu0 0.0
    %1887 = vmatpush1.msra.mxu0 0.0
    %1888 = vmatprep.subr.mxu0 0.0
    %1889 = vmatpush1.msra.mxu0 0.0
    %1890 = vmatprep.subr.mxu0 0.0
    %1891 = vmatpush1.msra.mxu0 0.0
    %1892 = vmatprep.subr.mxu0 0.0
    %1893 = vmatpush1.msra.mxu0 0.0
    %1894 = vmatprep.subr.mxu0 0.0
    %1895 = vmatpush1.msra.mxu0 0.0
    %1896 = vmatprep.subr.mxu0 0.0
    %1897 = vmatpush1.msra.mxu0 0.0
    %1898 = vmatprep.subr.mxu0 0.0
    %1899 = vmatpush1.msra.mxu0 0.0
    %1900 = vmatprep.subr.mxu0 0.0
    %1901 = vmatpush1.msra.mxu0 0.0
    %1902 = vmatprep.subr.mxu0 0.0
    %1903 = vmatpush1.msra.mxu0 0.0
    %1904 = vmatprep.subr.mxu0 0.0
    %1905 = vmatpush1.msra.mxu0 0.0
    %1906 = vmatprep.subr.mxu0 0.0
    %1907 = vmatpush1.msra.mxu0 0.0
    %1908 = vmatprep.subr.mxu0 0.0
    %1909 = vmatpush1.msra.mxu0 0.0
    %1910 = vmatprep.subr.mxu0 0.0
    %1911 = vmatpush1.msra.mxu0 0.0
    %1912 = vmatprep.subr.mxu0 0.0
    %1913 = vmatpush1.msra.mxu0 0.0
    %1914 = vmatprep.subr.mxu0 0.0
    %1915 = vmatpush1.msra.mxu0 0.0
    %1916 = vmatprep.subr.mxu0 0.0
    %1917 = vmatpush1.msra.mxu0 0.0
    %1918 = vmatprep.subr.mxu0 0.0
    %1919 = vmatpush1.msra.mxu0 0.0
    %1920 = vmatprep.subr.mxu0 0.0
    %1921 = vmatpush1.msra.mxu0 0.0
    %1922 = vmatprep.mubr.f32.mxu0 0.0
    %1923 = vmatmul.mubr.f32.gmra.mrb[0].mxu0 %v1853
    %v1924 = vpop.f32.mrb[0].mxu0
    %v1925 = vadd.f32 %v1849, %v1924
    %v1926 = vpop.f32.mrb[0].mxu0
    %1927 = vmatprep.mubr.f32.mxu0 0.0
    %1928 = vmatmul.mubr.f32.gmra.mrb[0].mxu0 %v1856
    %v1929 = vpop.f32.mrb[0].mxu0
    %v1930 = vadd.f32 %v1849, %v1929
    %v1931 = vpop.f32.mrb[0].mxu0
    %1932 = vdwg.mxu0
    %v1933 = vadd.f32 %v1724, %v1925
    %v1934 = vadd.f32 %v1725, %v1930
    %v1935 = vld [vmem:[%s27] sm:$0x1]
    %v1936 = vld [vmem:[%s29] sm:$0x1]
    %v1937 = vsel %vm142, %v1933, 0.0
    %1938 = vadd.xlane.f32.xlu0 %v1937
    %v1939 = vpop.xlane.xlu0 %1938
    %v1940 = vsel %vm142, %v1934, 0.0
    %1941 = vadd.xlane.f32.xlu0 %v1940
    %v1942 = vpop.xlane.xlu0 %1941
    %v1943 = vmul.f32 %v1939, %v1689
    %v1944 = vmul.f32 %v1942, %v1689
    %v1945 = vsub.f32 %v1933, %v1943
    %v1946 = vsub.f32 %v1934, %v1944
    %v1947 = vmul.f32 %v1945, %v1945
    %v1948 = vmul.f32 %v1946, %v1946
    %v1949 = vsel %vm142, %v1947, 0.0
    %1950 = vadd.xlane.f32.xlu0 %v1949
    %v1951 = vpop.xlane.xlu0 %1950
    %v1952 = vsel %vm142, %v1948, 0.0
    %1953 = vadd.xlane.f32.xlu0 %v1952
    %v1954 = vpop.xlane.xlu0 %1953
    %v1955 = vmul.f32 %v1951, %v1689
    %v1956 = vmul.f32 %v1954, %v1689
    %v1957 = vadd.f32 %v1955, 1e-12
    %v1958 = vadd.f32 %v1956, 1e-12
    %v1959 = vrsqrt.pop %v1957
    %v1960 = vrsqrt.pop %v1958
    %v1961 = vmul.f32 %v1945, %v1959
    %v1962 = vmul.f32 %v1946, %v1960
    %v1964 = vlaneseq
    %v1965 = vshrl.u32 %v1964, 7
    %v1966 = vsub.s32 0, %v1965
    %v1967 = vrot.slane %v1935, %v1966
    %v1969 = vmul.f32 %v1961, %v1967
    %v1970 = vmul.f32 %v1962, %v1967
    %v1972 = vlaneseq
    %v1973 = vshrl.u32 %v1972, 7
    %v1974 = vsub.s32 0, %v1973
    %v1975 = vrot.slane %v1936, %v1974
    %v1977 = vadd.f32 %v1969, %v1975
    %v1978 = vadd.f32 %v1970, %v1975
    %s1979 = scalar_lea.vmem %s7, 32
    %v1980 = vld [vmem:[%s1979] sm:$0xff]
    %v1981 = vld [vmem:[%s1979 + $0x8] sm:$0xff]
    %v1982 = vld [vmem:[%s1979 + $0x10] sm:$0xff]
    %v1983 = vld [vmem:[%s1979 + $0x18] sm:$0xff]
    %s1984 = scalar_lea.vmem %s9, 1
    %v1985 = vld [vmem:[%s1984] sm:$0x1]
    %v1987 = vlaneseq
    %v1988 = vshrl.u32 %v1987, 7
    %v1989 = vsub.s32 0, %v1988
    %v1990 = vrot.slane %v1985, %v1989
    %v1993 = vsel %vm142, %v1977, 0
    %v1996 = vsel %vm142, %v1978, 0
    %1998 = vmatprep.subr.mxu0 0.0
    %1999 = vmatpush1.msra.mxu0 %v1980
    %2000 = vmatprep.subr.mxu0 0.0
    %2001 = vmatpush1.msra.mxu0 %v1981
    %2002 = vmatprep.subr.mxu0 0.0
    %2003 = vmatpush1.msra.mxu0 %v1982
    %2004 = vmatprep.subr.mxu0 0.0
    %2005 = vmatpush1.msra.mxu0 %v1983
    %2006 = vmatprep.subr.mxu0 0.0
    %2007 = vmatpush1.msra.mxu0 0.0
    %2008 = vmatprep.subr.mxu0 0.0
    %2009 = vmatpush1.msra.mxu0 0.0
    %2010 = vmatprep.subr.mxu0 0.0
    %2011 = vmatpush1.msra.mxu0 0.0
    %2012 = vmatprep.subr.mxu0 0.0
    %2013 = vmatpush1.msra.mxu0 0.0
    %2014 = vmatprep.subr.mxu0 0.0
    %2015 = vmatpush1.msra.mxu0 0.0
    %2016 = vmatprep.subr.mxu0 0.0
    %2017 = vmatpush1.msra.mxu0 0.0
    %2018 = vmatprep.subr.mxu0 0.0
    %2019 = vmatpush1.msra.mxu0 0.0
    %2020 = vmatprep.subr.mxu0 0.0
    %2021 = vmatpush1.msra.mxu0 0.0
    %2022 = vmatprep.subr.mxu0 0.0
    %2023 = vmatpush1.msra.mxu0 0.0
    %2024 = vmatprep.subr.mxu0 0.0
    %2025 = vmatpush1.msra.mxu0 0.0
    %2026 = vmatprep.subr.mxu0 0.0
    %2027 = vmatpush1.msra.mxu0 0.0
    %2028 = vmatprep.subr.mxu0 0.0
    %2029 = vmatpush1.msra.mxu0 0.0
    %2030 = vmatprep.subr.mxu0 0.0
    %2031 = vmatpush1.msra.mxu0 0.0
    %2032 = vmatprep.subr.mxu0 0.0
    %2033 = vmatpush1.msra.mxu0 0.0
    %2034 = vmatprep.subr.mxu0 0.0
    %2035 = vmatpush1.msra.mxu0 0.0
    %2036 = vmatprep.subr.mxu0 0.0
    %2037 = vmatpush1.msra.mxu0 0.0
    %2038 = vmatprep.subr.mxu0 0.0
    %2039 = vmatpush1.msra.mxu0 0.0
    %2040 = vmatprep.subr.mxu0 0.0
    %2041 = vmatpush1.msra.mxu0 0.0
    %2042 = vmatprep.subr.mxu0 0.0
    %2043 = vmatpush1.msra.mxu0 0.0
    %2044 = vmatprep.subr.mxu0 0.0
    %2045 = vmatpush1.msra.mxu0 0.0
    %2046 = vmatprep.subr.mxu0 0.0
    %2047 = vmatpush1.msra.mxu0 0.0
    %2048 = vmatprep.subr.mxu0 0.0
    %2049 = vmatpush1.msra.mxu0 0.0
    %2050 = vmatprep.subr.mxu0 0.0
    %2051 = vmatpush1.msra.mxu0 0.0
    %2052 = vmatprep.subr.mxu0 0.0
    %2053 = vmatpush1.msra.mxu0 0.0
    %2054 = vmatprep.subr.mxu0 0.0
    %2055 = vmatpush1.msra.mxu0 0.0
    %2056 = vmatprep.subr.mxu0 0.0
    %2057 = vmatpush1.msra.mxu0 0.0
    %2058 = vmatprep.subr.mxu0 0.0
    %2059 = vmatpush1.msra.mxu0 0.0
    %2060 = vmatprep.subr.mxu0 0.0
    %2061 = vmatpush1.msra.mxu0 0.0
    %2062 = vmatprep.mubr.f32.mxu0 0.0
    %2063 = vmatmul.mubr.f32.gmra.mrb[0].mxu0 %v1993
    %v2064 = vpop.f32.mrb[0].mxu0
    %v2065 = vadd.f32 %v1990, %v2064
    %v2066 = vpop.f32.mrb[0].mxu0
    %2067 = vmatprep.mubr.f32.mxu0 0.0
    %2068 = vmatmul.mubr.f32.gmra.mrb[0].mxu0 %v1996
    %v2069 = vpop.f32.mrb[0].mxu0
    %v2070 = vadd.f32 %v1990, %v2069
    %v2071 = vpop.f32.mrb[0].mxu0
    %2072 = vdwg.mxu0
    %2074 = vrot.lane.b32.xlu0 %v2065, 96
    %v2075 = vpop.permute.xlu0 %2074
    %v2076 = vsel %vm239, %v2065, 0
    %v2078 = vsel %vm239, %v2075, 0
    %2080 = vmatprep.subr.mxu0 0.0
    %2081 = vmatpush1.xpose.msra.mxu0 %v2078
    %2082 = vmatprep.subr.mxu0 0.0
    %2083 = vmatpush1.xpose.msra.mxu0 0.0
    %2084 = vmatprep.subr.mxu0 0.0
    %2085 = vmatpush1.xpose.msra.mxu0 0.0
    %2086 = vmatprep.subr.mxu0 0.0
    %2087 = vmatpush1.xpose.msra.mxu0 0.0
    %2088 = vmatprep.subr.mxu0 0.0
    %2089 = vmatpush1.xpose.msra.mxu0 0.0
    %2090 = vmatprep.subr.mxu0 0.0
    %2091 = vmatpush1.xpose.msra.mxu0 0.0
    %2092 = vmatprep.subr.mxu0 0.0
    %2093 = vmatpush1.xpose.msra.mxu0 0.0
    %2094 = vmatprep.subr.mxu0 0.0
    %2095 = vmatpush1.xpose.msra.mxu0 0.0
    %2096 = vmatprep.subr.mxu0 0.0
    %2097 = vmatpush1.xpose.msra.mxu0 0.0
    %2098 = vmatprep.subr.mxu0 0.0
    %2099 = vmatpush1.xpose.msra.mxu0 0.0
    %2100 = vmatprep.subr.mxu0 0.0
    %2101 = vmatpush1.xpose.msra.mxu0 0.0
    %2102 = vmatprep.subr.mxu0 0.0
    %2103 = vmatpush1.xpose.msra.mxu0 0.0
    %2104 = vmatprep.subr.mxu0 0.0
    %2105 = vmatpush1.xpose.msra.mxu0 0.0
    %2106 = vmatprep.subr.mxu0 0.0
    %2107 = vmatpush1.xpose.msra.mxu0 0.0
    %2108 = vmatprep.subr.mxu0 0.0
    %2109 = vmatpush1.xpose.msra.mxu0 0.0
    %2110 = vmatprep.subr.mxu0 0.0
    %2111 = vmatpush1.xpose.msra.mxu0 0.0
    %2112 = vmatprep.subr.mxu0 0.0
    %2113 = vmatpush1.xpose.msra.mxu0 0.0
    %2114 = vmatprep.subr.mxu0 0.0
    %2115 = vmatpush1.xpose.msra.mxu0 0.0
    %2116 = vmatprep.subr.mxu0 0.0
    %2117 = vmatpush1.xpose.msra.mxu0 0.0
    %2118 = vmatprep.subr.mxu0 0.0
    %2119 = vmatpush1.xpose.msra.mxu0 0.0
    %2120 = vmatprep.subr.mxu0 0.0
    %2121 = vmatpush1.xpose.msra.mxu0 0.0
    %2122 = vmatprep.subr.mxu0 0.0
    %2123 = vmatpush1.xpose.msra.mxu0 0.0
    %2124 = vmatprep.subr.mxu0 0.0
    %2125 = vmatpush1.xpose.msra.mxu0 0.0
    %2126 = vmatprep.subr.mxu0 0.0
    %2127 = vmatpush1.xpose.msra.mxu0 0.0
    %2128 = vmatprep.subr.mxu0 0.0
    %2129 = vmatpush1.xpose.msra.mxu0 0.0
    %2130 = vmatprep.subr.mxu0 0.0
    %2131 = vmatpush1.xpose.msra.mxu0 0.0
    %2132 = vmatprep.subr.mxu0 0.0
    %2133 = vmatpush1.xpose.msra.mxu0 0.0
    %2134 = vmatprep.subr.mxu0 0.0
    %2135 = vmatpush1.xpose.msra.mxu0 0.0
    %2136 = vmatprep.subr.mxu0 0.0
    %2137 = vmatpush1.xpose.msra.mxu0 0.0
    %2138 = vmatprep.subr.mxu0 0.0
    %2139 = vmatpush1.xpose.msra.mxu0 0.0
    %2140 = vmatprep.subr.mxu0 0.0
    %2141 = vmatpush1.xpose.msra.mxu0 0.0
    %2142 = vmatprep.subr.mxu0 0.0
    %2143 = vmatpush1.xpose.msra.mxu0 0.0
    %2144 = vmatprep.mubr.f32.mxu0 0.0
    %2145 = vmatmul.mubr.f32.gmra.mrb[0].mxu0 %v2076
    %v2146 = vpop.f32.mrb[0].mxu0
    %v2147 = vadd.f32 %v229, %v2146
    %v2148 = vpop.f32.mrb[0].mxu0
    %2149 = vdwg.mxu0
    %2151 = vrot.lane.b32.xlu0 %v2070, 96
    %v2152 = vpop.permute.xlu0 %2151
    %v2153 = vsel %vm239, %v2070, 0
    %v2155 = vsel %vm239, %v2152, 0
    %2157 = vmatprep.subr.mxu0 0.0
    %2158 = vmatpush1.xpose.msra.mxu0 %v2155
    %2159 = vmatprep.subr.mxu0 0.0
    %2160 = vmatpush1.xpose.msra.mxu0 0.0
    %2161 = vmatprep.subr.mxu0 0.0
    %2162 = vmatpush1.xpose.msra.mxu0 0.0
    %2163 = vmatprep.subr.mxu0 0.0
    %2164 = vmatpush1.xpose.msra.mxu0 0.0
    %2165 = vmatprep.subr.mxu0 0.0
    %2166 = vmatpush1.xpose.msra.mxu0 0.0
    %2167 = vmatprep.subr.mxu0 0.0
    %2168 = vmatpush1.xpose.msra.mxu0 0.0
    %2169 = vmatprep.subr.mxu0 0.0
    %2170 = vmatpush1.xpose.msra.mxu0 0.0
    %2171 = vmatprep.subr.mxu0 0.0
    %2172 = vmatpush1.xpose.msra.mxu0 0.0
    %2173 = vmatprep.subr.mxu0 0.0
    %2174 = vmatpush1.xpose.msra.mxu0 0.0
    %2175 = vmatprep.subr.mxu0 0.0
    %2176 = vmatpush1.xpose.msra.mxu0 0.0
    %2177 = vmatprep.subr.mxu0 0.0
    %2178 = vmatpush1.xpose.msra.mxu0 0.0
    %2179 = vmatprep.subr.mxu0 0.0
    %2180 = vmatpush1.xpose.msra.mxu0 0.0
    %2181 = vmatprep.subr.mxu0 0.0
    %2182 = vmatpush1.xpose.msra.mxu0 0.0
    %2183 = vmatprep.subr.mxu0 0.0
    %2184 = vmatpush1.xpose.msra.mxu0 0.0
    %2185 = vmatprep.subr.mxu0 0.0
    %2186 = vmatpush1.xpose.msra.mxu0 0.0
    %2187 = vmatprep.subr.mxu0 0.0
    %2188 = vmatpush1.xpose.msra.mxu0 0.0
    %2189 = vmatprep.subr.mxu0 0.0
    %2190 = vmatpush1.xpose.msra.mxu0 0.0
    %2191 = vmatprep.subr.mxu0 0.0
    %2192 = vmatpush1.xpose.msra.mxu0 0.0
    %2193 = vmatprep.subr.mxu0 0.0
    %2194 = vmatpush1.xpose.msra.mxu0 0.0
    %2195 = vmatprep.subr.mxu0 0.0
    %2196 = vmatpush1.xpose.msra.mxu0 0.0
    %2197 = vmatprep.subr.mxu0 0.0
    %2198 = vmatpush1.xpose.msra.mxu0 0.0
    %2199 = vmatprep.subr.mxu0 0.0
    %2200 = vmatpush1.xpose.msra.mxu0 0.0
    %2201 = vmatprep.subr.mxu0 0.0
    %2202 = vmatpush1.xpose.msra.mxu0 0.0
    %2203 = vmatprep.subr.mxu0 0.0
    %2204 = vmatpush1.xpose.msra.mxu0 0.0
    %2205 = vmatprep.subr.mxu0 0.0
    %2206 = vmatpush1.xpose.msra.mxu0 0.0
    %2207 = vmatprep.subr.mxu0 0.0
    %2208 = vmatpush1.xpose.msra.mxu0 0.0
    %2209 = vmatprep.subr.mxu0 0.0
    %2210 = vmatpush1.xpose.msra.mxu0 0.0
    %2211 = vmatprep.subr.mxu0 0.0
    %2212 = vmatpush1.xpose.msra.mxu0 0.0
    %2213 = vmatprep.subr.mxu0 0.0
    %2214 = vmatpush1.xpose.msra.mxu0 0.0
    %2215 = vmatprep.subr.mxu0 0.0
    %2216 = vmatpush1.xpose.msra.mxu0 0.0
    %2217 = vmatprep.subr.mxu0 0.0
    %2218 = vmatpush1.xpose.msra.mxu0 0.0
    %2219 = vmatprep.subr.mxu0 0.0
    %2220 = vmatpush1.xpose.msra.mxu0 0.0
    %2221 = vmatprep.mubr.f32.mxu0 0.0
    %2222 = vmatmul.mubr.f32.gmra.mrb[0].mxu0 %v2153
    %v2223 = vpop.f32.mrb[0].mxu0
    %v2224 = vadd.f32 %v233, %v2223
    %v2225 = vpop.f32.mrb[0].mxu0
    %2226 = vdwg.mxu0
    %v2227 = vsel %vm239, %v2147, -inf
    %2228 = vmax.xlane.f32.xlu0 %v2227
    %v2229 = vpop.xlane.xlu0 %2228
    %v2230 = vsel %vm239, %v2224, -inf
    %2231 = vmax.xlane.f32.xlu0 %v2230
    %v2232 = vpop.xlane.xlu0 %2231
    %v2233 = vsub.f32 %v2147, %v2229
    %v2234 = vsub.f32 %v2224, %v2232
    %v2235 = vmul.f32 %v2233, 1.442695
    %v2236 = vpow.pop %v2235
    %v2237 = vmul.f32 %v2234, 1.442695
    %v2238 = vpow.pop %v2237
    %v2239 = vsel %vm239, %v2236, 0.0
    %2240 = vadd.xlane.f32.xlu0 %v2239
    %v2241 = vpop.xlane.xlu0 %2240
    %v2242 = vsel %vm239, %v2238, 0.0
    %2243 = vadd.xlane.f32.xlu0 %v2242
    %v2244 = vpop.xlane.xlu0 %2243
    %v2245 = vrcp.pop %v2241
    %v2246 = vrcp.pop %v2244
    %v2247 = vmul.f32 %v2236, %v2245
    %v2248 = vmul.f32 %v2238, %v2246
    %2249 = vrot.lane.b32.xlu0 %v2065, 64
    %v2250 = vpop.permute.xlu0 %2249
    %v2253 = vsel %vm239, %v2247, 0
    %2255 = vmatprep.subr.mxu0 0.0
    %2256 = vmatpush1.msra.mxu0 %v2250
    %2257 = vmatprep.subr.mxu0 0.0
    %2258 = vmatpush1.msra.mxu0 0.0
    %2259 = vmatprep.subr.mxu0 0.0
    %2260 = vmatpush1.msra.mxu0 0.0
    %2261 = vmatprep.subr.mxu0 0.0
    %2262 = vmatpush1.msra.mxu0 0.0
    %2263 = vmatprep.subr.mxu0 0.0
    %2264 = vmatpush1.msra.mxu0 0.0
    %2265 = vmatprep.subr.mxu0 0.0
    %2266 = vmatpush1.msra.mxu0 0.0
    %2267 = vmatprep.subr.mxu0 0.0
    %2268 = vmatpush1.msra.mxu0 0.0
    %2269 = vmatprep.subr.mxu0 0.0
    %2270 = vmatpush1.msra.mxu0 0.0
    %2271 = vmatprep.subr.mxu0 0.0
    %2272 = vmatpush1.msra.mxu0 0.0
    %2273 = vmatprep.subr.mxu0 0.0
    %2274 = vmatpush1.msra.mxu0 0.0
    %2275 = vmatprep.subr.mxu0 0.0
    %2276 = vmatpush1.msra.mxu0 0.0
    %2277 = vmatprep.subr.mxu0 0.0
    %2278 = vmatpush1.msra.mxu0 0.0
    %2279 = vmatprep.subr.mxu0 0.0
    %2280 = vmatpush1.msra.mxu0 0.0
    %2281 = vmatprep.subr.mxu0 0.0
    %2282 = vmatpush1.msra.mxu0 0.0
    %2283 = vmatprep.subr.mxu0 0.0
    %2284 = vmatpush1.msra.mxu0 0.0
    %2285 = vmatprep.subr.mxu0 0.0
    %2286 = vmatpush1.msra.mxu0 0.0
    %2287 = vmatprep.subr.mxu0 0.0
    %2288 = vmatpush1.msra.mxu0 0.0
    %2289 = vmatprep.subr.mxu0 0.0
    %2290 = vmatpush1.msra.mxu0 0.0
    %2291 = vmatprep.subr.mxu0 0.0
    %2292 = vmatpush1.msra.mxu0 0.0
    %2293 = vmatprep.subr.mxu0 0.0
    %2294 = vmatpush1.msra.mxu0 0.0
    %2295 = vmatprep.subr.mxu0 0.0
    %2296 = vmatpush1.msra.mxu0 0.0
    %2297 = vmatprep.subr.mxu0 0.0
    %2298 = vmatpush1.msra.mxu0 0.0
    %2299 = vmatprep.subr.mxu0 0.0
    %2300 = vmatpush1.msra.mxu0 0.0
    %2301 = vmatprep.subr.mxu0 0.0
    %2302 = vmatpush1.msra.mxu0 0.0
    %2303 = vmatprep.subr.mxu0 0.0
    %2304 = vmatpush1.msra.mxu0 0.0
    %2305 = vmatprep.subr.mxu0 0.0
    %2306 = vmatpush1.msra.mxu0 0.0
    %2307 = vmatprep.subr.mxu0 0.0
    %2308 = vmatpush1.msra.mxu0 0.0
    %2309 = vmatprep.subr.mxu0 0.0
    %2310 = vmatpush1.msra.mxu0 0.0
    %2311 = vmatprep.subr.mxu0 0.0
    %2312 = vmatpush1.msra.mxu0 0.0
    %2313 = vmatprep.subr.mxu0 0.0
    %2314 = vmatpush1.msra.mxu0 0.0
    %2315 = vmatprep.subr.mxu0 0.0
    %2316 = vmatpush1.msra.mxu0 0.0
    %2317 = vmatprep.subr.mxu0 0.0
    %2318 = vmatpush1.msra.mxu0 0.0
    %2319 = vmatprep.mubr.f32.mxu0 0.0
    %2320 = vmatmul.mubr.f32.gmra.mrb[0].mxu0 %v2253
    %v2321 = vpop.f32.mrb[0].mxu0
    %v2322 = vadd.f32 0.0, %v2321
    %v2323 = vpop.f32.mrb[0].mxu0
    %2324 = vdwg.mxu0
    %2325 = vrot.lane.b32.xlu0 %v2070, 64
    %v2326 = vpop.permute.xlu0 %2325
    %v2329 = vsel %vm239, %v2248, 0
    %2331 = vmatprep.subr.mxu0 0.0
    %2332 = vmatpush1.msra.mxu0 %v2326
    %2333 = vmatprep.subr.mxu0 0.0
    %2334 = vmatpush1.msra.mxu0 0.0
    %2335 = vmatprep.subr.mxu0 0.0
    %2336 = vmatpush1.msra.mxu0 0.0
    %2337 = vmatprep.subr.mxu0 0.0
    %2338 = vmatpush1.msra.mxu0 0.0
    %2339 = vmatprep.subr.mxu0 0.0
    %2340 = vmatpush1.msra.mxu0 0.0
    %2341 = vmatprep.subr.mxu0 0.0
    %2342 = vmatpush1.msra.mxu0 0.0
    %2343 = vmatprep.subr.mxu0 0.0
    %2344 = vmatpush1.msra.mxu0 0.0
    %2345 = vmatprep.subr.mxu0 0.0
    %2346 = vmatpush1.msra.mxu0 0.0
    %2347 = vmatprep.subr.mxu0 0.0
    %2348 = vmatpush1.msra.mxu0 0.0
    %2349 = vmatprep.subr.mxu0 0.0
    %2350 = vmatpush1.msra.mxu0 0.0
    %2351 = vmatprep.subr.mxu0 0.0
    %2352 = vmatpush1.msra.mxu0 0.0
    %2353 = vmatprep.subr.mxu0 0.0
    %2354 = vmatpush1.msra.mxu0 0.0
    %2355 = vmatprep.subr.mxu0 0.0
    %2356 = vmatpush1.msra.mxu0 0.0
    %2357 = vmatprep.subr.mxu0 0.0
    %2358 = vmatpush1.msra.mxu0 0.0
    %2359 = vmatprep.subr.mxu0 0.0
    %2360 = vmatpush1.msra.mxu0 0.0
    %2361 = vmatprep.subr.mxu0 0.0
    %2362 = vmatpush1.msra.mxu0 0.0
    %2363 = vmatprep.subr.mxu0 0.0
    %2364 = vmatpush1.msra.mxu0 0.0
    %2365 = vmatprep.subr.mxu0 0.0
    %2366 = vmatpush1.msra.mxu0 0.0
    %2367 = vmatprep.subr.mxu0 0.0
    %2368 = vmatpush1.msra.mxu0 0.0
    %2369 = vmatprep.subr.mxu0 0.0
    %2370 = vmatpush1.msra.mxu0 0.0
    %2371 = vmatprep.subr.mxu0 0.0
    %2372 = vmatpush1.msra.mxu0 0.0
    %2373 = vmatprep.subr.mxu0 0.0
    %2374 = vmatpush1.msra.mxu0 0.0
    %2375 = vmatprep.subr.mxu0 0.0
    %2376 = vmatpush1.msra.mxu0 0.0
    %2377 = vmatprep.subr.mxu0 0.0
    %2378 = vmatpush1.msra.mxu0 0.0
    %2379 = vmatprep.subr.mxu0 0.0
    %2380 = vmatpush1.msra.mxu0 0.0
    %2381 = vmatprep.subr.mxu0 0.0
    %2382 = vmatpush1.msra.mxu0 0.0
    %2383 = vmatprep.subr.mxu0 0.0
    %2384 = vmatpush1.msra.mxu0 0.0
    %2385 = vmatprep.subr.mxu0 0.0
    %2386 = vmatpush1.msra.mxu0 0.0
    %2387 = vmatprep.subr.mxu0 0.0
    %2388 = vmatpush1.msra.mxu0 0.0
    %2389 = vmatprep.subr.mxu0 0.0
    %2390 = vmatpush1.msra.mxu0 0.0
    %2391 = vmatprep.subr.mxu0 0.0
    %2392 = vmatpush1.msra.mxu0 0.0
    %2393 = vmatprep.subr.mxu0 0.0
    %2394 = vmatpush1.msra.mxu0 0.0
    %2395 = vmatprep.mubr.f32.mxu0 0.0
    %2396 = vmatmul.mubr.f32.gmra.mrb[0].mxu0 %v2329
    %v2397 = vpop.f32.mrb[0].mxu0
    %v2398 = vadd.f32 0.0, %v2397
    %v2399 = vpop.f32.mrb[0].mxu0
    %2400 = vdwg.mxu0
    %2401 = vrot.lane.b32.xlu0 %v2065, 120
    %v2402 = vpop.permute.xlu0 %2401
    %2403 = vrot.lane.b32.xlu0 %v2065, 88
    %v2404 = vpop.permute.xlu0 %2403
    %v2405 = vsel %vm239, %v2402, 0
    %v2407 = vsel %vm239, %v2404, 0
    %2409 = vmatprep.subr.mxu0 0.0
    %2410 = vmatpush1.xpose.msra.mxu0 %v2407
    %2411 = vmatprep.subr.mxu0 0.0
    %2412 = vmatpush1.xpose.msra.mxu0 0.0
    %2413 = vmatprep.subr.mxu0 0.0
    %2414 = vmatpush1.xpose.msra.mxu0 0.0
    %2415 = vmatprep.subr.mxu0 0.0
    %2416 = vmatpush1.xpose.msra.mxu0 0.0
    %2417 = vmatprep.subr.mxu0 0.0
    %2418 = vmatpush1.xpose.msra.mxu0 0.0
    %2419 = vmatprep.subr.mxu0 0.0
    %2420 = vmatpush1.xpose.msra.mxu0 0.0
    %2421 = vmatprep.subr.mxu0 0.0
    %2422 = vmatpush1.xpose.msra.mxu0 0.0
    %2423 = vmatprep.subr.mxu0 0.0
    %2424 = vmatpush1.xpose.msra.mxu0 0.0
    %2425 = vmatprep.subr.mxu0 0.0
    %2426 = vmatpush1.xpose.msra.mxu0 0.0
    %2427 = vmatprep.subr.mxu0 0.0
    %2428 = vmatpush1.xpose.msra.mxu0 0.0
    %2429 = vmatprep.subr.mxu0 0.0
    %2430 = vmatpush1.xpose.msra.mxu0 0.0
    %2431 = vmatprep.subr.mxu0 0.0
    %2432 = vmatpush1.xpose.msra.mxu0 0.0
    %2433 = vmatprep.subr.mxu0 0.0
    %2434 = vmatpush1.xpose.msra.mxu0 0.0
    %2435 = vmatprep.subr.mxu0 0.0
    %2436 = vmatpush1.xpose.msra.mxu0 0.0
    %2437 = vmatprep.subr.mxu0 0.0
    %2438 = vmatpush1.xpose.msra.mxu0 0.0
    %2439 = vmatprep.subr.mxu0 0.0
    %2440 = vmatpush1.xpose.msra.mxu0 0.0
    %2441 = vmatprep.subr.mxu0 0.0
    %2442 = vmatpush1.xpose.msra.mxu0 0.0
    %2443 = vmatprep.subr.mxu0 0.0
    %2444 = vmatpush1.xpose.msra.mxu0 0.0
    %2445 = vmatprep.subr.mxu0 0.0
    %2446 = vmatpush1.xpose.msra.mxu0 0.0
    %2447 = vmatprep.subr.mxu0 0.0
    %2448 = vmatpush1.xpose.msra.mxu0 0.0
    %2449 = vmatprep.subr.mxu0 0.0
    %2450 = vmatpush1.xpose.msra.mxu0 0.0
    %2451 = vmatprep.subr.mxu0 0.0
    %2452 = vmatpush1.xpose.msra.mxu0 0.0
    %2453 = vmatprep.subr.mxu0 0.0
    %2454 = vmatpush1.xpose.msra.mxu0 0.0
    %2455 = vmatprep.subr.mxu0 0.0
    %2456 = vmatpush1.xpose.msra.mxu0 0.0
    %2457 = vmatprep.subr.mxu0 0.0
    %2458 = vmatpush1.xpose.msra.mxu0 0.0
    %2459 = vmatprep.subr.mxu0 0.0
    %2460 = vmatpush1.xpose.msra.mxu0 0.0
    %2461 = vmatprep.subr.mxu0 0.0
    %2462 = vmatpush1.xpose.msra.mxu0 0.0
    %2463 = vmatprep.subr.mxu0 0.0
    %2464 = vmatpush1.xpose.msra.mxu0 0.0
    %2465 = vmatprep.subr.mxu0 0.0
    %2466 = vmatpush1.xpose.msra.mxu0 0.0
    %2467 = vmatprep.subr.mxu0 0.0
    %2468 = vmatpush1.xpose.msra.mxu0 0.0
    %2469 = vmatprep.subr.mxu0 0.0
    %2470 = vmatpush1.xpose.msra.mxu0 0.0
    %2471 = vmatprep.subr.mxu0 0.0
    %2472 = vmatpush1.xpose.msra.mxu0 0.0
    %2473 = vmatprep.mubr.f32.mxu0 0.0
    %2474 = vmatmul.mubr.f32.gmra.mrb[0].mxu0 %v2405
    %v2475 = vpop.f32.mrb[0].mxu0
    %v2476 = vadd.f32 %v229, %v2475
    %v2477 = vpop.f32.mrb[0].mxu0
    %2478 = vdwg.mxu0
    %2479 = vrot.lane.b32.xlu0 %v2070, 120
    %v2480 = vpop.permute.xlu0 %2479
    %2481 = vrot.lane.b32.xlu0 %v2070, 88
    %v2482 = vpop.permute.xlu0 %2481
    %v2483 = vsel %vm239, %v2480, 0
    %v2485 = vsel %vm239, %v2482, 0
    %2487 = vmatprep.subr.mxu0 0.0
    %2488 = vmatpush1.xpose.msra.mxu0 %v2485
    %2489 = vmatprep.subr.mxu0 0.0
    %2490 = vmatpush1.xpose.msra.mxu0 0.0
    %2491 = vmatprep.subr.mxu0 0.0
    %2492 = vmatpush1.xpose.msra.mxu0 0.0
    %2493 = vmatprep.subr.mxu0 0.0
    %2494 = vmatpush1.xpose.msra.mxu0 0.0
    %2495 = vmatprep.subr.mxu0 0.0
    %2496 = vmatpush1.xpose.msra.mxu0 0.0
    %2497 = vmatprep.subr.mxu0 0.0
    %2498 = vmatpush1.xpose.msra.mxu0 0.0
    %2499 = vmatprep.subr.mxu0 0.0
    %2500 = vmatpush1.xpose.msra.mxu0 0.0
    %2501 = vmatprep.subr.mxu0 0.0
    %2502 = vmatpush1.xpose.msra.mxu0 0.0
    %2503 = vmatprep.subr.mxu0 0.0
    %2504 = vmatpush1.xpose.msra.mxu0 0.0
    %2505 = vmatprep.subr.mxu0 0.0
    %2506 = vmatpush1.xpose.msra.mxu0 0.0
    %2507 = vmatprep.subr.mxu0 0.0
    %2508 = vmatpush1.xpose.msra.mxu0 0.0
    %2509 = vmatprep.subr.mxu0 0.0
    %2510 = vmatpush1.xpose.msra.mxu0 0.0
    %2511 = vmatprep.subr.mxu0 0.0
    %2512 = vmatpush1.xpose.msra.mxu0 0.0
    %2513 = vmatprep.subr.mxu0 0.0
    %2514 = vmatpush1.xpose.msra.mxu0 0.0
    %2515 = vmatprep.subr.mxu0 0.0
    %2516 = vmatpush1.xpose.msra.mxu0 0.0
    %2517 = vmatprep.subr.mxu0 0.0
    %2518 = vmatpush1.xpose.msra.mxu0 0.0
    %2519 = vmatprep.subr.mxu0 0.0
    %2520 = vmatpush1.xpose.msra.mxu0 0.0
    %2521 = vmatprep.subr.mxu0 0.0
    %2522 = vmatpush1.xpose.msra.mxu0 0.0
    %2523 = vmatprep.subr.mxu0 0.0
    %2524 = vmatpush1.xpose.msra.mxu0 0.0
    %2525 = vmatprep.subr.mxu0 0.0
    %2526 = vmatpush1.xpose.msra.mxu0 0.0
    %2527 = vmatprep.subr.mxu0 0.0
    %2528 = vmatpush1.xpose.msra.mxu0 0.0
    %2529 = vmatprep.subr.mxu0 0.0
    %2530 = vmatpush1.xpose.msra.mxu0 0.0
    %2531 = vmatprep.subr.mxu0 0.0
    %2532 = vmatpush1.xpose.msra.mxu0 0.0
    %2533 = vmatprep.subr.mxu0 0.0
    %2534 = vmatpush1.xpose.msra.mxu0 0.0
    %2535 = vmatprep.subr.mxu0 0.0
    %2536 = vmatpush1.xpose.msra.mxu0 0.0
    %2537 = vmatprep.subr.mxu0 0.0
    %2538 = vmatpush1.xpose.msra.mxu0 0.0
    %2539 = vmatprep.subr.mxu0 0.0
    %2540 = vmatpush1.xpose.msra.mxu0 0.0
    %2541 = vmatprep.subr.mxu0 0.0
    %2542 = vmatpush1.xpose.msra.mxu0 0.0
    %2543 = vmatprep.subr.mxu0 0.0
    %2544 = vmatpush1.xpose.msra.mxu0 0.0
    %2545 = vmatprep.subr.mxu0 0.0
    %2546 = vmatpush1.xpose.msra.mxu0 0.0
    %2547 = vmatprep.subr.mxu0 0.0
    %2548 = vmatpush1.xpose.msra.mxu0 0.0
    %2549 = vmatprep.subr.mxu0 0.0
    %2550 = vmatpush1.xpose.msra.mxu0 0.0
    %2551 = vmatprep.mubr.f32.mxu0 0.0
    %2552 = vmatmul.mubr.f32.gmra.mrb[0].mxu0 %v2483
    %v2553 = vpop.f32.mrb[0].mxu0
    %v2554 = vadd.f32 %v233, %v2553
    %v2555 = vpop.f32.mrb[0].mxu0
    %2556 = vdwg.mxu0
    %v2557 = vsel %vm239, %v2476, -inf
    %2558 = vmax.xlane.f32.xlu0 %v2557
    %v2559 = vpop.xlane.xlu0 %2558
    %v2560 = vsel %vm239, %v2554, -inf
    %2561 = vmax.xlane.f32.xlu0 %v2560
    %v2562 = vpop.xlane.xlu0 %2561
    %v2563 = vsub.f32 %v2476, %v2559
    %v2564 = vsub.f32 %v2554, %v2562
    %v2565 = vmul.f32 %v2563, 1.442695
    %v2566 = vpow.pop %v2565
    %v2567 = vmul.f32 %v2564, 1.442695
    %v2568 = vpow.pop %v2567
    %v2569 = vsel %vm239, %v2566, 0.0
    %2570 = vadd.xlane.f32.xlu0 %v2569
    %v2571 = vpop.xlane.xlu0 %2570
    %v2572 = vsel %vm239, %v2568, 0.0
    %2573 = vadd.xlane.f32.xlu0 %v2572
    %v2574 = vpop.xlane.xlu0 %2573
    %v2575 = vrcp.pop %v2571
    %v2576 = vrcp.pop %v2574
    %v2577 = vmul.f32 %v2566, %v2575
    %v2578 = vmul.f32 %v2568, %v2576
    %2579 = vrot.lane.b32.xlu0 %v2065, 56
    %v2580 = vpop.permute.xlu0 %2579
    %v2583 = vsel %vm239, %v2577, 0
    %2585 = vmatprep.subr.mxu0 0.0
    %2586 = vmatpush1.msra.mxu0 %v2580
    %2587 = vmatprep.subr.mxu0 0.0
    %2588 = vmatpush1.msra.mxu0 0.0
    %2589 = vmatprep.subr.mxu0 0.0
    %2590 = vmatpush1.msra.mxu0 0.0
    %2591 = vmatprep.subr.mxu0 0.0
    %2592 = vmatpush1.msra.mxu0 0.0
    %2593 = vmatprep.subr.mxu0 0.0
    %2594 = vmatpush1.msra.mxu0 0.0
    %2595 = vmatprep.subr.mxu0 0.0
    %2596 = vmatpush1.msra.mxu0 0.0
    %2597 = vmatprep.subr.mxu0 0.0
    %2598 = vmatpush1.msra.mxu0 0.0
    %2599 = vmatprep.subr.mxu0 0.0
    %2600 = vmatpush1.msra.mxu0 0.0
    %2601 = vmatprep.subr.mxu0 0.0
    %2602 = vmatpush1.msra.mxu0 0.0
    %2603 = vmatprep.subr.mxu0 0.0
    %2604 = vmatpush1.msra.mxu0 0.0
    %2605 = vmatprep.subr.mxu0 0.0
    %2606 = vmatpush1.msra.mxu0 0.0
    %2607 = vmatprep.subr.mxu0 0.0
    %2608 = vmatpush1.msra.mxu0 0.0
    %2609 = vmatprep.subr.mxu0 0.0
    %2610 = vmatpush1.msra.mxu0 0.0
    %2611 = vmatprep.subr.mxu0 0.0
    %2612 = vmatpush1.msra.mxu0 0.0
    %2613 = vmatprep.subr.mxu0 0.0
    %2614 = vmatpush1.msra.mxu0 0.0
    %2615 = vmatprep.subr.mxu0 0.0
    %2616 = vmatpush1.msra.mxu0 0.0
    %2617 = vmatprep.subr.mxu0 0.0
    %2618 = vmatpush1.msra.mxu0 0.0
    %2619 = vmatprep.subr.mxu0 0.0
    %2620 = vmatpush1.msra.mxu0 0.0
    %2621 = vmatprep.subr.mxu0 0.0
    %2622 = vmatpush1.msra.mxu0 0.0
    %2623 = vmatprep.subr.mxu0 0.0
    %2624 = vmatpush1.msra.mxu0 0.0
    %2625 = vmatprep.subr.mxu0 0.0
    %2626 = vmatpush1.msra.mxu0 0.0
    %2627 = vmatprep.subr.mxu0 0.0
    %2628 = vmatpush1.msra.mxu0 0.0
    %2629 = vmatprep.subr.mxu0 0.0
    %2630 = vmatpush1.msra.mxu0 0.0
    %2631 = vmatprep.subr.mxu0 0.0
    %2632 = vmatpush1.msra.mxu0 0.0
    %2633 = vmatprep.subr.mxu0 0.0
    %2634 = vmatpush1.msra.mxu0 0.0
    %2635 = vmatprep.subr.mxu0 0.0
    %2636 = vmatpush1.msra.mxu0 0.0
    %2637 = vmatprep.subr.mxu0 0.0
    %2638 = vmatpush1.msra.mxu0 0.0
    %2639 = vmatprep.subr.mxu0 0.0
    %2640 = vmatpush1.msra.mxu0 0.0
    %2641 = vmatprep.subr.mxu0 0.0
    %2642 = vmatpush1.msra.mxu0 0.0
    %2643 = vmatprep.subr.mxu0 0.0
    %2644 = vmatpush1.msra.mxu0 0.0
    %2645 = vmatprep.subr.mxu0 0.0
    %2646 = vmatpush1.msra.mxu0 0.0
    %2647 = vmatprep.subr.mxu0 0.0
    %2648 = vmatpush1.msra.mxu0 0.0
    %2649 = vmatprep.mubr.f32.mxu0 0.0
    %2650 = vmatmul.mubr.f32.gmra.mrb[0].mxu0 %v2583
    %v2651 = vpop.f32.mrb[0].mxu0
    %v2652 = vadd.f32 0.0, %v2651
    %v2653 = vpop.f32.mrb[0].mxu0
    %2654 = vdwg.mxu0
    %2655 = vrot.lane.b32.xlu0 %v2070, 56
    %v2656 = vpop.permute.xlu0 %2655
    %v2659 = vsel %vm239, %v2578, 0
    %2661 = vmatprep.subr.mxu0 0.0
    %2662 = vmatpush1.msra.mxu0 %v2656
    %2663 = vmatprep.subr.mxu0 0.0
    %2664 = vmatpush1.msra.mxu0 0.0
    %2665 = vmatprep.subr.mxu0 0.0
    %2666 = vmatpush1.msra.mxu0 0.0
    %2667 = vmatprep.subr.mxu0 0.0
    %2668 = vmatpush1.msra.mxu0 0.0
    %2669 = vmatprep.subr.mxu0 0.0
    %2670 = vmatpush1.msra.mxu0 0.0
    %2671 = vmatprep.subr.mxu0 0.0
    %2672 = vmatpush1.msra.mxu0 0.0
    %2673 = vmatprep.subr.mxu0 0.0
    %2674 = vmatpush1.msra.mxu0 0.0
    %2675 = vmatprep.subr.mxu0 0.0
    %2676 = vmatpush1.msra.mxu0 0.0
    %2677 = vmatprep.subr.mxu0 0.0
    %2678 = vmatpush1.msra.mxu0 0.0
    %2679 = vmatprep.subr.mxu0 0.0
    %2680 = vmatpush1.msra.mxu0 0.0
    %2681 = vmatprep.subr.mxu0 0.0
    %2682 = vmatpush1.msra.mxu0 0.0
    %2683 = vmatprep.subr.mxu0 0.0
    %2684 = vmatpush1.msra.mxu0 0.0
    %2685 = vmatprep.subr.mxu0 0.0
    %2686 = vmatpush1.msra.mxu0 0.0
    %2687 = vmatprep.subr.mxu0 0.0
    %2688 = vmatpush1.msra.mxu0 0.0
    %2689 = vmatprep.subr.mxu0 0.0
    %2690 = vmatpush1.msra.mxu0 0.0
    %2691 = vmatprep.subr.mxu0 0.0
    %2692 = vmatpush1.msra.mxu0 0.0
    %2693 = vmatprep.subr.mxu0 0.0
    %2694 = vmatpush1.msra.mxu0 0.0
    %2695 = vmatprep.subr.mxu0 0.0
    %2696 = vmatpush1.msra.mxu0 0.0
    %2697 = vmatprep.subr.mxu0 0.0
    %2698 = vmatpush1.msra.mxu0 0.0
    %2699 = vmatprep.subr.mxu0 0.0
    %2700 = vmatpush1.msra.mxu0 0.0
    %2701 = vmatprep.subr.mxu0 0.0
    %2702 = vmatpush1.msra.mxu0 0.0
    %2703 = vmatprep.subr.mxu0 0.0
    %2704 = vmatpush1.msra.mxu0 0.0
    %2705 = vmatprep.subr.mxu0 0.0
    %2706 = vmatpush1.msra.mxu0 0.0
    %2707 = vmatprep.subr.mxu0 0.0
    %2708 = vmatpush1.msra.mxu0 0.0
    %2709 = vmatprep.subr.mxu0 0.0
    %2710 = vmatpush1.msra.mxu0 0.0
    %2711 = vmatprep.subr.mxu0 0.0
    %2712 = vmatpush1.msra.mxu0 0.0
    %2713 = vmatprep.subr.mxu0 0.0
    %2714 = vmatpush1.msra.mxu0 0.0
    %2715 = vmatprep.subr.mxu0 0.0
    %2716 = vmatpush1.msra.mxu0 0.0
    %2717 = vmatprep.subr.mxu0 0.0
    %2718 = vmatpush1.msra.mxu0 0.0
    %2719 = vmatprep.subr.mxu0 0.0
    %2720 = vmatpush1.msra.mxu0 0.0
    %2721 = vmatprep.subr.mxu0 0.0
    %2722 = vmatpush1.msra.mxu0 0.0
    %2723 = vmatprep.subr.mxu0 0.0
    %2724 = vmatpush1.msra.mxu0 0.0
    %2725 = vmatprep.mubr.f32.mxu0 0.0
    %2726 = vmatmul.mubr.f32.gmra.mrb[0].mxu0 %v2659
    %v2727 = vpop.f32.mrb[0].mxu0
    %v2728 = vadd.f32 0.0, %v2727
    %v2729 = vpop.f32.mrb[0].mxu0
    %2730 = vdwg.mxu0
    %2731 = vrot.lane.b32.xlu0 %v2065, 112
    %v2732 = vpop.permute.xlu0 %2731
    %2733 = vrot.lane.b32.xlu0 %v2065, 80
    %v2734 = vpop.permute.xlu0 %2733
    %v2735 = vsel %vm239, %v2732, 0
    %v2737 = vsel %vm239, %v2734, 0
    %2739 = vmatprep.subr.mxu0 0.0
    %2740 = vmatpush1.xpose.msra.mxu0 %v2737
    %2741 = vmatprep.subr.mxu0 0.0
    %2742 = vmatpush1.xpose.msra.mxu0 0.0
    %2743 = vmatprep.subr.mxu0 0.0
    %2744 = vmatpush1.xpose.msra.mxu0 0.0
    %2745 = vmatprep.subr.mxu0 0.0
    %2746 = vmatpush1.xpose.msra.mxu0 0.0
    %2747 = vmatprep.subr.mxu0 0.0
    %2748 = vmatpush1.xpose.msra.mxu0 0.0
    %2749 = vmatprep.subr.mxu0 0.0
    %2750 = vmatpush1.xpose.msra.mxu0 0.0
    %2751 = vmatprep.subr.mxu0 0.0
    %2752 = vmatpush1.xpose.msra.mxu0 0.0
    %2753 = vmatprep.subr.mxu0 0.0
    %2754 = vmatpush1.xpose.msra.mxu0 0.0
    %2755 = vmatprep.subr.mxu0 0.0
    %2756 = vmatpush1.xpose.msra.mxu0 0.0
    %2757 = vmatprep.subr.mxu0 0.0
    %2758 = vmatpush1.xpose.msra.mxu0 0.0
    %2759 = vmatprep.subr.mxu0 0.0
    %2760 = vmatpush1.xpose.msra.mxu0 0.0
    %2761 = vmatprep.subr.mxu0 0.0
    %2762 = vmatpush1.xpose.msra.mxu0 0.0
    %2763 = vmatprep.subr.mxu0 0.0
    %2764 = vmatpush1.xpose.msra.mxu0 0.0
    %2765 = vmatprep.subr.mxu0 0.0
    %2766 = vmatpush1.xpose.msra.mxu0 0.0
    %2767 = vmatprep.subr.mxu0 0.0
    %2768 = vmatpush1.xpose.msra.mxu0 0.0
    %2769 = vmatprep.subr.mxu0 0.0
    %2770 = vmatpush1.xpose.msra.mxu0 0.0
    %2771 = vmatprep.subr.mxu0 0.0
    %2772 = vmatpush1.xpose.msra.mxu0 0.0
    %2773 = vmatprep.subr.mxu0 0.0
    %2774 = vmatpush1.xpose.msra.mxu0 0.0
    %2775 = vmatprep.subr.mxu0 0.0
    %2776 = vmatpush1.xpose.msra.mxu0 0.0
    %2777 = vmatprep.subr.mxu0 0.0
    %2778 = vmatpush1.xpose.msra.mxu0 0.0
    %2779 = vmatprep.subr.mxu0 0.0
    %2780 = vmatpush1.xpose.msra.mxu0 0.0
    %2781 = vmatprep.subr.mxu0 0.0
    %2782 = vmatpush1.xpose.msra.mxu0 0.0
    %2783 = vmatprep.subr.mxu0 0.0
    %2784 = vmatpush1.xpose.msra.mxu0 0.0
    %2785 = vmatprep.subr.mxu0 0.0
    %2786 = vmatpush1.xpose.msra.mxu0 0.0
    %2787 = vmatprep.subr.mxu0 0.0
    %2788 = vmatpush1.xpose.msra.mxu0 0.0
    %2789 = vmatprep.subr.mxu0 0.0
    %2790 = vmatpush1.xpose.msra.mxu0 0.0
    %2791 = vmatprep.subr.mxu0 0.0
    %2792 = vmatpush1.xpose.msra.mxu0 0.0
    %2793 = vmatprep.subr.mxu0 0.0
    %2794 = vmatpush1.xpose.msra.mxu0 0.0
    %2795 = vmatprep.subr.mxu0 0.0
    %2796 = vmatpush1.xpose.msra.mxu0 0.0
    %2797 = vmatprep.subr.mxu0 0.0
    %2798 = vmatpush1.xpose.msra.mxu0 0.0
    %2799 = vmatprep.subr.mxu0 0.0
    %2800 = vmatpush1.xpose.msra.mxu0 0.0
    %2801 = vmatprep.subr.mxu0 0.0
    %2802 = vmatpush1.xpose.msra.mxu0 0.0
    %2803 = vmatprep.mubr.f32.mxu0 0.0
    %2804 = vmatmul.mubr.f32.gmra.mrb[0].mxu0 %v2735
    %v2805 = vpop.f32.mrb[0].mxu0
    %v2806 = vadd.f32 %v229, %v2805
    %v2807 = vpop.f32.mrb[0].mxu0
    %2808 = vdwg.mxu0
    %2809 = vrot.lane.b32.xlu0 %v2070, 112
    %v2810 = vpop.permute.xlu0 %2809
    %2811 = vrot.lane.b32.xlu0 %v2070, 80
    %v2812 = vpop.permute.xlu0 %2811
    %v2813 = vsel %vm239, %v2810, 0
    %v2815 = vsel %vm239, %v2812, 0
    %2817 = vmatprep.subr.mxu0 0.0
    %2818 = vmatpush1.xpose.msra.mxu0 %v2815
    %2819 = vmatprep.subr.mxu0 0.0
    %2820 = vmatpush1.xpose.msra.mxu0 0.0
    %2821 = vmatprep.subr.mxu0 0.0
    %2822 = vmatpush1.xpose.msra.mxu0 0.0
    %2823 = vmatprep.subr.mxu0 0.0
    %2824 = vmatpush1.xpose.msra.mxu0 0.0
    %2825 = vmatprep.subr.mxu0 0.0
    %2826 = vmatpush1.xpose.msra.mxu0 0.0
    %2827 = vmatprep.subr.mxu0 0.0
    %2828 = vmatpush1.xpose.msra.mxu0 0.0
    %2829 = vmatprep.subr.mxu0 0.0
    %2830 = vmatpush1.xpose.msra.mxu0 0.0
    %2831 = vmatprep.subr.mxu0 0.0
    %2832 = vmatpush1.xpose.msra.mxu0 0.0
    %2833 = vmatprep.subr.mxu0 0.0
    %2834 = vmatpush1.xpose.msra.mxu0 0.0
    %2835 = vmatprep.subr.mxu0 0.0
    %2836 = vmatpush1.xpose.msra.mxu0 0.0
    %2837 = vmatprep.subr.mxu0 0.0
    %2838 = vmatpush1.xpose.msra.mxu0 0.0
    %2839 = vmatprep.subr.mxu0 0.0
    %2840 = vmatpush1.xpose.msra.mxu0 0.0
    %2841 = vmatprep.subr.mxu0 0.0
    %2842 = vmatpush1.xpose.msra.mxu0 0.0
    %2843 = vmatprep.subr.mxu0 0.0
    %2844 = vmatpush1.xpose.msra.mxu0 0.0
    %2845 = vmatprep.subr.mxu0 0.0
    %2846 = vmatpush1.xpose.msra.mxu0 0.0
    %2847 = vmatprep.subr.mxu0 0.0
    %2848 = vmatpush1.xpose.msra.mxu0 0.0
    %2849 = vmatprep.subr.mxu0 0.0
    %2850 = vmatpush1.xpose.msra.mxu0 0.0
    %2851 = vmatprep.subr.mxu0 0.0
    %2852 = vmatpush1.xpose.msra.mxu0 0.0
    %2853 = vmatprep.subr.mxu0 0.0
    %2854 = vmatpush1.xpose.msra.mxu0 0.0
    %2855 = vmatprep.subr.mxu0 0.0
    %2856 = vmatpush1.xpose.msra.mxu0 0.0
    %2857 = vmatprep.subr.mxu0 0.0
    %2858 = vmatpush1.xpose.msra.mxu0 0.0
    %2859 = vmatprep.subr.mxu0 0.0
    %2860 = vmatpush1.xpose.msra.mxu0 0.0
    %2861 = vmatprep.subr.mxu0 0.0
    %2862 = vmatpush1.xpose.msra.mxu0 0.0
    %2863 = vmatprep.subr.mxu0 0.0
    %2864 = vmatpush1.xpose.msra.mxu0 0.0
    %2865 = vmatprep.subr.mxu0 0.0
    %2866 = vmatpush1.xpose.msra.mxu0 0.0
    %2867 = vmatprep.subr.mxu0 0.0
    %2868 = vmatpush1.xpose.msra.mxu0 0.0
    %2869 = vmatprep.subr.mxu0 0.0
    %2870 = vmatpush1.xpose.msra.mxu0 0.0
    %2871 = vmatprep.subr.mxu0 0.0
    %2872 = vmatpush1.xpose.msra.mxu0 0.0
    %2873 = vmatprep.subr.mxu0 0.0
    %2874 = vmatpush1.xpose.msra.mxu0 0.0
    %2875 = vmatprep.subr.mxu0 0.0
    %2876 = vmatpush1.xpose.msra.mxu0 0.0
    %2877 = vmatprep.subr.mxu0 0.0
    %2878 = vmatpush1.xpose.msra.mxu0 0.0
    %2879 = vmatprep.subr.mxu0 0.0
    %2880 = vmatpush1.xpose.msra.mxu0 0.0
    %2881 = vmatprep.mubr.f32.mxu0 0.0
    %2882 = vmatmul.mubr.f32.gmra.mrb[0].mxu0 %v2813
    %v2883 = vpop.f32.mrb[0].mxu0
    %v2884 = vadd.f32 %v233, %v2883
    %v2885 = vpop.f32.mrb[0].mxu0
    %2886 = vdwg.mxu0
    %v2887 = vsel %vm239, %v2806, -inf
    %2888 = vmax.xlane.f32.xlu0 %v2887
    %v2889 = vpop.xlane.xlu0 %2888
    %v2890 = vsel %vm239, %v2884, -inf
    %2891 = vmax.xlane.f32.xlu0 %v2890
    %v2892 = vpop.xlane.xlu0 %2891
    %v2893 = vsub.f32 %v2806, %v2889
    %v2894 = vsub.f32 %v2884, %v2892
    %v2895 = vmul.f32 %v2893, 1.442695
    %v2896 = vpow.pop %v2895
    %v2897 = vmul.f32 %v2894, 1.442695
    %v2898 = vpow.pop %v2897
    %v2899 = vsel %vm239, %v2896, 0.0
    %2900 = vadd.xlane.f32.xlu0 %v2899
    %v2901 = vpop.xlane.xlu0 %2900
    %v2902 = vsel %vm239, %v2898, 0.0
    %2903 = vadd.xlane.f32.xlu0 %v2902
    %v2904 = vpop.xlane.xlu0 %2903
    %v2905 = vrcp.pop %v2901
    %v2906 = vrcp.pop %v2904
    %v2907 = vmul.f32 %v2896, %v2905
    %v2908 = vmul.f32 %v2898, %v2906
    %2909 = vrot.lane.b32.xlu0 %v2065, 48
    %v2910 = vpop.permute.xlu0 %2909
    %v2913 = vsel %vm239, %v2907, 0
    %2915 = vmatprep.subr.mxu0 0.0
    %2916 = vmatpush1.msra.mxu0 %v2910
    %2917 = vmatprep.subr.mxu0 0.0
    %2918 = vmatpush1.msra.mxu0 0.0
    %2919 = vmatprep.subr.mxu0 0.0
    %2920 = vmatpush1.msra.mxu0 0.0
    %2921 = vmatprep.subr.mxu0 0.0
    %2922 = vmatpush1.msra.mxu0 0.0
    %2923 = vmatprep.subr.mxu0 0.0
    %2924 = vmatpush1.msra.mxu0 0.0
    %2925 = vmatprep.subr.mxu0 0.0
    %2926 = vmatpush1.msra.mxu0 0.0
    %2927 = vmatprep.subr.mxu0 0.0
    %2928 = vmatpush1.msra.mxu0 0.0
    %2929 = vmatprep.subr.mxu0 0.0
    %2930 = vmatpush1.msra.mxu0 0.0
    %2931 = vmatprep.subr.mxu0 0.0
    %2932 = vmatpush1.msra.mxu0 0.0
    %2933 = vmatprep.subr.mxu0 0.0
    %2934 = vmatpush1.msra.mxu0 0.0
    %2935 = vmatprep.subr.mxu0 0.0
    %2936 = vmatpush1.msra.mxu0 0.0
    %2937 = vmatprep.subr.mxu0 0.0
    %2938 = vmatpush1.msra.mxu0 0.0
    %2939 = vmatprep.subr.mxu0 0.0
    %2940 = vmatpush1.msra.mxu0 0.0
    %2941 = vmatprep.subr.mxu0 0.0
    %2942 = vmatpush1.msra.mxu0 0.0
    %2943 = vmatprep.subr.mxu0 0.0
    %2944 = vmatpush1.msra.mxu0 0.0
    %2945 = vmatprep.subr.mxu0 0.0
    %2946 = vmatpush1.msra.mxu0 0.0
    %2947 = vmatprep.subr.mxu0 0.0
    %2948 = vmatpush1.msra.mxu0 0.0
    %2949 = vmatprep.subr.mxu0 0.0
    %2950 = vmatpush1.msra.mxu0 0.0
    %2951 = vmatprep.subr.mxu0 0.0
    %2952 = vmatpush1.msra.mxu0 0.0
    %2953 = vmatprep.subr.mxu0 0.0
    %2954 = vmatpush1.msra.mxu0 0.0
    %2955 = vmatprep.subr.mxu0 0.0
    %2956 = vmatpush1.msra.mxu0 0.0
    %2957 = vmatprep.subr.mxu0 0.0
    %2958 = vmatpush1.msra.mxu0 0.0
    %2959 = vmatprep.subr.mxu0 0.0
    %2960 = vmatpush1.msra.mxu0 0.0
    %2961 = vmatprep.subr.mxu0 0.0
    %2962 = vmatpush1.msra.mxu0 0.0
    %2963 = vmatprep.subr.mxu0 0.0
    %2964 = vmatpush1.msra.mxu0 0.0
    %2965 = vmatprep.subr.mxu0 0.0
    %2966 = vmatpush1.msra.mxu0 0.0
    %2967 = vmatprep.subr.mxu0 0.0
    %2968 = vmatpush1.msra.mxu0 0.0
    %2969 = vmatprep.subr.mxu0 0.0
    %2970 = vmatpush1.msra.mxu0 0.0
    %2971 = vmatprep.subr.mxu0 0.0
    %2972 = vmatpush1.msra.mxu0 0.0
    %2973 = vmatprep.subr.mxu0 0.0
    %2974 = vmatpush1.msra.mxu0 0.0
    %2975 = vmatprep.subr.mxu0 0.0
    %2976 = vmatpush1.msra.mxu0 0.0
    %2977 = vmatprep.subr.mxu0 0.0
    %2978 = vmatpush1.msra.mxu0 0.0
    %2979 = vmatprep.mubr.f32.mxu0 0.0
    %2980 = vmatmul.mubr.f32.gmra.mrb[0].mxu0 %v2913
    %v2981 = vpop.f32.mrb[0].mxu0
    %v2982 = vadd.f32 0.0, %v2981
    %v2983 = vpop.f32.mrb[0].mxu0
    %2984 = vdwg.mxu0
    %2985 = vrot.lane.b32.xlu0 %v2070, 48
    %v2986 = vpop.permute.xlu0 %2985
    %v2989 = vsel %vm239, %v2908, 0
    %2991 = vmatprep.subr.mxu0 0.0
    %2992 = vmatpush1.msra.mxu0 %v2986
    %2993 = vmatprep.subr.mxu0 0.0
    %2994 = vmatpush1.msra.mxu0 0.0
    %2995 = vmatprep.subr.mxu0 0.0
    %2996 = vmatpush1.msra.mxu0 0.0
    %2997 = vmatprep.subr.mxu0 0.0
    %2998 = vmatpush1.msra.mxu0 0.0
    %2999 = vmatprep.subr.mxu0 0.0
    %3000 = vmatpush1.msra.mxu0 0.0
    %3001 = vmatprep.subr.mxu0 0.0
    %3002 = vmatpush1.msra.mxu0 0.0
    %3003 = vmatprep.subr.mxu0 0.0
    %3004 = vmatpush1.msra.mxu0 0.0
    %3005 = vmatprep.subr.mxu0 0.0
    %3006 = vmatpush1.msra.mxu0 0.0
    %3007 = vmatprep.subr.mxu0 0.0
    %3008 = vmatpush1.msra.mxu0 0.0
    %3009 = vmatprep.subr.mxu0 0.0
    %3010 = vmatpush1.msra.mxu0 0.0
    %3011 = vmatprep.subr.mxu0 0.0
    %3012 = vmatpush1.msra.mxu0 0.0
    %3013 = vmatprep.subr.mxu0 0.0
    %3014 = vmatpush1.msra.mxu0 0.0
    %3015 = vmatprep.subr.mxu0 0.0
    %3016 = vmatpush1.msra.mxu0 0.0
    %3017 = vmatprep.subr.mxu0 0.0
    %3018 = vmatpush1.msra.mxu0 0.0
    %3019 = vmatprep.subr.mxu0 0.0
    %3020 = vmatpush1.msra.mxu0 0.0
    %3021 = vmatprep.subr.mxu0 0.0
    %3022 = vmatpush1.msra.mxu0 0.0
    %3023 = vmatprep.subr.mxu0 0.0
    %3024 = vmatpush1.msra.mxu0 0.0
    %3025 = vmatprep.subr.mxu0 0.0
    %3026 = vmatpush1.msra.mxu0 0.0
    %3027 = vmatprep.subr.mxu0 0.0
    %3028 = vmatpush1.msra.mxu0 0.0
    %3029 = vmatprep.subr.mxu0 0.0
    %3030 = vmatpush1.msra.mxu0 0.0
    %3031 = vmatprep.subr.mxu0 0.0
    %3032 = vmatpush1.msra.mxu0 0.0
    %3033 = vmatprep.subr.mxu0 0.0
    %3034 = vmatpush1.msra.mxu0 0.0
    %3035 = vmatprep.subr.mxu0 0.0
    %3036 = vmatpush1.msra.mxu0 0.0
    %3037 = vmatprep.subr.mxu0 0.0
    %3038 = vmatpush1.msra.mxu0 0.0
    %3039 = vmatprep.subr.mxu0 0.0
    %3040 = vmatpush1.msra.mxu0 0.0
    %3041 = vmatprep.subr.mxu0 0.0
    %3042 = vmatpush1.msra.mxu0 0.0
    %3043 = vmatprep.subr.mxu0 0.0
    %3044 = vmatpush1.msra.mxu0 0.0
    %3045 = vmatprep.subr.mxu0 0.0
    %3046 = vmatpush1.msra.mxu0 0.0
    %3047 = vmatprep.subr.mxu0 0.0
    %3048 = vmatpush1.msra.mxu0 0.0
    %3049 = vmatprep.subr.mxu0 0.0
    %3050 = vmatpush1.msra.mxu0 0.0
    %3051 = vmatprep.subr.mxu0 0.0
    %3052 = vmatpush1.msra.mxu0 0.0
    %3053 = vmatprep.subr.mxu0 0.0
    %3054 = vmatpush1.msra.mxu0 0.0
    %3055 = vmatprep.mubr.f32.mxu0 0.0
    %3056 = vmatmul.mubr.f32.gmra.mrb[0].mxu0 %v2989
    %v3057 = vpop.f32.mrb[0].mxu0
    %v3058 = vadd.f32 0.0, %v3057
    %v3059 = vpop.f32.mrb[0].mxu0
    %3060 = vdwg.mxu0
    %3061 = vrot.lane.b32.xlu0 %v2065, 104
    %v3062 = vpop.permute.xlu0 %3061
    %3063 = vrot.lane.b32.xlu0 %v2065, 72
    %v3064 = vpop.permute.xlu0 %3063
    %v3065 = vsel %vm239, %v3062, 0
    %v3067 = vsel %vm239, %v3064, 0
    %3069 = vmatprep.subr.mxu0 0.0
    %3070 = vmatpush1.xpose.msra.mxu0 %v3067
    %3071 = vmatprep.subr.mxu0 0.0
    %3072 = vmatpush1.xpose.msra.mxu0 0.0
    %3073 = vmatprep.subr.mxu0 0.0
    %3074 = vmatpush1.xpose.msra.mxu0 0.0
    %3075 = vmatprep.subr.mxu0 0.0
    %3076 = vmatpush1.xpose.msra.mxu0 0.0
    %3077 = vmatprep.subr.mxu0 0.0
    %3078 = vmatpush1.xpose.msra.mxu0 0.0
    %3079 = vmatprep.subr.mxu0 0.0
    %3080 = vmatpush1.xpose.msra.mxu0 0.0
    %3081 = vmatprep.subr.mxu0 0.0
    %3082 = vmatpush1.xpose.msra.mxu0 0.0
    %3083 = vmatprep.subr.mxu0 0.0
    %3084 = vmatpush1.xpose.msra.mxu0 0.0
    %3085 = vmatprep.subr.mxu0 0.0
    %3086 = vmatpush1.xpose.msra.mxu0 0.0
    %3087 = vmatprep.subr.mxu0 0.0
    %3088 = vmatpush1.xpose.msra.mxu0 0.0
    %3089 = vmatprep.subr.mxu0 0.0
    %3090 = vmatpush1.xpose.msra.mxu0 0.0
    %3091 = vmatprep.subr.mxu0 0.0
    %3092 = vmatpush1.xpose.msra.mxu0 0.0
    %3093 = vmatprep.subr.mxu0 0.0
    %3094 = vmatpush1.xpose.msra.mxu0 0.0
    %3095 = vmatprep.subr.mxu0 0.0
    %3096 = vmatpush1.xpose.msra.mxu0 0.0
    %3097 = vmatprep.subr.mxu0 0.0
    %3098 = vmatpush1.xpose.msra.mxu0 0.0
    %3099 = vmatprep.subr.mxu0 0.0
    %3100 = vmatpush1.xpose.msra.mxu0 0.0
    %3101 = vmatprep.subr.mxu0 0.0
    %3102 = vmatpush1.xpose.msra.mxu0 0.0
    %3103 = vmatprep.subr.mxu0 0.0
    %3104 = vmatpush1.xpose.msra.mxu0 0.0
    %3105 = vmatprep.subr.mxu0 0.0
    %3106 = vmatpush1.xpose.msra.mxu0 0.0
    %3107 = vmatprep.subr.mxu0 0.0
    %3108 = vmatpush1.xpose.msra.mxu0 0.0
    %3109 = vmatprep.subr.mxu0 0.0
    %3110 = vmatpush1.xpose.msra.mxu0 0.0
    %3111 = vmatprep.subr.mxu0 0.0
    %3112 = vmatpush1.xpose.msra.mxu0 0.0
    %3113 = vmatprep.subr.mxu0 0.0
    %3114 = vmatpush1.xpose.msra.mxu0 0.0
    %3115 = vmatprep.subr.mxu0 0.0
    %3116 = vmatpush1.xpose.msra.mxu0 0.0
    %3117 = vmatprep.subr.mxu0 0.0
    %3118 = vmatpush1.xpose.msra.mxu0 0.0
    %3119 = vmatprep.subr.mxu0 0.0
    %3120 = vmatpush1.xpose.msra.mxu0 0.0
    %3121 = vmatprep.subr.mxu0 0.0
    %3122 = vmatpush1.xpose.msra.mxu0 0.0
    %3123 = vmatprep.subr.mxu0 0.0
    %3124 = vmatpush1.xpose.msra.mxu0 0.0
    %3125 = vmatprep.subr.mxu0 0.0
    %3126 = vmatpush1.xpose.msra.mxu0 0.0
    %3127 = vmatprep.subr.mxu0 0.0
    %3128 = vmatpush1.xpose.msra.mxu0 0.0
    %3129 = vmatprep.subr.mxu0 0.0
    %3130 = vmatpush1.xpose.msra.mxu0 0.0
    %3131 = vmatprep.subr.mxu0 0.0
    %3132 = vmatpush1.xpose.msra.mxu0 0.0
    %3133 = vmatprep.mubr.f32.mxu0 0.0
    %3134 = vmatmul.mubr.f32.gmra.mrb[0].mxu0 %v3065
    %v3135 = vpop.f32.mrb[0].mxu0
    %v3136 = vadd.f32 %v229, %v3135
    %v3137 = vpop.f32.mrb[0].mxu0
    %3138 = vdwg.mxu0
    %3139 = vrot.lane.b32.xlu0 %v2070, 104
    %v3140 = vpop.permute.xlu0 %3139
    %3141 = vrot.lane.b32.xlu0 %v2070, 72
    %v3142 = vpop.permute.xlu0 %3141
    %v3143 = vsel %vm239, %v3140, 0
    %v3145 = vsel %vm239, %v3142, 0
    %3147 = vmatprep.subr.mxu0 0.0
    %3148 = vmatpush1.xpose.msra.mxu0 %v3145
    %3149 = vmatprep.subr.mxu0 0.0
    %3150 = vmatpush1.xpose.msra.mxu0 0.0
    %3151 = vmatprep.subr.mxu0 0.0
    %3152 = vmatpush1.xpose.msra.mxu0 0.0
    %3153 = vmatprep.subr.mxu0 0.0
    %3154 = vmatpush1.xpose.msra.mxu0 0.0
    %3155 = vmatprep.subr.mxu0 0.0
    %3156 = vmatpush1.xpose.msra.mxu0 0.0
    %3157 = vmatprep.subr.mxu0 0.0
    %3158 = vmatpush1.xpose.msra.mxu0 0.0
    %3159 = vmatprep.subr.mxu0 0.0
    %3160 = vmatpush1.xpose.msra.mxu0 0.0
    %3161 = vmatprep.subr.mxu0 0.0
    %3162 = vmatpush1.xpose.msra.mxu0 0.0
    %3163 = vmatprep.subr.mxu0 0.0
    %3164 = vmatpush1.xpose.msra.mxu0 0.0
    %3165 = vmatprep.subr.mxu0 0.0
    %3166 = vmatpush1.xpose.msra.mxu0 0.0
    %3167 = vmatprep.subr.mxu0 0.0
    %3168 = vmatpush1.xpose.msra.mxu0 0.0
    %3169 = vmatprep.subr.mxu0 0.0
    %3170 = vmatpush1.xpose.msra.mxu0 0.0
    %3171 = vmatprep.subr.mxu0 0.0
    %3172 = vmatpush1.xpose.msra.mxu0 0.0
    %3173 = vmatprep.subr.mxu0 0.0
    %3174 = vmatpush1.xpose.msra.mxu0 0.0
    %3175 = vmatprep.subr.mxu0 0.0
    %3176 = vmatpush1.xpose.msra.mxu0 0.0
    %3177 = vmatprep.subr.mxu0 0.0
    %3178 = vmatpush1.xpose.msra.mxu0 0.0
    %3179 = vmatprep.subr.mxu0 0.0
    %3180 = vmatpush1.xpose.msra.mxu0 0.0
    %3181 = vmatprep.subr.mxu0 0.0
    %3182 = vmatpush1.xpose.msra.mxu0 0.0
    %3183 = vmatprep.subr.mxu0 0.0
    %3184 = vmatpush1.xpose.msra.mxu0 0.0
    %3185 = vmatprep.subr.mxu0 0.0
    %3186 = vmatpush1.xpose.msra.mxu0 0.0
    %3187 = vmatprep.subr.mxu0 0.0
    %3188 = vmatpush1.xpose.msra.mxu0 0.0
    %3189 = vmatprep.subr.mxu0 0.0
    %3190 = vmatpush1.xpose.msra.mxu0 0.0
    %3191 = vmatprep.subr.mxu0 0.0
    %3192 = vmatpush1.xpose.msra.mxu0 0.0
    %3193 = vmatprep.subr.mxu0 0.0
    %3194 = vmatpush1.xpose.msra.mxu0 0.0
    %3195 = vmatprep.subr.mxu0 0.0
    %3196 = vmatpush1.xpose.msra.mxu0 0.0
    %3197 = vmatprep.subr.mxu0 0.0
    %3198 = vmatpush1.xpose.msra.mxu0 0.0
    %3199 = vmatprep.subr.mxu0 0.0
    %3200 = vmatpush1.xpose.msra.mxu0 0.0
    %3201 = vmatprep.subr.mxu0 0.0
    %3202 = vmatpush1.xpose.msra.mxu0 0.0
    %3203 = vmatprep.subr.mxu0 0.0
    %3204 = vmatpush1.xpose.msra.mxu0 0.0
    %3205 = vmatprep.subr.mxu0 0.0
    %3206 = vmatpush1.xpose.msra.mxu0 0.0
    %3207 = vmatprep.subr.mxu0 0.0
    %3208 = vmatpush1.xpose.msra.mxu0 0.0
    %3209 = vmatprep.subr.mxu0 0.0
    %3210 = vmatpush1.xpose.msra.mxu0 0.0
    %3211 = vmatprep.mubr.f32.mxu0 0.0
    %3212 = vmatmul.mubr.f32.gmra.mrb[0].mxu0 %v3143
    %v3213 = vpop.f32.mrb[0].mxu0
    %v3214 = vadd.f32 %v233, %v3213
    %v3215 = vpop.f32.mrb[0].mxu0
    %3216 = vdwg.mxu0
    %v3217 = vsel %vm239, %v3136, -inf
    %3218 = vmax.xlane.f32.xlu0 %v3217
    %v3219 = vpop.xlane.xlu0 %3218
    %v3220 = vsel %vm239, %v3214, -inf
    %3221 = vmax.xlane.f32.xlu0 %v3220
    %v3222 = vpop.xlane.xlu0 %3221
    %v3223 = vsub.f32 %v3136, %v3219
    %v3224 = vsub.f32 %v3214, %v3222
    %v3225 = vmul.f32 %v3223, 1.442695
    %v3226 = vpow.pop %v3225
    %v3227 = vmul.f32 %v3224, 1.442695
    %v3228 = vpow.pop %v3227
    %v3229 = vsel %vm239, %v3226, 0.0
    %3230 = vadd.xlane.f32.xlu0 %v3229
    %v3231 = vpop.xlane.xlu0 %3230
    %v3232 = vsel %vm239, %v3228, 0.0
    %3233 = vadd.xlane.f32.xlu0 %v3232
    %v3234 = vpop.xlane.xlu0 %3233
    %v3235 = vrcp.pop %v3231
    %v3236 = vrcp.pop %v3234
    %v3237 = vmul.f32 %v3226, %v3235
    %v3238 = vmul.f32 %v3228, %v3236
    %3239 = vrot.lane.b32.xlu0 %v2065, 40
    %v3240 = vpop.permute.xlu0 %3239
    %v3243 = vsel %vm239, %v3237, 0
    %3245 = vmatprep.subr.mxu0 0.0
    %3246 = vmatpush1.msra.mxu0 %v3240
    %3247 = vmatprep.subr.mxu0 0.0
    %3248 = vmatpush1.msra.mxu0 0.0
    %3249 = vmatprep.subr.mxu0 0.0
    %3250 = vmatpush1.msra.mxu0 0.0
    %3251 = vmatprep.subr.mxu0 0.0
    %3252 = vmatpush1.msra.mxu0 0.0
    %3253 = vmatprep.subr.mxu0 0.0
    %3254 = vmatpush1.msra.mxu0 0.0
    %3255 = vmatprep.subr.mxu0 0.0
    %3256 = vmatpush1.msra.mxu0 0.0
    %3257 = vmatprep.subr.mxu0 0.0
    %3258 = vmatpush1.msra.mxu0 0.0
    %3259 = vmatprep.subr.mxu0 0.0
    %3260 = vmatpush1.msra.mxu0 0.0
    %3261 = vmatprep.subr.mxu0 0.0
    %3262 = vmatpush1.msra.mxu0 0.0
    %3263 = vmatprep.subr.mxu0 0.0
    %3264 = vmatpush1.msra.mxu0 0.0
    %3265 = vmatprep.subr.mxu0 0.0
    %3266 = vmatpush1.msra.mxu0 0.0
    %3267 = vmatprep.subr.mxu0 0.0
    %3268 = vmatpush1.msra.mxu0 0.0
    %3269 = vmatprep.subr.mxu0 0.0
    %3270 = vmatpush1.msra.mxu0 0.0
    %3271 = vmatprep.subr.mxu0 0.0
    %3272 = vmatpush1.msra.mxu0 0.0
    %3273 = vmatprep.subr.mxu0 0.0
    %3274 = vmatpush1.msra.mxu0 0.0
    %3275 = vmatprep.subr.mxu0 0.0
    %3276 = vmatpush1.msra.mxu0 0.0
    %3277 = vmatprep.subr.mxu0 0.0
    %3278 = vmatpush1.msra.mxu0 0.0
    %3279 = vmatprep.subr.mxu0 0.0
    %3280 = vmatpush1.msra.mxu0 0.0
    %3281 = vmatprep.subr.mxu0 0.0
    %3282 = vmatpush1.msra.mxu0 0.0
    %3283 = vmatprep.subr.mxu0 0.0
    %3284 = vmatpush1.msra.mxu0 0.0
    %3285 = vmatprep.subr.mxu0 0.0
    %3286 = vmatpush1.msra.mxu0 0.0
    %3287 = vmatprep.subr.mxu0 0.0
    %3288 = vmatpush1.msra.mxu0 0.0
    %3289 = vmatprep.subr.mxu0 0.0
    %3290 = vmatpush1.msra.mxu0 0.0
    %3291 = vmatprep.subr.mxu0 0.0
    %3292 = vmatpush1.msra.mxu0 0.0
    %3293 = vmatprep.subr.mxu0 0.0
    %3294 = vmatpush1.msra.mxu0 0.0
    %3295 = vmatprep.subr.mxu0 0.0
    %3296 = vmatpush1.msra.mxu0 0.0
    %3297 = vmatprep.subr.mxu0 0.0
    %3298 = vmatpush1.msra.mxu0 0.0
    %3299 = vmatprep.subr.mxu0 0.0
    %3300 = vmatpush1.msra.mxu0 0.0
    %3301 = vmatprep.subr.mxu0 0.0
    %3302 = vmatpush1.msra.mxu0 0.0
    %3303 = vmatprep.subr.mxu0 0.0
    %3304 = vmatpush1.msra.mxu0 0.0
    %3305 = vmatprep.subr.mxu0 0.0
    %3306 = vmatpush1.msra.mxu0 0.0
    %3307 = vmatprep.subr.mxu0 0.0
    %3308 = vmatpush1.msra.mxu0 0.0
    %3309 = vmatprep.mubr.f32.mxu0 0.0
    %3310 = vmatmul.mubr.f32.gmra.mrb[0].mxu0 %v3243
    %v3311 = vpop.f32.mrb[0].mxu0
    %v3312 = vadd.f32 0.0, %v3311
    %v3313 = vpop.f32.mrb[0].mxu0
    %3314 = vdwg.mxu0
    %3315 = vrot.lane.b32.xlu0 %v2070, 40
    %v3316 = vpop.permute.xlu0 %3315
    %v3319 = vsel %vm239, %v3238, 0
    %3321 = vmatprep.subr.mxu0 0.0
    %3322 = vmatpush1.msra.mxu0 %v3316
    %3323 = vmatprep.subr.mxu0 0.0
    %3324 = vmatpush1.msra.mxu0 0.0
    %3325 = vmatprep.subr.mxu0 0.0
    %3326 = vmatpush1.msra.mxu0 0.0
    %3327 = vmatprep.subr.mxu0 0.0
    %3328 = vmatpush1.msra.mxu0 0.0
    %3329 = vmatprep.subr.mxu0 0.0
    %3330 = vmatpush1.msra.mxu0 0.0
    %3331 = vmatprep.subr.mxu0 0.0
    %3332 = vmatpush1.msra.mxu0 0.0
    %3333 = vmatprep.subr.mxu0 0.0
    %3334 = vmatpush1.msra.mxu0 0.0
    %3335 = vmatprep.subr.mxu0 0.0
    %3336 = vmatpush1.msra.mxu0 0.0
    %3337 = vmatprep.subr.mxu0 0.0
    %3338 = vmatpush1.msra.mxu0 0.0
    %3339 = vmatprep.subr.mxu0 0.0
    %3340 = vmatpush1.msra.mxu0 0.0
    %3341 = vmatprep.subr.mxu0 0.0
    %3342 = vmatpush1.msra.mxu0 0.0
    %3343 = vmatprep.subr.mxu0 0.0
    %3344 = vmatpush1.msra.mxu0 0.0
    %3345 = vmatprep.subr.mxu0 0.0
    %3346 = vmatpush1.msra.mxu0 0.0
    %3347 = vmatprep.subr.mxu0 0.0
    %3348 = vmatpush1.msra.mxu0 0.0
    %3349 = vmatprep.subr.mxu0 0.0
    %3350 = vmatpush1.msra.mxu0 0.0
    %3351 = vmatprep.subr.mxu0 0.0
    %3352 = vmatpush1.msra.mxu0 0.0
    %3353 = vmatprep.subr.mxu0 0.0
    %3354 = vmatpush1.msra.mxu0 0.0
    %3355 = vmatprep.subr.mxu0 0.0
    %3356 = vmatpush1.msra.mxu0 0.0
    %3357 = vmatprep.subr.mxu0 0.0
    %3358 = vmatpush1.msra.mxu0 0.0
    %3359 = vmatprep.subr.mxu0 0.0
    %3360 = vmatpush1.msra.mxu0 0.0
    %3361 = vmatprep.subr.mxu0 0.0
    %3362 = vmatpush1.msra.mxu0 0.0
    %3363 = vmatprep.subr.mxu0 0.0
    %3364 = vmatpush1.msra.mxu0 0.0
    %3365 = vmatprep.subr.mxu0 0.0
    %3366 = vmatpush1.msra.mxu0 0.0
    %3367 = vmatprep.subr.mxu0 0.0
    %3368 = vmatpush1.msra.mxu0 0.0
    %3369 = vmatprep.subr.mxu0 0.0
    %3370 = vmatpush1.msra.mxu0 0.0
    %3371 = vmatprep.subr.mxu0 0.0
    %3372 = vmatpush1.msra.mxu0 0.0
    %3373 = vmatprep.subr.mxu0 0.0
    %3374 = vmatpush1.msra.mxu0 0.0
    %3375 = vmatprep.subr.mxu0 0.0
    %3376 = vmatpush1.msra.mxu0 0.0
    %3377 = vmatprep.subr.mxu0 0.0
    %3378 = vmatpush1.msra.mxu0 0.0
    %3379 = vmatprep.subr.mxu0 0.0
    %3380 = vmatpush1.msra.mxu0 0.0
    %3381 = vmatprep.subr.mxu0 0.0
    %3382 = vmatpush1.msra.mxu0 0.0
    %3383 = vmatprep.subr.mxu0 0.0
    %3384 = vmatpush1.msra.mxu0 0.0
    %3385 = vmatprep.mubr.f32.mxu0 0.0
    %3386 = vmatmul.mubr.f32.gmra.mrb[0].mxu0 %v3319
    %v3387 = vpop.f32.mrb[0].mxu0
    %v3388 = vadd.f32 0.0, %v3387
    %v3389 = vpop.f32.mrb[0].mxu0
    %3390 = vdwg.mxu0
    %3393 = vrot.lane.b32.xlu0 %v2652, 8
    %v3394 = vpop.permute.xlu0 %3393
    %3395 = vrot.lane.b32.xlu0 %v2728, 8
    %v3396 = vpop.permute.xlu0 %3395
    %3401 = vrot.lane.b32.xlu0 %v2982, 16
    %v3402 = vpop.permute.xlu0 %3401
    %3403 = vrot.lane.b32.xlu0 %v3058, 16
    %v3404 = vpop.permute.xlu0 %3403
    %3409 = vrot.lane.b32.xlu0 %v3312, 24
    %v3410 = vpop.permute.xlu0 %3409
    %3411 = vrot.lane.b32.xlu0 %v3388, 24
    %v3412 = vpop.permute.xlu0 %3411
    %v3415 = vsel %vm239, %v2322, %v3394
    %v3416 = vsel %vm239, %v2398, %v3396
    %v3417 = vsel %vm1581, %v3415, %v3402
    %v3418 = vsel %vm1581, %v3416, %v3404
    %v3419 = vsel %vm1584, %v3417, %v3410
    %v3420 = vsel %vm1584, %v3418, %v3412
    %s3421 = scalar_lea.vmem %s11, 32
    %v3422 = vld [vmem:[%s3421] sm:$0xff]
    %v3423 = vld [vmem:[%s3421 + $0x8] sm:$0xff]
    %v3424 = vld [vmem:[%s3421 + $0x10] sm:$0xff]
    %v3425 = vld [vmem:[%s3421 + $0x18] sm:$0xff]
    %s3426 = scalar_lea.vmem %s13, 1
    %v3427 = vld [vmem:[%s3426] sm:$0x1]
    %v3429 = vlaneseq
    %v3430 = vshrl.u32 %v3429, 7
    %v3431 = vsub.s32 0, %v3430
    %v3432 = vrot.slane %v3427, %v3431
    %v3435 = vsel %vm142, %v3419, 0
    %v3438 = vsel %vm142, %v3420, 0
    %3440 = vmatprep.subr.mxu0 0.0
    %3441 = vmatpush1.msra.mxu0 %v3422
    %3442 = vmatprep.subr.mxu0 0.0
    %3443 = vmatpush1.msra.mxu0 %v3423
    %3444 = vmatprep.subr.mxu0 0.0
    %3445 = vmatpush1.msra.mxu0 %v3424
    %3446 = vmatprep.subr.mxu0 0.0
    %3447 = vmatpush1.msra.mxu0 %v3425
    %3448 = vmatprep.subr.mxu0 0.0
    %3449 = vmatpush1.msra.mxu0 0.0
    %3450 = vmatprep.subr.mxu0 0.0
    %3451 = vmatpush1.msra.mxu0 0.0
    %3452 = vmatprep.subr.mxu0 0.0
    %3453 = vmatpush1.msra.mxu0 0.0
    %3454 = vmatprep.subr.mxu0 0.0
    %3455 = vmatpush1.msra.mxu0 0.0
    %3456 = vmatprep.subr.mxu0 0.0
    %3457 = vmatpush1.msra.mxu0 0.0
    %3458 = vmatprep.subr.mxu0 0.0
    %3459 = vmatpush1.msra.mxu0 0.0
    %3460 = vmatprep.subr.mxu0 0.0
    %3461 = vmatpush1.msra.mxu0 0.0
    %3462 = vmatprep.subr.mxu0 0.0
    %3463 = vmatpush1.msra.mxu0 0.0
    %3464 = vmatprep.subr.mxu0 0.0
    %3465 = vmatpush1.msra.mxu0 0.0
    %3466 = vmatprep.subr.mxu0 0.0
    %3467 = vmatpush1.msra.mxu0 0.0
    %3468 = vmatprep.subr.mxu0 0.0
    %3469 = vmatpush1.msra.mxu0 0.0
    %3470 = vmatprep.subr.mxu0 0.0
    %3471 = vmatpush1.msra.mxu0 0.0
    %3472 = vmatprep.subr.mxu0 0.0
    %3473 = vmatpush1.msra.mxu0 0.0
    %3474 = vmatprep.subr.mxu0 0.0
    %3475 = vmatpush1.msra.mxu0 0.0
    %3476 = vmatprep.subr.mxu0 0.0
    %3477 = vmatpush1.msra.mxu0 0.0
    %3478 = vmatprep.subr.mxu0 0.0
    %3479 = vmatpush1.msra.mxu0 0.0
    %3480 = vmatprep.subr.mxu0 0.0
    %3481 = vmatpush1.msra.mxu0 0.0
    %3482 = vmatprep.subr.mxu0 0.0
    %3483 = vmatpush1.msra.mxu0 0.0
    %3484 = vmatprep.subr.mxu0 0.0
    %3485 = vmatpush1.msra.mxu0 0.0
    %3486 = vmatprep.subr.mxu0 0.0
    %3487 = vmatpush1.msra.mxu0 0.0
    %3488 = vmatprep.subr.mxu0 0.0
    %3489 = vmatpush1.msra.mxu0 0.0
    %3490 = vmatprep.subr.mxu0 0.0
    %3491 = vmatpush1.msra.mxu0 0.0
    %3492 = vmatprep.subr.mxu0 0.0
    %3493 = vmatpush1.msra.mxu0 0.0
    %3494 = vmatprep.subr.mxu0 0.0
    %3495 = vmatpush1.msra.mxu0 0.0
    %3496 = vmatprep.subr.mxu0 0.0
    %3497 = vmatpush1.msra.mxu0 0.0
    %3498 = vmatprep.subr.mxu0 0.0
    %3499 = vmatpush1.msra.mxu0 0.0
    %3500 = vmatprep.subr.mxu0 0.0
    %3501 = vmatpush1.msra.mxu0 0.0
    %3502 = vmatprep.subr.mxu0 0.0
    %3503 = vmatpush1.msra.mxu0 0.0
    %3504 = vmatprep.mubr.f32.mxu0 0.0
    %3505 = vmatmul.mubr.f32.gmra.mrb[0].mxu0 %v3435
    %v3506 = vpop.f32.mrb[0].mxu0
    %v3507 = vadd.f32 %v3432, %v3506
    %v3508 = vpop.f32.mrb[0].mxu0
    %3509 = vmatprep.mubr.f32.mxu0 0.0
    %3510 = vmatmul.mubr.f32.gmra.mrb[0].mxu0 %v3438
    %v3511 = vpop.f32.mrb[0].mxu0
    %v3512 = vadd.f32 %v3432, %v3511
    %v3513 = vpop.f32.mrb[0].mxu0
    %3514 = vdwg.mxu0
    %v3515 = vadd.f32 %v1977, %v3507
    %v3516 = vadd.f32 %v1978, %v3512
    %s3517 = scalar_lea.vmem %s15, 1
    %v3518 = vld [vmem:[%s3517] sm:$0x1]
    %s3519 = scalar_lea.vmem %s17, 1
    %v3520 = vld [vmem:[%s3519] sm:$0x1]
    %v3521 = vsel %vm142, %v3515, 0.0
    %3522 = vadd.xlane.f32.xlu0 %v3521
    %v3523 = vpop.xlane.xlu0 %3522
    %v3524 = vsel %vm142, %v3516, 0.0
    %3525 = vadd.xlane.f32.xlu0 %v3524
    %v3526 = vpop.xlane.xlu0 %3525
    %v3527 = vmul.f32 %v3523, %v1689
    %v3528 = vmul.f32 %v3526, %v1689
    %v3529 = vsub.f32 %v3515, %v3527
    %v3530 = vsub.f32 %v3516, %v3528
    %v3531 = vmul.f32 %v3529, %v3529
    %v3532 = vmul.f32 %v3530, %v3530
    %v3533 = vsel %vm142, %v3531, 0.0
    %3534 = vadd.xlane.f32.xlu0 %v3533
    %v3535 = vpop.xlane.xlu0 %3534
    %v3536 = vsel %vm142, %v3532, 0.0
    %3537 = vadd.xlane.f32.xlu0 %v3536
    %v3538 = vpop.xlane.xlu0 %3537
    %v3539 = vmul.f32 %v3535, %v1689
    %v3540 = vmul.f32 %v3538, %v1689
    %v3541 = vadd.f32 %v3539, 1e-12
    %v3542 = vadd.f32 %v3540, 1e-12
    %v3543 = vrsqrt.pop %v3541
    %v3544 = vrsqrt.pop %v3542
    %v3545 = vmul.f32 %v3529, %v3543
    %v3546 = vmul.f32 %v3530, %v3544
    %v3548 = vlaneseq
    %v3549 = vshrl.u32 %v3548, 7
    %v3550 = vsub.s32 0, %v3549
    %v3551 = vrot.slane %v3518, %v3550
    %v3553 = vmul.f32 %v3545, %v3551
    %v3554 = vmul.f32 %v3546, %v3551
    %v3556 = vlaneseq
    %v3557 = vshrl.u32 %v3556, 7
    %v3558 = vsub.s32 0, %v3557
    %v3559 = vrot.slane %v3520, %v3558
    %v3561 = vadd.f32 %v3553, %v3559
    %v3562 = vadd.f32 %v3554, %v3559
    %s3563 = scalar_lea.vmem %s19, 32
    %v3564 = vld [vmem:[%s3563] sm:$0xff]
    %v3565 = vld [vmem:[%s3563 + $0x8] sm:$0xff]
    %v3566 = vld [vmem:[%s3563 + $0x10] sm:$0xff]
    %v3567 = vld [vmem:[%s3563 + $0x18] sm:$0xff]
    %s3568 = scalar_lea.vmem %s21, 1
    %v3569 = vld [vmem:[%s3568] sm:$0x1]
    %v3571 = vlaneseq
    %v3572 = vshrl.u32 %v3571, 7
    %v3573 = vsub.s32 0, %v3572
    %v3574 = vrot.slane %v3569, %v3573
    %v3577 = vsel %vm142, %v3561, 0
    %v3580 = vsel %vm142, %v3562, 0
    %3582 = vmatprep.subr.mxu0 0.0
    %3583 = vmatpush1.msra.mxu0 %v3564
    %3584 = vmatprep.subr.mxu0 0.0
    %3585 = vmatpush1.msra.mxu0 %v3565
    %3586 = vmatprep.subr.mxu0 0.0
    %3587 = vmatpush1.msra.mxu0 %v3566
    %3588 = vmatprep.subr.mxu0 0.0
    %3589 = vmatpush1.msra.mxu0 %v3567
    %3590 = vmatprep.subr.mxu0 0.0
    %3591 = vmatpush1.msra.mxu0 0.0
    %3592 = vmatprep.subr.mxu0 0.0
    %3593 = vmatpush1.msra.mxu0 0.0
    %3594 = vmatprep.subr.mxu0 0.0
    %3595 = vmatpush1.msra.mxu0 0.0
    %3596 = vmatprep.subr.mxu0 0.0
    %3597 = vmatpush1.msra.mxu0 0.0
    %3598 = vmatprep.subr.mxu0 0.0
    %3599 = vmatpush1.msra.mxu0 0.0
    %3600 = vmatprep.subr.mxu0 0.0
    %3601 = vmatpush1.msra.mxu0 0.0
    %3602 = vmatprep.subr.mxu0 0.0
    %3603 = vmatpush1.msra.mxu0 0.0
    %3604 = vmatprep.subr.mxu0 0.0
    %3605 = vmatpush1.msra.mxu0 0.0
    %3606 = vmatprep.subr.mxu0 0.0
    %3607 = vmatpush1.msra.mxu0 0.0
    %3608 = vmatprep.subr.mxu0 0.0
    %3609 = vmatpush1.msra.mxu0 0.0
    %3610 = vmatprep.subr.mxu0 0.0
    %3611 = vmatpush1.msra.mxu0 0.0
    %3612 = vmatprep.subr.mxu0 0.0
    %3613 = vmatpush1.msra.mxu0 0.0
    %3614 = vmatprep.subr.mxu0 0.0
    %3615 = vmatpush1.msra.mxu0 0.0
    %3616 = vmatprep.subr.mxu0 0.0
    %3617 = vmatpush1.msra.mxu0 0.0
    %3618 = vmatprep.subr.mxu0 0.0
    %3619 = vmatpush1.msra.mxu0 0.0
    %3620 = vmatprep.subr.mxu0 0.0
    %3621 = vmatpush1.msra.mxu0 0.0
    %3622 = vmatprep.subr.mxu0 0.0
    %3623 = vmatpush1.msra.mxu0 0.0
    %3624 = vmatprep.subr.mxu0 0.0
    %3625 = vmatpush1.msra.mxu0 0.0
    %3626 = vmatprep.subr.mxu0 0.0
    %3627 = vmatpush1.msra.mxu0 0.0
    %3628 = vmatprep.subr.mxu0 0.0
    %3629 = vmatpush1.msra.mxu0 0.0
    %3630 = vmatprep.subr.mxu0 0.0
    %3631 = vmatpush1.msra.mxu0 0.0
    %3632 = vmatprep.subr.mxu0 0.0
    %3633 = vmatpush1.msra.mxu0 0.0
    %3634 = vmatprep.subr.mxu0 0.0
    %3635 = vmatpush1.msra.mxu0 0.0
    %3636 = vmatprep.subr.mxu0 0.0
    %3637 = vmatpush1.msra.mxu0 0.0
    %3638 = vmatprep.subr.mxu0 0.0
    %3639 = vmatpush1.msra.mxu0 0.0
    %3640 = vmatprep.subr.mxu0 0.0
    %3641 = vmatpush1.msra.mxu0 0.0
    %3642 = vmatprep.subr.mxu0 0.0
    %3643 = vmatpush1.msra.mxu0 0.0
    %3644 = vmatprep.subr.mxu0 0.0
    %3645 = vmatpush1.msra.mxu0 0.0
    %3646 = vmatprep.mubr.f32.mxu0 0.0
    %3647 = vmatmul.mubr.f32.gmra.mrb[0].mxu0 %v3577
    %v3648 = vpop.f32.mrb[0].mxu0
    %v3649 = vadd.f32 %v3574, %v3648
    %v3650 = vpop.f32.mrb[0].mxu0
    %3651 = vmatprep.mubr.f32.mxu0 0.0
    %3652 = vmatmul.mubr.f32.gmra.mrb[0].mxu0 %v3580
    %v3653 = vpop.f32.mrb[0].mxu0
    %v3654 = vadd.f32 %v3574, %v3653
    %v3655 = vpop.f32.mrb[0].mxu0
    %3656 = vdwg.mxu0
    %v3657 = vmul.f32 %v3649, %v3649
    %v3658 = vmul.f32 %v3654, %v3654
    %v3659 = vmul.f32 %v3649, %v3657
    %v3660 = vmul.f32 %v3654, %v3658
    %v3661 = vmul.f32 %v3659, 0.044715
    %v3662 = vmul.f32 %v3660, 0.044715
    %v3663 = vadd.f32 %v3649, %v3661
    %v3664 = vadd.f32 %v3654, %v3662
    %v3665 = vmul.f32 %v3663, 0.7978846
    %v3666 = vmul.f32 %v3664, 0.7978846
    %v3667 = vtanh.pop %v3665
    %v3668 = vtanh.pop %v3666
    %v3669 = vadd.f32 %v3667, 1.0
    %v3670 = vadd.f32 %v3668, 1.0
    %v3671 = vmul.f32 %v3669, 0.5
    %v3672 = vmul.f32 %v3670, 0.5
    %v3673 = vmul.f32 %v3649, %v3671
    %v3674 = vmul.f32 %v3654, %v3672
    %s3675 = scalar_lea.vmem %s23, 64
    %v3676 = vld [vmem:[%s3675] sm:$0xff]
    %v3677 = vld [vmem:[%s3675 + $0x8] sm:$0xff]
    %v3678 = vld [vmem:[%s3675 + $0x10] sm:$0xff]
    %v3679 = vld [vmem:[%s3675 + $0x18] sm:$0xff]
    %v3680 = vld [vmem:[%s3675 + $0x20] sm:$0xff]
    %v3681 = vld [vmem:[%s3675 + $0x28] sm:$0xff]
    %v3682 = vld [vmem:[%s3675 + $0x30] sm:$0xff]
    %v3683 = vld [vmem:[%s3675 + $0x38] sm:$0xff]
    %s3684 = scalar_lea.vmem %s25, 1
    %v3685 = vld [vmem:[%s3684] sm:$0x1]
    %v3687 = vlaneseq
    %v3688 = vshrl.u32 %v3687, 7
    %v3689 = vsub.s32 0, %v3688
    %v3690 = vrot.slane %v3685, %v3689
    %v3693 = vsel %vm1851, %v3673, 0
    %v3696 = vsel %vm1851, %v3674, 0
    %3698 = vmatprep.subr.mxu0 0.0
    %3699 = vmatpush1.msra.mxu0 %v3676
    %3700 = vmatprep.subr.mxu0 0.0
    %3701 = vmatpush1.msra.mxu0 %v3677
    %3702 = vmatprep.subr.mxu0 0.0
    %3703 = vmatpush1.msra.mxu0 %v3678
    %3704 = vmatprep.subr.mxu0 0.0
    %3705 = vmatpush1.msra.mxu0 %v3679
    %3706 = vmatprep.subr.mxu0 0.0
    %3707 = vmatpush1.msra.mxu0 %v3680
    %3708 = vmatprep.subr.mxu0 0.0
    %3709 = vmatpush1.msra.mxu0 %v3681
    %3710 = vmatprep.subr.mxu0 0.0
    %3711 = vmatpush1.msra.mxu0 %v3682
    %3712 = vmatprep.subr.mxu0 0.0
    %3713 = vmatpush1.msra.mxu0 %v3683
    %3714 = vmatprep.subr.mxu0 0.0
    %3715 = vmatpush1.msra.mxu0 0.0
    %3716 = vmatprep.subr.mxu0 0.0
    %3717 = vmatpush1.msra.mxu0 0.0
    %3718 = vmatprep.subr.mxu0 0.0
    %3719 = vmatpush1.msra.mxu0 0.0
    %3720 = vmatprep.subr.mxu0 0.0
    %3721 = vmatpush1.msra.mxu0 0.0
    %3722 = vmatprep.subr.mxu0 0.0
    %3723 = vmatpush1.msra.mxu0 0.0
    %3724 = vmatprep.subr.mxu0 0.0
    %3725 = vmatpush1.msra.mxu0 0.0
    %3726 = vmatprep.subr.mxu0 0.0
    %3727 = vmatpush1.msra.mxu0 0.0
    %3728 = vmatprep.subr.mxu0 0.0
    %3729 = vmatpush1.msra.mxu0 0.0
    %3730 = vmatprep.subr.mxu0 0.0
    %3731 = vmatpush1.msra.mxu0 0.0
    %3732 = vmatprep.subr.mxu0 0.0
    %3733 = vmatpush1.msra.mxu0 0.0
    %3734 = vmatprep.subr.mxu0 0.0
    %3735 = vmatpush1.msra.mxu0 0.0
    %3736 = vmatprep.subr.mxu0 0.0
    %3737 = vmatpush1.msra.mxu0 0.0
    %3738 = vmatprep.subr.mxu0 0.0
    %3739 = vmatpush1.msra.mxu0 0.0
    %3740 = vmatprep.subr.mxu0 0.0
    %3741 = vmatpush1.msra.mxu0 0.0
    %3742 = vmatprep.subr.mxu0 0.0
    %3743 = vmatpush1.msra.mxu0 0.0
    %3744 = vmatprep.subr.mxu0 0.0
    %3745 = vmatpush1.msra.mxu0 0.0
    %3746 = vmatprep.subr.mxu0 0.0
    %3747 = vmatpush1.msra.mxu0 0.0
    %3748 = vmatprep.subr.mxu0 0.0
    %3749 = vmatpush1.msra.mxu0 0.0
    %3750 = vmatprep.subr.mxu0 0.0
    %3751 = vmatpush1.msra.mxu0 0.0
    %3752 = vmatprep.subr.mxu0 0.0
    %3753 = vmatpush1.msra.mxu0 0.0
    %3754 = vmatprep.subr.mxu0 0.0
    %3755 = vmatpush1.msra.mxu0 0.0
    %3756 = vmatprep.subr.mxu0 0.0
    %3757 = vmatpush1.msra.mxu0 0.0
    %3758 = vmatprep.subr.mxu0 0.0
    %3759 = vmatpush1.msra.mxu0 0.0
    %3760 = vmatprep.subr.mxu0 0.0
    %3761 = vmatpush1.msra.mxu0 0.0
    %3762 = vmatprep.mubr.f32.mxu0 0.0
    %3763 = vmatmul.mubr.f32.gmra.mrb[0].mxu0 %v3693
    %v3764 = vpop.f32.mrb[0].mxu0
    %v3765 = vadd.f32 %v3690, %v3764
    %v3766 = vpop.f32.mrb[0].mxu0
    %3767 = vmatprep.mubr.f32.mxu0 0.0
    %3768 = vmatmul.mubr.f32.gmra.mrb[0].mxu0 %v3696
    %v3769 = vpop.f32.mrb[0].mxu0
    %v3770 = vadd.f32 %v3690, %v3769
    %v3771 = vpop.f32.mrb[0].mxu0
    %3772 = vdwg.mxu0
    %v3773 = vadd.f32 %v3561, %v3765
    %v3774 = vadd.f32 %v3562, %v3770
    %s3775 = scalar_lea.vmem %s27, 1
    %v3776 = vld [vmem:[%s3775] sm:$0x1]
    %s3777 = scalar_lea.vmem %s29, 1
    %v3778 = vld [vmem:[%s3777] sm:$0x1]
    %v3779 = vsel %vm142, %v3773, 0.0
    %3780 = vadd.xlane.f32.xlu0 %v3779
    %v3781 = vpop.xlane.xlu0 %3780
    %v3782 = vsel %vm142, %v3774, 0.0
    %3783 = vadd.xlane.f32.xlu0 %v3782
    %v3784 = vpop.xlane.xlu0 %3783
    %v3785 = vmul.f32 %v3781, %v1689
    %v3786 = vmul.f32 %v3784, %v1689
    %v3787 = vsub.f32 %v3773, %v3785
    %v3788 = vsub.f32 %v3774, %v3786
    %v3789 = vmul.f32 %v3787, %v3787
    %v3790 = vmul.f32 %v3788, %v3788
    %v3791 = vsel %vm142, %v3789, 0.0
    %3792 = vadd.xlane.f32.xlu0 %v3791
    %v3793 = vpop.xlane.xlu0 %3792
    %v3794 = vsel %vm142, %v3790, 0.0
    %3795 = vadd.xlane.f32.xlu0 %v3794
    %v3796 = vpop.xlane.xlu0 %3795
    %v3797 = vmul.f32 %v3793, %v1689
    %v3798 = vmul.f32 %v3796, %v1689
    %v3799 = vadd.f32 %v3797, 1e-12
    %v3800 = vadd.f32 %v3798, 1e-12
    %v3801 = vrsqrt.pop %v3799
    %v3802 = vrsqrt.pop %v3800
    %v3803 = vmul.f32 %v3787, %v3801
    %v3804 = vmul.f32 %v3788, %v3802
    %v3806 = vlaneseq
    %v3807 = vshrl.u32 %v3806, 7
    %v3808 = vsub.s32 0, %v3807
    %v3809 = vrot.slane %v3776, %v3808
    %v3811 = vmul.f32 %v3803, %v3809
    %v3812 = vmul.f32 %v3804, %v3809
    %v3814 = vlaneseq
    %v3815 = vshrl.u32 %v3814, 7
    %v3816 = vsub.s32 0, %v3815
    %v3817 = vrot.slane %v3778, %v3816
    %v3819 = vadd.f32 %v3811, %v3817
    %v3820 = vadd.f32 %v3812, %v3817
    %v3821 = vld [vmem:[%s31] sm:$0xff]
    %v3822 = vld [vmem:[%s31 + $0x8] sm:$0xff]
    %v3823 = vld [vmem:[%s31 + $0x10] sm:$0xff]
    %v3824 = vld [vmem:[%s31 + $0x18] sm:$0xff]
    %v3825 = vld [vmem:[%s33] sm:$0x1]
    %v3827 = vlaneseq
    %v3828 = vshrl.u32 %v3827, 7
    %v3829 = vsub.s32 0, %v3828
    %v3830 = vrot.slane %v3825, %v3829
    %v3834 = vrot.slane %v3820, 7
    %vm3835 = vcmask 1041409
    %v3836 = vsel %vm3835, %v3834, %v3819
    %v3837 = vsel %vm142, %v3836, 0
    %3839 = vmatprep.subr.mxu0 0.0
    %3840 = vmatpush1.msra.mxu0 %v3821
    %3841 = vmatprep.subr.mxu0 0.0
    %3842 = vmatpush1.msra.mxu0 %v3822
    %3843 = vmatprep.subr.mxu0 0.0
    %3844 = vmatpush1.msra.mxu0 %v3823
    %3845 = vmatprep.subr.mxu0 0.0
    %3846 = vmatpush1.msra.mxu0 %v3824
    %3847 = vmatprep.subr.mxu0 0.0
    %3848 = vmatpush1.msra.mxu0 0.0
    %3849 = vmatprep.subr.mxu0 0.0
    %3850 = vmatpush1.msra.mxu0 0.0
    %3851 = vmatprep.subr.mxu0 0.0
    %3852 = vmatpush1.msra.mxu0 0.0
    %3853 = vmatprep.subr.mxu0 0.0
    %3854 = vmatpush1.msra.mxu0 0.0
    %3855 = vmatprep.subr.mxu0 0.0
    %3856 = vmatpush1.msra.mxu0 0.0
    %3857 = vmatprep.subr.mxu0 0.0
    %3858 = vmatpush1.msra.mxu0 0.0
    %3859 = vmatprep.subr.mxu0 0.0
    %3860 = vmatpush1.msra.mxu0 0.0
    %3861 = vmatprep.subr.mxu0 0.0
    %3862 = vmatpush1.msra.mxu0 0.0
    %3863 = vmatprep.subr.mxu0 0.0
    %3864 = vmatpush1.msra.mxu0 0.0
    %3865 = vmatprep.subr.mxu0 0.0
    %3866 = vmatpush1.msra.mxu0 0.0
    %3867 = vmatprep.subr.mxu0 0.0
    %3868 = vmatpush1.msra.mxu0 0.0
    %3869 = vmatprep.subr.mxu0 0.0
    %3870 = vmatpush1.msra.mxu0 0.0
    %3871 = vmatprep.subr.mxu0 0.0
    %3872 = vmatpush1.msra.mxu0 0.0
    %3873 = vmatprep.subr.mxu0 0.0
    %3874 = vmatpush1.msra.mxu0 0.0
    %3875 = vmatprep.subr.mxu0 0.0
    %3876 = vmatpush1.msra.mxu0 0.0
    %3877 = vmatprep.subr.mxu0 0.0
    %3878 = vmatpush1.msra.mxu0 0.0
    %3879 = vmatprep.subr.mxu0 0.0
    %3880 = vmatpush1.msra.mxu0 0.0
    %3881 = vmatprep.subr.mxu0 0.0
    %3882 = vmatpush1.msra.mxu0 0.0
    %3883 = vmatprep.subr.mxu0 0.0
    %3884 = vmatpush1.msra.mxu0 0.0
    %3885 = vmatprep.subr.mxu0 0.0
    %3886 = vmatpush1.msra.mxu0 0.0
    %3887 = vmatprep.subr.mxu0 0.0
    %3888 = vmatpush1.msra.mxu0 0.0
    %3889 = vmatprep.subr.mxu0 0.0
    %3890 = vmatpush1.msra.mxu0 0.0
    %3891 = vmatprep.subr.mxu0 0.0
    %3892 = vmatpush1.msra.mxu0 0.0
    %3893 = vmatprep.subr.mxu0 0.0
    %3894 = vmatpush1.msra.mxu0 0.0
    %3895 = vmatprep.subr.mxu0 0.0
    %3896 = vmatpush1.msra.mxu0 0.0
    %3897 = vmatprep.subr.mxu0 0.0
    %3898 = vmatpush1.msra.mxu0 0.0
    %3899 = vmatprep.subr.mxu0 0.0
    %3900 = vmatpush1.msra.mxu0 0.0
    %3901 = vmatprep.subr.mxu0 0.0
    %3902 = vmatpush1.msra.mxu0 0.0
    %3903 = vmatprep.mubr.f32.mxu0 0.0
    %3904 = vmatmul.mubr.f32.gmra.mrb[0].mxu0 %v3837
    %v3905 = vpop.f32.mrb[0].mxu0
    %v3906 = vadd.f32 %v3830, %v3905
    %v3907 = vpop.f32.mrb[0].mxu0
    %3908 = vdwg.mxu0
    %v3909 = vtanh.pop %v3906
    %v3910 = vld [vmem:[%s5] sm:$0x3]
    %v3911 = vld [vmem:[%s35] sm:$0x3f]
    %v3912 = vld [vmem:[%s37] sm:$0x1]
    %v3914 = vlaneseq
    %v3915 = vshrl.u32 %v3914, 7
    %v3916 = vsub.s32 0, %v3915
    %v3917 = vrot.slane %v3912, %v3916
    %vm3919 = vcmask 48128
    %v3921 = vsel %vm3919, %v3910, 0
    %vm3923 = vcmask 1045504
    %v3925 = vsel %vm3923, %v3911, 0
    %3927 = vmatprep.subr.mxu0 0.0
    %3928 = vmatpush1.msra.mxu0 %v3925
    %3929 = vmatprep.subr.mxu0 0.0
    %3930 = vmatpush1.msra.mxu0 0.0
    %3931 = vmatprep.subr.mxu0 0.0
    %3932 = vmatpush1.msra.mxu0 0.0
    %3933 = vmatprep.subr.mxu0 0.0
    %3934 = vmatpush1.msra.mxu0 0.0
    %3935 = vmatprep.subr.mxu0 0.0
    %3936 = vmatpush1.msra.mxu0 0.0
    %3937 = vmatprep.subr.mxu0 0.0
    %3938 = vmatpush1.msra.mxu0 0.0
    %3939 = vmatprep.subr.mxu0 0.0
    %3940 = vmatpush1.msra.mxu0 0.0
    %3941 = vmatprep.subr.mxu0 0.0
    %3942 = vmatpush1.msra.mxu0 0.0
    %3943 = vmatprep.subr.mxu0 0.0
    %3944 = vmatpush1.msra.mxu0 0.0
    %3945 = vmatprep.subr.mxu0 0.0
    %3946 = vmatpush1.msra.mxu0 0.0
    %3947 = vmatprep.subr.mxu0 0.0
    %3948 = vmatpush1.msra.mxu0 0.0
    %3949 = vmatprep.subr.mxu0 0.0
    %3950 = vmatpush1.msra.mxu0 0.0
    %3951 = vmatprep.subr.mxu0 0.0
    %3952 = vmatpush1.msra.mxu0 0.0
    %3953 = vmatprep.subr.mxu0 0.0
    %3954 = vmatpush1.msra.mxu0 0.0
    %3955 = vmatprep.subr.mxu0 0.0
    %3956 = vmatpush1.msra.mxu0 0.0
    %3957 = vmatprep.subr.mxu0 0.0
    %3958 = vmatpush1.msra.mxu0 0.0
    %3959 = vmatprep.subr.mxu0 0.0
    %3960 = vmatpush1.msra.mxu0 0.0
    %3961 = vmatprep.subr.mxu0 0.0
    %3962 = vmatpush1.msra.mxu0 0.0
    %3963 = vmatprep.subr.mxu0 0.0
    %3964 = vmatpush1.msra.mxu0 0.0
    %3965 = vmatprep.subr.mxu0 0.0
    %3966 = vmatpush1.msra.mxu0 0.0
    %3967 = vmatprep.subr.mxu0 0.0
    %3968 = vmatpush1.msra.mxu0 0.0
    %3969 = vmatprep.subr.mxu0 0.0
    %3970 = vmatpush1.msra.mxu0 0.0
    %3971 = vmatprep.subr.mxu0 0.0
    %3972 = vmatpush1.msra.mxu0 0.0
    %3973 = vmatprep.subr.mxu0 0.0
    %3974 = vmatpush1.msra.mxu0 0.0
    %3975 = vmatprep.subr.mxu0 0.0
    %3976 = vmatpush1.msra.mxu0 0.0
    %3977 = vmatprep.subr.mxu0 0.0
    %3978 = vmatpush1.msra.mxu0 0.0
    %3979 = vmatprep.subr.mxu0 0.0
    %3980 = vmatpush1.msra.mxu0 0.0
    %3981 = vmatprep.subr.mxu0 0.0
    %3982 = vmatpush1.msra.mxu0 0.0
    %3983 = vmatprep.subr.mxu0 0.0
    %3984 = vmatpush1.msra.mxu0 0.0
    %3985 = vmatprep.subr.mxu0 0.0
    %3986 = vmatpush1.msra.mxu0 0.0
    %3987 = vmatprep.subr.mxu0 0.0
    %3988 = vmatpush1.msra.mxu0 0.0
    %3989 = vmatprep.subr.mxu0 0.0
    %3990 = vmatpush1.msra.mxu0 0.0
    %3991 = vmatprep.mubr.f32.mxu0 0.0
    %3992 = vmatmul.mubr.f32.gmra.mrb[0].mxu0 %v3921
    %v3993 = vpop.f32.mrb[0].mxu0
    %v3994 = vadd.f32 %v3917, %v3993
    %v3995 = vpop.f32.mrb[0].mxu0
    %3996 = vdwg.mxu0
    %v3997 = vmax.f32 %v3994, 0.0
    %v3998 = vld [vmem:[%s39] sm:$0xff]
    %v3999 = vld [vmem:[%s39 + $0x8] sm:$0x3]
    %v4000 = vld [vmem:[%s41] sm:$0x1]
    %v4002 = vlaneseq
    %v4003 = vshrl.u32 %v4002, 7
    %v4004 = vsub.s32 0, %v4003
    %v4005 = vrot.slane %v4000, %v4004
    %vm4007 = vcmask 80896
    %v4009 = vsel %vm4007, %v3997, 0
    %vm4011 = vcmask 1041408
    %v4013 = vsel %vm4011, %v3999, 0
    %4015 = vmatprep.subr.mxu0 0.0
    %4016 = vmatpush1.msra.mxu0 %v3998
    %4017 = vmatprep.subr.mxu0 0.0
    %4018 = vmatpush1.msra.mxu0 %v4013
    %4019 = vmatprep.subr.mxu0 0.0
    %4020 = vmatpush1.msra.mxu0 0.0
    %4021 = vmatprep.subr.mxu0 0.0
    %4022 = vmatpush1.msra.mxu0 0.0
    %4023 = vmatprep.subr.mxu0 0.0
    %4024 = vmatpush1.msra.mxu0 0.0
    %4025 = vmatprep.subr.mxu0 0.0
    %4026 = vmatpush1.msra.mxu0 0.0
    %4027 = vmatprep.subr.mxu0 0.0
    %4028 = vmatpush1.msra.mxu0 0.0
    %4029 = vmatprep.subr.mxu0 0.0
    %4030 = vmatpush1.msra.mxu0 0.0
    %4031 = vmatprep.subr.mxu0 0.0
    %4032 = vmatpush1.msra.mxu0 0.0
    %4033 = vmatprep.subr.mxu0 0.0
    %4034 = vmatpush1.msra.mxu0 0.0
    %4035 = vmatprep.subr.mxu0 0.0
    %4036 = vmatpush1.msra.mxu0 0.0
    %4037 = vmatprep.subr.mxu0 0.0
    %4038 = vmatpush1.msra.mxu0 0.0
    %4039 = vmatprep.subr.mxu0 0.0
    %4040 = vmatpush1.msra.mxu0 0.0
    %4041 = vmatprep.subr.mxu0 0.0
    %4042 = vmatpush1.msra.mxu0 0.0
    %4043 = vmatprep.subr.mxu0 0.0
    %4044 = vmatpush1.msra.mxu0 0.0
    %4045 = vmatprep.subr.mxu0 0.0
    %4046 = vmatpush1.msra.mxu0 0.0
    %4047 = vmatprep.subr.mxu0 0.0
    %4048 = vmatpush1.msra.mxu0 0.0
    %4049 = vmatprep.subr.mxu0 0.0
    %4050 = vmatpush1.msra.mxu0 0.0
    %4051 = vmatprep.subr.mxu0 0.0
    %4052 = vmatpush1.msra.mxu0 0.0
    %4053 = vmatprep.subr.mxu0 0.0
    %4054 = vmatpush1.msra.mxu0 0.0
    %4055 = vmatprep.subr.mxu0 0.0
    %4056 = vmatpush1.msra.mxu0 0.0
    %4057 = vmatprep.subr.mxu0 0.0
    %4058 = vmatpush1.msra.mxu0 0.0
    %4059 = vmatprep.subr.mxu0 0.0
    %4060 = vmatpush1.msra.mxu0 0.0
    %4061 = vmatprep.subr.mxu0 0.0
    %4062 = vmatpush1.msra.mxu0 0.0
    %4063 = vmatprep.subr.mxu0 0.0
    %4064 = vmatpush1.msra.mxu0 0.0
    %4065 = vmatprep.subr.mxu0 0.0
    %4066 = vmatpush1.msra.mxu0 0.0
    %4067 = vmatprep.subr.mxu0 0.0
    %4068 = vmatpush1.msra.mxu0 0.0
    %4069 = vmatprep.subr.mxu0 0.0
    %4070 = vmatpush1.msra.mxu0 0.0
    %4071 = vmatprep.subr.mxu0 0.0
    %4072 = vmatpush1.msra.mxu0 0.0
    %4073 = vmatprep.subr.mxu0 0.0
    %4074 = vmatpush1.msra.mxu0 0.0
    %4075 = vmatprep.subr.mxu0 0.0
    %4076 = vmatpush1.msra.mxu0 0.0
    %4077 = vmatprep.subr.mxu0 0.0
    %4078 = vmatpush1.msra.mxu0 0.0
    %4079 = vmatprep.mubr.f32.mxu0 0.0
    %4080 = vmatmul.mubr.f32.gmra.mrb[0].mxu0 %v4009
    %v4081 = vpop.f32.mrb[0].mxu0
    %v4082 = vadd.f32 %v4005, %v4081
    %v4083 = vpop.f32.mrb[0].mxu0
    %4084 = vdwg.mxu0
    %v4085 = vmax.f32 %v4082, 0.0
    %v4086 = vld [vmem:[%s43] sm:$0xff]
    %v4087 = vld [vmem:[%s43 + $0x8] sm:$0xff]
    %v4088 = vld [vmem:[%s43 + $0x10] sm:$0xff]
    %v4089 = vld [vmem:[%s43 + $0x18] sm:$0xff]
    %v4090 = vld [vmem:[%s45] sm:$0xff]
    %v4092 = vsel %vm239, %v4085, 0
    %4094 = vmatprep.subr.mxu0 0.0
    %4095 = vmatpush1.msra.mxu0 %v4090
    %4096 = vmatprep.subr.mxu0 0.0
    %4097 = vmatpush1.msra.mxu0 0.0
    %4098 = vmatprep.subr.mxu0 0.0
    %4099 = vmatpush1.msra.mxu0 0.0
    %4100 = vmatprep.subr.mxu0 0.0
    %4101 = vmatpush1.msra.mxu0 0.0
    %4102 = vmatprep.subr.mxu0 0.0
    %4103 = vmatpush1.msra.mxu0 0.0
    %4104 = vmatprep.subr.mxu0 0.0
    %4105 = vmatpush1.msra.mxu0 0.0
    %4106 = vmatprep.subr.mxu0 0.0
    %4107 = vmatpush1.msra.mxu0 0.0
    %4108 = vmatprep.subr.mxu0 0.0
    %4109 = vmatpush1.msra.mxu0 0.0
    %4110 = vmatprep.subr.mxu0 0.0
    %4111 = vmatpush1.msra.mxu0 0.0
    %4112 = vmatprep.subr.mxu0 0.0
    %4113 = vmatpush1.msra.mxu0 0.0
    %4114 = vmatprep.subr.mxu0 0.0
    %4115 = vmatpush1.msra.mxu0 0.0
    %4116 = vmatprep.subr.mxu0 0.0
    %4117 = vmatpush1.msra.mxu0 0.0
    %4118 = vmatprep.subr.mxu0 0.0
    %4119 = vmatpush1.msra.mxu0 0.0
    %4120 = vmatprep.subr.mxu0 0.0
    %4121 = vmatpush1.msra.mxu0 0.0
    %4122 = vmatprep.subr.mxu0 0.0
    %4123 = vmatpush1.msra.mxu0 0.0
    %4124 = vmatprep.subr.mxu0 0.0
    %4125 = vmatpush1.msra.mxu0 0.0
    %4126 = vmatprep.subr.mxu0 0.0
    %4127 = vmatpush1.msra.mxu0 0.0
    %4128 = vmatprep.subr.mxu0 0.0
    %4129 = vmatpush1.msra.mxu0 0.0
    %4130 = vmatprep.subr.mxu0 0.0
    %4131 = vmatpush1.msra.mxu0 0.0
    %4132 = vmatprep.subr.mxu0 0.0
    %4133 = vmatpush1.msra.mxu0 0.0
    %4134 = vmatprep.subr.mxu0 0.0
    %4135 = vmatpush1.msra.mxu0 0.0
    %4136 = vmatprep.subr.mxu0 0.0
    %4137 = vmatpush1.msra.mxu0 0.0
    %4138 = vmatprep.subr.mxu0 0.0
    %4139 = vmatpush1.msra.mxu0 0.0
    %4140 = vmatprep.subr.mxu0 0.0
    %4141 = vmatpush1.msra.mxu0 0.0
    %4142 = vmatprep.subr.mxu0 0.0
    %4143 = vmatpush1.msra.mxu0 0.0
    %4144 = vmatprep.subr.mxu0 0.0
    %4145 = vmatpush1.msra.mxu0 0.0
    %4146 = vmatprep.subr.mxu0 0.0
    %4147 = vmatpush1.msra.mxu0 0.0
    %4148 = vmatprep.subr.mxu0 0.0
    %4149 = vmatpush1.msra.mxu0 0.0
    %4150 = vmatprep.subr.mxu0 0.0
    %4151 = vmatpush1.msra.mxu0 0.0
    %4152 = vmatprep.subr.mxu0 0.0
    %4153 = vmatpush1.msra.mxu0 0.0
    %4154 = vmatprep.subr.mxu0 0.0
    %4155 = vmatpush1.msra.mxu0 0.0
    %4156 = vmatprep.subr.mxu0 0.0
    %4157 = vmatpush1.msra.mxu0 0.0
    %4158 = vmatprep.mubr.f32.mxu0 0.0
    %4159 = vmatmul.mubr.f32.gmra.mrb[0].mxu0 %v4092
    %v4160 = vpop.f32.mrb[0].mxu0
    %v4161 = vadd.f32 0.0, %v4160
    %v4162 = vpop.f32.mrb[0].mxu0
    %4163 = vdwg.mxu0
    %v4165 = vsel %vm142, %v3909, 0
    %4167 = vmatprep.subr.mxu0 0.0
    %4168 = vmatpush1.msra.mxu0 %v4086
    %4169 = vmatprep.subr.mxu0 0.0
    %4170 = vmatpush1.msra.mxu0 %v4087
    %4171 = vmatprep.subr.mxu0 0.0
    %4172 = vmatpush1.msra.mxu0 %v4088
    %4173 = vmatprep.subr.mxu0 0.0
    %4174 = vmatpush1.msra.mxu0 %v4089
    %4175 = vmatprep.subr.mxu0 0.0
    %4176 = vmatpush1.msra.mxu0 0.0
    %4177 = vmatprep.subr.mxu0 0.0
    %4178 = vmatpush1.msra.mxu0 0.0
    %4179 = vmatprep.subr.mxu0 0.0
    %4180 = vmatpush1.msra.mxu0 0.0
    %4181 = vmatprep.subr.mxu0 0.0
    %4182 = vmatpush1.msra.mxu0 0.0
    %4183 = vmatprep.subr.mxu0 0.0
    %4184 = vmatpush1.msra.mxu0 0.0
    %4185 = vmatprep.subr.mxu0 0.0
    %4186 = vmatpush1.msra.mxu0 0.0
    %4187 = vmatprep.subr.mxu0 0.0
    %4188 = vmatpush1.msra.mxu0 0.0
    %4189 = vmatprep.subr.mxu0 0.0
    %4190 = vmatpush1.msra.mxu0 0.0
    %4191 = vmatprep.subr.mxu0 0.0
    %4192 = vmatpush1.msra.mxu0 0.0
    %4193 = vmatprep.subr.mxu0 0.0
    %4194 = vmatpush1.msra.mxu0 0.0
    %4195 = vmatprep.subr.mxu0 0.0
    %4196 = vmatpush1.msra.mxu0 0.0
    %4197 = vmatprep.subr.mxu0 0.0
    %4198 = vmatpush1.msra.mxu0 0.0
    %4199 = vmatprep.subr.mxu0 0.0
    %4200 = vmatpush1.msra.mxu0 0.0
    %4201 = vmatprep.subr.mxu0 0.0
    %4202 = vmatpush1.msra.mxu0 0.0
    %4203 = vmatprep.subr.mxu0 0.0
    %4204 = vmatpush1.msra.mxu0 0.0
    %4205 = vmatprep.subr.mxu0 0.0
    %4206 = vmatpush1.msra.mxu0 0.0
    %4207 = vmatprep.subr.mxu0 0.0
    %4208 = vmatpush1.msra.mxu0 0.0
    %4209 = vmatprep.subr.mxu0 0.0
    %4210 = vmatpush1.msra.mxu0 0.0
    %4211 = vmatprep.subr.mxu0 0.0
    %4212 = vmatpush1.msra.mxu0 0.0
    %4213 = vmatprep.subr.mxu0 0.0
    %4214 = vmatpush1.msra.mxu0 0.0
    %4215 = vmatprep.subr.mxu0 0.0
    %4216 = vmatpush1.msra.mxu0 0.0
    %4217 = vmatprep.subr.mxu0 0.0
    %4218 = vmatpush1.msra.mxu0 0.0
    %4219 = vmatprep.subr.mxu0 0.0
    %4220 = vmatpush1.msra.mxu0 0.0
    %4221 = vmatprep.subr.mxu0 0.0
    %4222 = vmatpush1.msra.mxu0 0.0
    %4223 = vmatprep.subr.mxu0 0.0
    %4224 = vmatpush1.msra.mxu0 0.0
    %4225 = vmatprep.subr.mxu0 0.0
    %4226 = vmatpush1.msra.mxu0 0.0
    %4227 = vmatprep.subr.mxu0 0.0
    %4228 = vmatpush1.msra.mxu0 0.0
    %4229 = vmatprep.subr.mxu0 0.0
    %4230 = vmatpush1.msra.mxu0 0.0
    %4231 = vmatprep.mubr.f32.mxu0 0.0
    %4232 = vmatmul.mubr.f32.gmra.mrb[0].mxu0 %v4165
    %v4233 = vpop.f32.mrb[0].mxu0
    %v4234 = vadd.f32 %v4161, %v4233
    %v4235 = vpop.f32.mrb[0].mxu0
    %4236 = vdwg.mxu0
    %v4237 = vld [vmem:[%s47] sm:$0x1]
    %v4239 = vlaneseq
    %v4240 = vshrl.u32 %v4239, 7
    %v4241 = vsub.s32 0, %v4240
    %v4242 = vrot.slane %v4237, %v4241
    %v4244 = vadd.f32 %v4234, %v4242
    %v4245 = vmax.f32 %v4244, 0.0
    %v4246 = vld [vmem:[%s49] sm:$0xff]
    %v4247 = vld [vmem:[%s49 + $0x8] sm:$0xff]
    %v4248 = vld [vmem:[%s49 + $0x10] sm:$0xff]
    %v4249 = vld [vmem:[%s49 + $0x18] sm:$0xff]
    %v4250 = vld [vmem:[%s51] sm:$0x1]
    %v4252 = vlaneseq
    %v4253 = vshrl.u32 %v4252, 7
    %v4254 = vsub.s32 0, %v4253
    %v4255 = vrot.slane %v4250, %v4254
    %v4258 = vsel %vm142, %v4245, 0
    %4260 = vmatprep.subr.mxu0 0.0
    %4261 = vmatpush1.msra.mxu0 %v4246
    %4262 = vmatprep.subr.mxu0 0.0
    %4263 = vmatpush1.msra.mxu0 %v4247
    %4264 = vmatprep.subr.mxu0 0.0
    %4265 = vmatpush1.msra.mxu0 %v4248
    %4266 = vmatprep.subr.mxu0 0.0
    %4267 = vmatpush1.msra.mxu0 %v4249
    %4268 = vmatprep.subr.mxu0 0.0
    %4269 = vmatpush1.msra.mxu0 0.0
    %4270 = vmatprep.subr.mxu0 0.0
    %4271 = vmatpush1.msra.mxu0 0.0
    %4272 = vmatprep.subr.mxu0 0.0
    %4273 = vmatpush1.msra.mxu0 0.0
    %4274 = vmatprep.subr.mxu0 0.0
    %4275 = vmatpush1.msra.mxu0 0.0
    %4276 = vmatprep.subr.mxu0 0.0
    %4277 = vmatpush1.msra.mxu0 0.0
    %4278 = vmatprep.subr.mxu0 0.0
    %4279 = vmatpush1.msra.mxu0 0.0
    %4280 = vmatprep.subr.mxu0 0.0
    %4281 = vmatpush1.msra.mxu0 0.0
    %4282 = vmatprep.subr.mxu0 0.0
    %4283 = vmatpush1.msra.mxu0 0.0
    %4284 = vmatprep.subr.mxu0 0.0
    %4285 = vmatpush1.msra.mxu0 0.0
    %4286 = vmatprep.subr.mxu0 0.0
    %4287 = vmatpush1.msra.mxu0 0.0
    %4288 = vmatprep.subr.mxu0 0.0
    %4289 = vmatpush1.msra.mxu0 0.0
    %4290 = vmatprep.subr.mxu0 0.0
    %4291 = vmatpush1.msra.mxu0 0.0
    %4292 = vmatprep.subr.mxu0 0.0
    %4293 = vmatpush1.msra.mxu0 0.0
    %4294 = vmatprep.subr.mxu0 0.0
    %4295 = vmatpush1.msra.mxu0 0.0
    %4296 = vmatprep.subr.mxu0 0.0
    %4297 = vmatpush1.msra.mxu0 0.0
    %4298 = vmatprep.subr.mxu0 0.0
    %4299 = vmatpush1.msra.mxu0 0.0
    %4300 = vmatprep.subr.mxu0 0.0
    %4301 = vmatpush1.msra.mxu0 0.0
    %4302 = vmatprep.subr.mxu0 0.0
    %4303 = vmatpush1.msra.mxu0 0.0
    %4304 = vmatprep.subr.mxu0 0.0
    %4305 = vmatpush1.msra.mxu0 0.0
    %4306 = vmatprep.subr.mxu0 0.0
    %4307 = vmatpush1.msra.mxu0 0.0
    %4308 = vmatprep.subr.mxu0 0.0
    %4309 = vmatpush1.msra.mxu0 0.0
    %4310 = vmatprep.subr.mxu0 0.0
    %4311 = vmatpush1.msra.mxu0 0.0
    %4312 = vmatprep.subr.mxu0 0.0
    %4313 = vmatpush1.msra.mxu0 0.0
    %4314 = vmatprep.subr.mxu0 0.0
    %4315 = vmatpush1.msra.mxu0 0.0
    %4316 = vmatprep.subr.mxu0 0.0
    %4317 = vmatpush1.msra.mxu0 0.0
    %4318 = vmatprep.subr.mxu0 0.0
    %4319 = vmatpush1.msra.mxu0 0.0
    %4320 = vmatprep.subr.mxu0 0.0
    %4321 = vmatpush1.msra.mxu0 0.0
    %4322 = vmatprep.subr.mxu0 0.0
    %4323 = vmatpush1.msra.mxu0 0.0
    %4324 = vmatprep.mubr.f32.mxu0 0.0
    %4325 = vmatmul.mubr.f32.gmra.mrb[0].mxu0 %v4258
    %v4326 = vpop.f32.mrb[0].mxu0
    %v4327 = vadd.f32 %v4255, %v4326
    %v4328 = vpop.f32.mrb[0].mxu0
    %4329 = vdwg.mxu0
    %v4330 = vmax.f32 %v4327, 0.0
    %v4331 = vld [vmem:[%s53] sm:$0xff]
    %v4332 = vld [vmem:[%s53 + $0x8] sm:$0xff]
    %v4333 = vld [vmem:[%s55] sm:$0x1]
    %v4335 = vlaneseq
    %v4336 = vshrl.u32 %v4335, 7
    %v4337 = vsub.s32 0, %v4336
    %v4338 = vrot.slane %v4333, %v4337
    %v4341 = vsel %vm1581, %v4330, 0
    %4343 = vmatprep.subr.mxu0 0.0
    %4344 = vmatpush1.msra.mxu0 %v4331
    %4345 = vmatprep.subr.mxu0 0.0
    %4346 = vmatpush1.msra.mxu0 %v4332
    %4347 = vmatprep.subr.mxu0 0.0
    %4348 = vmatpush1.msra.mxu0 0.0
    %4349 = vmatprep.subr.mxu0 0.0
    %4350 = vmatpush1.msra.mxu0 0.0
    %4351 = vmatprep.subr.mxu0 0.0
    %4352 = vmatpush1.msra.mxu0 0.0
    %4353 = vmatprep.subr.mxu0 0.0
    %4354 = vmatpush1.msra.mxu0 0.0
    %4355 = vmatprep.subr.mxu0 0.0
    %4356 = vmatpush1.msra.mxu0 0.0
    %4357 = vmatprep.subr.mxu0 0.0
    %4358 = vmatpush1.msra.mxu0 0.0
    %4359 = vmatprep.subr.mxu0 0.0
    %4360 = vmatpush1.msra.mxu0 0.0
    %4361 = vmatprep.subr.mxu0 0.0
    %4362 = vmatpush1.msra.mxu0 0.0
    %4363 = vmatprep.subr.mxu0 0.0
    %4364 = vmatpush1.msra.mxu0 0.0
    %4365 = vmatprep.subr.mxu0 0.0
    %4366 = vmatpush1.msra.mxu0 0.0
    %4367 = vmatprep.subr.mxu0 0.0
    %4368 = vmatpush1.msra.mxu0 0.0
    %4369 = vmatprep.subr.mxu0 0.0
    %4370 = vmatpush1.msra.mxu0 0.0
    %4371 = vmatprep.subr.mxu0 0.0
    %4372 = vmatpush1.msra.mxu0 0.0
    %4373 = vmatprep.subr.mxu0 0.0
    %4374 = vmatpush1.msra.mxu0 0.0
    %4375 = vmatprep.subr.mxu0 0.0
    %4376 = vmatpush1.msra.mxu0 0.0
    %4377 = vmatprep.subr.mxu0 0.0
    %4378 = vmatpush1.msra.mxu0 0.0
    %4379 = vmatprep.subr.mxu0 0.0
    %4380 = vmatpush1.msra.mxu0 0.0
    %4381 = vmatprep.subr.mxu0 0.0
    %4382 = vmatpush1.msra.mxu0 0.0
    %4383 = vmatprep.subr.mxu0 0.0
    %4384 = vmatpush1.msra.mxu0 0.0
    %4385 = vmatprep.subr.mxu0 0.0
    %4386 = vmatpush1.msra.mxu0 0.0
    %4387 = vmatprep.subr.mxu0 0.0
    %4388 = vmatpush1.msra.mxu0 0.0
    %4389 = vmatprep.subr.mxu0 0.0
    %4390 = vmatpush1.msra.mxu0 0.0
    %4391 = vmatprep.subr.mxu0 0.0
    %4392 = vmatpush1.msra.mxu0 0.0
    %4393 = vmatprep.subr.mxu0 0.0
    %4394 = vmatpush1.msra.mxu0 0.0
    %4395 = vmatprep.subr.mxu0 0.0
    %4396 = vmatpush1.msra.mxu0 0.0
    %4397 = vmatprep.subr.mxu0 0.0
    %4398 = vmatpush1.msra.mxu0 0.0
    %4399 = vmatprep.subr.mxu0 0.0
    %4400 = vmatpush1.msra.mxu0 0.0
    %4401 = vmatprep.subr.mxu0 0.0
    %4402 = vmatpush1.msra.mxu0 0.0
    %4403 = vmatprep.subr.mxu0 0.0
    %4404 = vmatpush1.msra.mxu0 0.0
    %4405 = vmatprep.subr.mxu0 0.0
    %4406 = vmatpush1.msra.mxu0 0.0
    %4407 = vmatprep.mubr.f32.mxu0 0.0
    %4408 = vmatmul.mubr.f32.gmra.mrb[0].mxu0 %v4341
    %v4409 = vpop.f32.mrb[0].mxu0
    %v4410 = vadd.f32 %v4338, %v4409
    %v4411 = vpop.f32.mrb[0].mxu0
    %4412 = vdwg.mxu0
    %v4413 = vmax.f32 %v4410, 0.0
    %v4414 = vld [vmem:[%s57] sm:$0xff]
    %v4415 = vld [vmem:[%s57 + $0x8] sm:$0x3]
    %v4416 = vld [vmem:[%s59] sm:$0x1]
    %v4418 = vlaneseq
    %v4419 = vshrl.u32 %v4418, 7
    %v4420 = vsub.s32 0, %v4419
    %v4421 = vrot.slane %v4416, %v4420
    %v4424 = vsel %vm4007, %v4413, 0
    %v4427 = vsel %vm4011, %v4415, 0
    %4429 = vmatprep.subr.mxu0 0.0
    %4430 = vmatpush1.msra.mxu0 %v4414
    %4431 = vmatprep.subr.mxu0 0.0
    %4432 = vmatpush1.msra.mxu0 %v4427
    %4433 = vmatprep.subr.mxu0 0.0
    %4434 = vmatpush1.msra.mxu0 0.0
    %4435 = vmatprep.subr.mxu0 0.0
    %4436 = vmatpush1.msra.mxu0 0.0
    %4437 = vmatprep.subr.mxu0 0.0
    %4438 = vmatpush1.msra.mxu0 0.0
    %4439 = vmatprep.subr.mxu0 0.0
    %4440 = vmatpush1.msra.mxu0 0.0
    %4441 = vmatprep.subr.mxu0 0.0
    %4442 = vmatpush1.msra.mxu0 0.0
    %4443 = vmatprep.subr.mxu0 0.0
    %4444 = vmatpush1.msra.mxu0 0.0
    %4445 = vmatprep.subr.mxu0 0.0
    %4446 = vmatpush1.msra.mxu0 0.0
    %4447 = vmatprep.subr.mxu0 0.0
    %4448 = vmatpush1.msra.mxu0 0.0
    %4449 = vmatprep.subr.mxu0 0.0
    %4450 = vmatpush1.msra.mxu0 0.0
    %4451 = vmatprep.subr.mxu0 0.0
    %4452 = vmatpush1.msra.mxu0 0.0
    %4453 = vmatprep.subr.mxu0 0.0
    %4454 = vmatpush1.msra.mxu0 0.0
    %4455 = vmatprep.subr.mxu0 0.0
    %4456 = vmatpush1.msra.mxu0 0.0
    %4457 = vmatprep.subr.mxu0 0.0
    %4458 = vmatpush1.msra.mxu0 0.0
    %4459 = vmatprep.subr.mxu0 0.0
    %4460 = vmatpush1.msra.mxu0 0.0
    %4461 = vmatprep.subr.mxu0 0.0
    %4462 = vmatpush1.msra.mxu0 0.0
    %4463 = vmatprep.subr.mxu0 0.0
    %4464 = vmatpush1.msra.mxu0 0.0
    %4465 = vmatprep.subr.mxu0 0.0
    %4466 = vmatpush1.msra.mxu0 0.0
    %4467 = vmatprep.subr.mxu0 0.0
    %4468 = vmatpush1.msra.mxu0 0.0
    %4469 = vmatprep.subr.mxu0 0.0
    %4470 = vmatpush1.msra.mxu0 0.0
    %4471 = vmatprep.subr.mxu0 0.0
    %4472 = vmatpush1.msra.mxu0 0.0
    %4473 = vmatprep.subr.mxu0 0.0
    %4474 = vmatpush1.msra.mxu0 0.0
    %4475 = vmatprep.subr.mxu0 0.0
    %4476 = vmatpush1.msra.mxu0 0.0
    %4477 = vmatprep.subr.mxu0 0.0
    %4478 = vmatpush1.msra.mxu0 0.0
    %4479 = vmatprep.subr.mxu0 0.0
    %4480 = vmatpush1.msra.mxu0 0.0
    %4481 = vmatprep.subr.mxu0 0.0
    %4482 = vmatpush1.msra.mxu0 0.0
    %4483 = vmatprep.subr.mxu0 0.0
    %4484 = vmatpush1.msra.mxu0 0.0
    %4485 = vmatprep.subr.mxu0 0.0
    %4486 = vmatpush1.msra.mxu0 0.0
    %4487 = vmatprep.subr.mxu0 0.0
    %4488 = vmatpush1.msra.mxu0 0.0
    %4489 = vmatprep.subr.mxu0 0.0
    %4490 = vmatpush1.msra.mxu0 0.0
    %4491 = vmatprep.subr.mxu0 0.0
    %4492 = vmatpush1.msra.mxu0 0.0
    %4493 = vmatprep.mubr.f32.mxu0 0.0
    %4494 = vmatmul.mubr.f32.gmra.mrb[0].mxu0 %v4424
    %v4495 = vpop.f32.mrb[0].mxu0
    %v4496 = vadd.f32 %v4421, %v4495
    %v4497 = vpop.f32.mrb[0].mxu0
    %4498 = vdwg.mxu0
    %4499 = vst [vmem:[#allocation2] sm:$0x3] %v4496
    // Predicated region
    $region122: #{forward.1} parent=1 // pred_check
      _
    $region123: #{forward.1} parent=1 // pred_check_branch
      %4501 = sbr.rel (0) target = $region125
    $region124: #{forward.1} parent=1 // pred_region
      %s4503 = ssub.s32 32, 32
      %4504 = vsyncadd [#allocation3], %s4503
      %s4506 = sshll.u32 [#allocation2], 4
      %s4507 = int_to_ptr.vmem [resolvable:$true] %s4506
      %4509 = dma.vmem_to_hbm [thread:$0]  %s4507, 32, %s61, [#allocation3]
    $region125: #{forward.1} parent=1 // pred_fallthru
      _
    // Predicated region
    $region126: #{forward.1} parent=1 // pred_check
      _
    $region127: #{forward.1} parent=1 // pred_check_branch
      %4511 = sbr.rel (0) target = $region129
    $region128: #{forward.1} parent=1 // pred_region
      %4512 = dma.done [#allocation3], 32
    $region129: #{forward.1} parent=1 // pred_fallthru
      _
    %4513 = vsyncpa [#allocation3], 1

</llo_original>
